<compile_context>
chip_gen: v7x
topology: tpu7x:2x2x1
jax: 0.10.0
libtpu: 0.0.40
codegen_flags: <defaults>
</compile_context>

<pallas_src>
import functools

import jax
import jax.numpy as jnp
from jax import lax
from jax.experimental import pallas as pl
from jax.experimental.pallas import tpu as pltpu

LN_EPS = 1e-5


# --------------------------------------------------------------------------
# In-kernel helpers
# --------------------------------------------------------------------------
def _fast_reciprocal(x):
    """EUP approximate reciprocal refined by one Newton step (no VALU divide)."""
    r = pl.reciprocal(x, approx=True)
    return r * (2.0 - x * r)


def _layernorm(x, gamma, beta):
    """Two-pass (centered) variance LayerNorm -- cancellation-safe."""
    m = jnp.mean(x, axis=-1, keepdims=True)
    c = x - m
    var = jnp.mean(c * c, axis=-1, keepdims=True)
    return c * lax.rsqrt(var + LN_EPS) * gamma + beta


# --------------------------------------------------------------------------
# Kernel
# --------------------------------------------------------------------------
def encoder_kernel(*refs, num_head, block_b, seq_len, fused_qkv, compute_dtype):
    if fused_qkv:
        (x_ref, wqkv_ref, wo_ref, vec_ref, w1_ref, w2_ref, out_ref) = refs
        xq_ref = x_ref
    else:
        (xq_ref, xk_ref, xv_ref, wq_ref, wk_ref, wv_ref,
         wo_ref, vec_ref, w1_ref, w2_ref, out_ref) = refs

    D = xq_ref.shape[-1]
    head_dim = D // num_head
    R = block_b * seq_len
    f32 = jnp.float32
    cdt = compute_dtype

    def rows(ref):
        # (block_b, T, D) block -> (R, D) rows; cast to the MXU compute dtype.
        return ref[...].reshape(R, D).astype(cdt)

    # QKV projections: one big (R, D) x (D, D) (or (D, 3D)) MXU dot each.
    if fused_qkv:
        qkv = jnp.dot(rows(x_ref), wqkv_ref[...], preferred_element_type=f32)
        q, k, v = qkv[:, :D], qkv[:, D:2 * D], qkv[:, 2 * D:]
    else:
        q = jnp.dot(rows(xq_ref), wq_ref[...], preferred_element_type=f32)
        k = jnp.dot(rows(xk_ref), wk_ref[...], preferred_element_type=f32)
        v = jnp.dot(rows(xv_ref), wv_ref[...], preferred_element_type=f32)

    q = q * (1.0 / head_dim ** 0.5)

    # 3-D (block_b, T, D) views: leading-dim split only (minor dim preserved).
    q3 = q.reshape(block_b, seq_len, D).astype(cdt)
    k3 = k.reshape(block_b, seq_len, D).astype(cdt)
    v3 = v.reshape(block_b, seq_len, D).astype(cdt)
    wo_full = wo_ref[...]  # load (D, D) once, slice per head below

    # Per-head attention with single-batch-dim einsums and per-head
    # accumulation into the W_O projection (no concatenates, no 4-D tensors).
    o = jnp.zeros((R, D), f32)
    for h in range(num_head):
        lo = h * head_dim
        qh = q3[:, :, lo:lo + head_dim]
        kh = k3[:, :, lo:lo + head_dim]
        vh = v3[:, :, lo:lo + head_dim]
        s = jnp.einsum("btd,bsd->bts", qh, kh, preferred_element_type=f32)
        s = s - jnp.max(s, axis=-1, keepdims=True)
        p = jnp.exp(s)
        p = p * _fast_reciprocal(jnp.sum(p, axis=-1, keepdims=True))
        zh = jnp.einsum("bts,bsd->btd", p.astype(cdt), vh,
                        preferred_element_type=f32)
        o = o + jnp.dot(zh.reshape(R, head_dim).astype(cdt),
                        wo_full[lo:lo + head_dim, :],
                        preferred_element_type=f32)

    # Packed LayerNorm / bias vectors: rows of the single (8, D) input.
    ln1_g = vec_ref[0:1, :].astype(f32)
    ln1_b = vec_ref[1:2, :].astype(f32)
    b1 = vec_ref[2:3, :].astype(f32)
    b2 = vec_ref[3:4, :].astype(f32)
    ln2_g = vec_ref[4:5, :].astype(f32)
    ln2_b = vec_ref[5:6, :].astype(f32)

    # ReLU -> residual (re-read input from VMEM, kept in f32) -> LayerNorm1.
    x_res = xq_ref[...].reshape(R, D).astype(f32)
    z1 = _layernorm(jnp.maximum(o, 0.0) + x_res, ln1_g, ln1_b)
    # TODO(synk): torch.nn.Dropout(p=0.5) is identity here (eval-mode
    # semantics); training-mode random masking is not reproduced.

    # Feed-forward: ReLU(Linear1) -> ReLU(Linear2) -> residual -> LayerNorm2.
    z = jnp.maximum(
        jnp.dot(z1.astype(cdt), w1_ref[...], preferred_element_type=f32) + b1, 0.0)
    z = jnp.maximum(
        jnp.dot(z.astype(cdt), w2_ref[...], preferred_element_type=f32) + b2, 0.0)
    y = _layernorm(z + z1, ln2_g, ln2_b)
    out_ref[...] = y.reshape(block_b, seq_len, D).astype(out_ref.dtype)


# --------------------------------------------------------------------------
# Wrapper-side sizing helpers
# --------------------------------------------------------------------------
def _vmem_bytes_estimate(block_b, seq_len, hidden, act_in_count, act_bytes,
                         w_bytes, act_buffers):
    rows = block_b * seq_len
    acts = (act_in_count + 1) * act_buffers * block_b * seq_len * hidden * act_bytes
    weights = 6 * hidden * hidden * w_bytes + 8 * hidden * 4   # single-buffered
    interm = 8 * rows * hidden * 4 + 4 * block_b * seq_len * seq_len * 4
    return acts + weights + 2 * interm   # 2x headroom for compiler temporaries


def _auto_block_b(B, T, D, *, act_in_count, act_bytes, w_bytes, act_buffers,
                  min_grid_steps, vmem_budget):
    """Largest batch fold that keeps >= min_grid_steps grid steps (v7x: 2 TCs)
    and fits the VMEM budget; bigger block_b => more MXU rows per step and
    fewer ~0.35us grid-step overheads."""
    best = 1
    for bb in range(1, B + 1):
        if B % bb:
            continue
        if (B // bb) < max(1, min_grid_steps):
            continue
        if _vmem_bytes_estimate(bb, T, D, act_in_count, act_bytes, w_bytes,
                                act_buffers) > vmem_budget:
            continue
        best = bb
    return best


def _pack_vectors(params, D):
    """Pack LN gammas/betas and MLP biases into one (8, D) f32 array
    (rows: ln1_g, ln1_b, b1, b2, ln2_g, ln2_b, 0, 0)."""
    rows = [params["ln1_g"], params["ln1_b"], params["b1"], params["b2"],
            params["ln2_g"], params["ln2_b"],
            jnp.zeros((D,), jnp.float32), jnp.zeros((D,), jnp.float32)]
    return jnp.stack([r.reshape(D).astype(jnp.float32) for r in rows], axis=0)


# --------------------------------------------------------------------------
# Public forward
# --------------------------------------------------------------------------
def encoder_forward(input_q, input_k, input_v, params, *, num_head,
                    weight_dtype=jnp.float32, block_b=None, min_grid_steps=1,
                    act_buffers=2, vmem_cap_bytes=48 * 1024 * 1024,
                    fuse_qkv=None):
    B, T, D = input_q.shape
    assert D % num_head == 0, "hidden_dim must be divisible by num_head"
    if fuse_qkv is None:
        # Fused (D, 3D) QKV projection applies only when the inputs alias.
        fuse_qkv = (input_k is input_q) and (input_v is input_q)

    w_bytes = jnp.dtype(weight_dtype).itemsize
    act_bytes = jnp.dtype(input_q.dtype).itemsize
    act_in_count = 1 if fuse_qkv else 3

    if block_b is None:
        block_b = _auto_block_b(
            B, T, D, act_in_count=act_in_count, act_bytes=act_bytes,
            w_bytes=w_bytes, act_buffers=act_buffers,
            min_grid_steps=min_grid_steps,
            vmem_budget=int(0.75 * vmem_cap_bytes))
    assert B % block_b == 0, "block_b must divide the batch size"
    grid = (B // block_b,)

    # Derived (not hard-coded) VMEM budget, capped for v7x's 64 MiB core.
    est = _vmem_bytes_estimate(block_b, T, D, act_in_count, act_bytes,
                               w_bytes, act_buffers)
    vmem_limit = int(min(vmem_cap_bytes, max(16 * 1024 * 1024, 2 * est)))

    # Activation blocks: (block_b, T, D); extra buffering only when requested
    # (e.g. Buffered(3) on v5e if input DMA is exposed at large R).
    act_kwargs = {} if act_buffers == 2 else {"pipeline_mode": pl.Buffered(act_buffers)}
    act_spec = pl.BlockSpec((block_b, T, D), lambda i: (i, 0, 0), **act_kwargs)

    # Grid-invariant weights / vectors: constant index_map, single-buffered.
    def const_spec(shape):
        return pl.BlockSpec(shape, lambda i: (0, 0),
                            pipeline_mode=pl.Buffered(1))

    wq_t = params["wq_t"].astype(weight_dtype)
    wk_t = params["wk_t"].astype(weight_dtype)
    wv_t = params["wv_t"].astype(weight_dtype)
    wo_t = params["wo_t"].astype(weight_dtype)
    w1_t = params["w1_t"].astype(weight_dtype)
    w2_t = params["w2_t"].astype(weight_dtype)
    vecs = _pack_vectors(params, D)          # kept f32 regardless of weight dtype

    if fuse_qkv:
        wqkv_t = jnp.concatenate([wq_t, wk_t, wv_t], axis=1)   # (D, 3D)
        inputs = (input_q, wqkv_t, wo_t, vecs, w1_t, w2_t)
        in_specs = [act_spec,
                    const_spec((D, 3 * D)), const_spec((D, D)),
                    const_spec((8, D)),
                    const_spec((D, D)), const_spec((D, D))]
    else:
        inputs = (input_q, input_k, input_v,
                  wq_t, wk_t, wv_t, wo_t, vecs, w1_t, w2_t)
        in_specs = [act_spec, act_spec, act_spec,
                    const_spec((D, D)), const_spec((D, D)), const_spec((D, D)),
                    const_spec((D, D)), const_spec((8, D)),
                    const_spec((D, D)), const_spec((D, D))]

    kernel = functools.partial(
        encoder_kernel, num_head=num_head, block_b=block_b, seq_len=T,
        fused_qkv=fuse_qkv, compute_dtype=weight_dtype)

    out = pl.pallas_call(
        kernel,
        out_shape=jax.ShapeDtypeStruct((B, T, D), input_q.dtype),
        grid_spec=pltpu.PrefetchScalarGridSpec(
            num_scalar_prefetch=0,
            grid=grid,
            in_specs=in_specs,
            out_specs=act_spec,
        ),
        compiler_params=pltpu.CompilerParams(
            dimension_semantics=("parallel",),
            vmem_limit_bytes=vmem_limit,
        ),
    )(*inputs)
    return out


# --------------------------------------------------------------------------
# Pure-JAX reference (mirrors the PyTorch forward; dropout = identity)
# --------------------------------------------------------------------------
def encoder_reference(input_q, input_k, input_v, params, *, num_head):
    B, T, D = input_q.shape
    d = D // num_head
    q = input_q @ params["wq_t"]
    k = input_k @ params["wk_t"]
    v = input_v @ params["wv_t"]

    def mh(x):
        return x.reshape(B, T, num_head, d).transpose(0, 2, 1, 3)

    qh, kh, vh = mh(q) / d ** 0.5, mh(k), mh(v)
    s = jnp.einsum("bhtd,bhsd->bhts", qh, kh)
    a = jax.nn.softmax(s, axis=-1)
    z = jnp.einsum("bhts,bhsd->bhtd", a, vh).transpose(0, 2, 1, 3).reshape(B, T, D)
    z = z @ params["wo_t"]

    def ln(x, g, b):
        m = x.mean(-1, keepdims=True)
        var = ((x - m) ** 2).mean(-1, keepdims=True)
        return (x - m) / jnp.sqrt(var + LN_EPS) * g + b

    z1 = ln(jnp.maximum(z, 0.0) + input_q, params["ln1_g"], params["ln1_b"])
    z = jnp.maximum(z1 @ params["w1_t"] + params["b1"], 0.0)
    z = jnp.maximum(z @ params["w2_t"] + params["b2"], 0.0)
    return ln(z + z1, params["ln2_g"], params["ln2_b"])


def make_params(key, hidden_dim):
    D = hidden_dim
    ks = jax.random.split(key, 8)

    def w(k):
        return jax.random.normal(k, (D, D), jnp.float32) * 0.1

    return {
        # Linear weights stored pre-transposed (== torch_weight.T): y = x @ w_t.
        "wq_t": w(ks[0]), "wk_t": w(ks[1]), "wv_t": w(ks[2]), "wo_t": w(ks[3]),
        "w1_t": w(ks[4]), "w2_t": w(ks[6]),
        "b1": jax.random.normal(ks[5], (D,), jnp.float32) * 0.1,
        "b2": jax.random.normal(ks[7], (D,), jnp.float32) * 0.1,
        "ln1_g": jnp.ones((D,), jnp.float32), "ln1_b": jnp.zeros((D,), jnp.float32),
        "ln2_g": jnp.ones((D,), jnp.float32), "ln2_b": jnp.zeros((D,), jnp.float32),
    }


if __name__ == "__main__":
    # batch, tokens, hidden_dim, num_head (D=32 is a toy size; production
    # configs should keep D a multiple of 128 for MXU/lane efficiency).
    B, T, D, H = 4, 8, 32, 4

    key = jax.random.PRNGKey(0)
    k_q, k_k, k_v, k_p = jax.random.split(key, 4)
    input_q = jax.random.normal(k_q, (B, T, D), jnp.float32)
    input_k = jax.random.normal(k_k, (B, T, D), jnp.float32)
    input_v = jax.random.normal(k_v, (B, T, D), jnp.float32)
    params = make_params(k_p, D)

    ref = encoder_reference(input_q, input_k, input_v, params, num_head=H)

    # 1) f32 weights, distinct Q/K/V inputs (auto block_b -> grid=(1,)).
    out = jax.block_until_ready(
        encoder_forward(input_q, input_k, input_v, params, num_head=H))
    assert out.shape == (B, T, D)
    assert jnp.allclose(out, ref, atol=2e-4, rtol=2e-4), "f32 kernel mismatch"

    # 2) bf16 weights (MXU-native on v6e/v7x); tolerance loosened for the
    #    bf16 quantization of weights / matmul inputs.
    out_bf16 = jax.block_until_ready(
        encoder_forward(input_q, input_k, input_v, params, num_head=H,
                        weight_dtype=jnp.bfloat16))
    assert jnp.allclose(out_bf16, ref, atol=5e-2, rtol=5e-2), "bf16 kernel mismatch"

    # 3) Self-attention aliasing path: single fused (D, 3D) QKV projection.
    ref_self = encoder_reference(input_q, input_q, input_q, params, num_head=H)
    out_self = jax.block_until_ready(
        encoder_forward(input_q, input_q, input_q, params, num_head=H))
    assert jnp.allclose(out_self, ref_self, atol=2e-4, rtol=2e-4), "fused-QKV mismatch"

    print("KERNEL_OK")
</pallas_src>

<mosaic_0001>
module attributes {stable_mosaic.version = 11 : i64} {
  func.func @encoder_kernel(%arg0: i32, %arg1: memref<4x8x32xf32, #tpu.memory_space<vmem>>, %arg2: memref<4x8x32xf32, #tpu.memory_space<vmem>>, %arg3: memref<4x8x32xf32, #tpu.memory_space<vmem>>, %arg4: memref<32x32xf32, #tpu.memory_space<vmem>>, %arg5: memref<32x32xf32, #tpu.memory_space<vmem>>, %arg6: memref<32x32xf32, #tpu.memory_space<vmem>>, %arg7: memref<32x32xf32, #tpu.memory_space<vmem>>, %arg8: memref<8x32xf32, #tpu.memory_space<vmem>>, %arg9: memref<32x32xf32, #tpu.memory_space<vmem>>, %arg10: memref<32x32xf32, #tpu.memory_space<vmem>>, %arg11: memref<4x8x32xf32, #tpu.memory_space<vmem>>) attributes {dimension_semantics = [#tpu.dimension_semantics<parallel>], iteration_bounds = array<i64: 1>, scalar_prefetch = 0 : i64, scratch_operands = 0 : i64, tpu.core_type = #tpu.core_type<tc>, window_params = [{transform_indices = @transform_0, window_bounds = array<i64: 4, 8, 32>}, {transform_indices = @transform_1, window_bounds = array<i64: 4, 8, 32>}, {transform_indices = @transform_2, window_bounds = array<i64: 4, 8, 32>}, {pipeline_mode = #tpu.pipeline_mode<synchronous>, transform_indices = @transform_3, window_bounds = array<i64: 32, 32>}, {pipeline_mode = #tpu.pipeline_mode<synchronous>, transform_indices = @transform_4, window_bounds = array<i64: 32, 32>}, {pipeline_mode = #tpu.pipeline_mode<synchronous>, transform_indices = @transform_5, window_bounds = array<i64: 32, 32>}, {pipeline_mode = #tpu.pipeline_mode<synchronous>, transform_indices = @transform_6, window_bounds = array<i64: 32, 32>}, {pipeline_mode = #tpu.pipeline_mode<synchronous>, transform_indices = @transform_7, window_bounds = array<i64: 8, 32>}, {pipeline_mode = #tpu.pipeline_mode<synchronous>, transform_indices = @transform_8, window_bounds = array<i64: 32, 32>}, {pipeline_mode = #tpu.pipeline_mode<synchronous>, transform_indices = @transform_9, window_bounds = array<i64: 32, 32>}, {transform_indices = @transform_10, window_bounds = array<i64: 4, 8, 32>}]} {
    %c0 = arith.constant 0 : index
    %c0_0 = arith.constant 0 : index
    %c0_1 = arith.constant 0 : index
    %0 = vector.load %arg1[%c0, %c0_0, %c0_1] : memref<4x8x32xf32, #tpu.memory_space<vmem>>, vector<4x8x32xf32>
    %1 = vector.shape_cast %0 : vector<4x8x32xf32> to vector<32x32xf32>
    %c0_2 = arith.constant 0 : index
    %c0_3 = arith.constant 0 : index
    %2 = vector.load %arg4[%c0_2, %c0_3] : memref<32x32xf32, #tpu.memory_space<vmem>>, vector<32x32xf32>
    %cst = arith.constant dense<0.000000e+00> : vector<32x32xf32>
    %3 = tpu.matmul %1, %2, %cst {dimension_numbers = #tpu.dot_dimension_numbers<[1], [0], [0], [1], [0, 0, 1, 1], [], []>} : vector<32x32xf32>, vector<32x32xf32>, vector<32x32xf32> -> vector<32x32xf32>
    %c0_4 = arith.constant 0 : index
    %c0_5 = arith.constant 0 : index
    %c0_6 = arith.constant 0 : index
    %4 = vector.load %arg2[%c0_4, %c0_5, %c0_6] : memref<4x8x32xf32, #tpu.memory_space<vmem>>, vector<4x8x32xf32>
    %5 = vector.shape_cast %4 : vector<4x8x32xf32> to vector<32x32xf32>
    %c0_7 = arith.constant 0 : index
    %c0_8 = arith.constant 0 : index
    %6 = vector.load %arg5[%c0_7, %c0_8] : memref<32x32xf32, #tpu.memory_space<vmem>>, vector<32x32xf32>
    %cst_9 = arith.constant dense<0.000000e+00> : vector<32x32xf32>
    %7 = tpu.matmul %5, %6, %cst_9 {dimension_numbers = #tpu.dot_dimension_numbers<[1], [0], [0], [1], [0, 0, 1, 1], [], []>} : vector<32x32xf32>, vector<32x32xf32>, vector<32x32xf32> -> vector<32x32xf32>
    %c0_10 = arith.constant 0 : index
    %c0_11 = arith.constant 0 : index
    %c0_12 = arith.constant 0 : index
    %8 = vector.load %arg3[%c0_10, %c0_11, %c0_12] : memref<4x8x32xf32, #tpu.memory_space<vmem>>, vector<4x8x32xf32>
    %9 = vector.shape_cast %8 : vector<4x8x32xf32> to vector<32x32xf32>
    %c0_13 = arith.constant 0 : index
    %c0_14 = arith.constant 0 : index
    %10 = vector.load %arg6[%c0_13, %c0_14] : memref<32x32xf32, #tpu.memory_space<vmem>>, vector<32x32xf32>
    %cst_15 = arith.constant dense<0.000000e+00> : vector<32x32xf32>
    %11 = tpu.matmul %9, %10, %cst_15 {dimension_numbers = #tpu.dot_dimension_numbers<[1], [0], [0], [1], [0, 0, 1, 1], [], []>} : vector<32x32xf32>, vector<32x32xf32>, vector<32x32xf32> -> vector<32x32xf32>
    %cst_16 = arith.constant 0.353553385 : f32
    %12 = vector.broadcast %cst_16 : f32 to vector<32x32xf32>
    %13 = arith.mulf %3, %12 : vector<32x32xf32>
    %14 = vector.shape_cast %13 : vector<32x32xf32> to vector<4x8x32xf32>
    %15 = vector.shape_cast %7 : vector<32x32xf32> to vector<4x8x32xf32>
    %16 = vector.shape_cast %11 : vector<32x32xf32> to vector<4x8x32xf32>
    %c0_17 = arith.constant 0 : index
    %c0_18 = arith.constant 0 : index
    %17 = vector.load %arg7[%c0_17, %c0_18] : memref<32x32xf32, #tpu.memory_space<vmem>>, vector<32x32xf32>
    %cst_19 = arith.constant 0.000000e+00 : f32
    %18 = vector.broadcast %cst_19 : f32 to vector<32x32xf32>
    %19 = vector.extract_strided_slice %14 {offsets = [0, 0, 0], sizes = [4, 8, 8], strides = [1, 1, 1]} : vector<4x8x32xf32> to vector<4x8x8xf32>
    %20 = vector.extract_strided_slice %15 {offsets = [0, 0, 0], sizes = [4, 8, 8], strides = [1, 1, 1]} : vector<4x8x32xf32> to vector<4x8x8xf32>
    %21 = vector.extract_strided_slice %16 {offsets = [0, 0, 0], sizes = [4, 8, 8], strides = [1, 1, 1]} : vector<4x8x32xf32> to vector<4x8x8xf32>
    "tpu.trace_start"() <{level = 10 : i32, message = "btd,bsd->bts"}> : () -> ()
    %cst_20 = arith.constant dense<0.000000e+00> : vector<4x8x8xf32>
    %22 = tpu.matmul %19, %20, %cst_20 {dimension_numbers = #tpu.dot_dimension_numbers<[2], [2], [1], [1], [0, 0, 0, 1, 1, 1], [0], [0]>} : vector<4x8x8xf32>, vector<4x8x8xf32>, vector<4x8x8xf32> -> vector<4x8x8xf32>
    "tpu.trace_stop"() : () -> ()
    %cst_21 = arith.constant dense<0xFF800000> : vector<4x8xf32>
    %23 = vector.multi_reduction <maximumf>, %22, %cst_21 [2] : vector<4x8x8xf32> to vector<4x8xf32>
    %24 = vector.shape_cast %23 : vector<4x8xf32> to vector<4x8x1xf32>
    %25 = vector.broadcast %24 : vector<4x8x1xf32> to vector<4x8x8xf32>
    %26 = arith.subf %22, %25 : vector<4x8x8xf32>
    %27 = math.exp %26 : vector<4x8x8xf32>
    %cst_22 = arith.constant dense<0.000000e+00> : vector<4x8xf32>
    %28 = vector.multi_reduction <add>, %27, %cst_22 [2] : vector<4x8x8xf32> to vector<4x8xf32>
    %29 = vector.shape_cast %28 : vector<4x8xf32> to vector<4x8x1xf32>
    %30 = tpu.reciprocal %29 {approx = true} : vector<4x8x1xf32> -> vector<4x8x1xf32>
    %31 = arith.mulf %29, %30 : vector<4x8x1xf32>
    %cst_23 = arith.constant 2.000000e+00 : f32
    %32 = vector.broadcast %cst_23 : f32 to vector<4x8x1xf32>
    %33 = arith.subf %32, %31 : vector<4x8x1xf32>
    %34 = arith.mulf %30, %33 : vector<4x8x1xf32>
    %35 = vector.broadcast %34 : vector<4x8x1xf32> to vector<4x8x8xf32>
    %36 = arith.mulf %27, %35 : vector<4x8x8xf32>
    "tpu.trace_start"() <{level = 10 : i32, message = "bts,bsd->btd"}> : () -> ()
    %cst_24 = arith.constant dense<0.000000e+00> : vector<4x8x8xf32>
    %37 = tpu.matmul %36, %21, %cst_24 {dimension_numbers = #tpu.dot_dimension_numbers<[2], [1], [1], [2], [0, 0, 0, 1, 1, 2], [0], [0]>} : vector<4x8x8xf32>, vector<4x8x8xf32>, vector<4x8x8xf32> -> vector<4x8x8xf32>
    "tpu.trace_stop"() : () -> ()
    %38 = vector.shape_cast %37 : vector<4x8x8xf32> to vector<32x8xf32>
    %39 = vector.extract_strided_slice %17 {offsets = [0, 0], sizes = [8, 32], strides = [1, 1]} : vector<32x32xf32> to vector<8x32xf32>
    %cst_25 = arith.constant dense<0.000000e+00> : vector<32x32xf32>
    %40 = tpu.matmul %38, %39, %cst_25 {dimension_numbers = #tpu.dot_dimension_numbers<[1], [0], [0], [1], [0, 0, 1, 1], [], []>} : vector<32x8xf32>, vector<8x32xf32>, vector<32x32xf32> -> vector<32x32xf32>
    %41 = arith.addf %18, %40 : vector<32x32xf32>
    %42 = vector.extract_strided_slice %14 {offsets = [0, 0, 8], sizes = [4, 8, 8], strides = [1, 1, 1]} : vector<4x8x32xf32> to vector<4x8x8xf32>
    %43 = vector.extract_strided_slice %15 {offsets = [0, 0, 8], sizes = [4, 8, 8], strides = [1, 1, 1]} : vector<4x8x32xf32> to vector<4x8x8xf32>
    %44 = vector.extract_strided_slice %16 {offsets = [0, 0, 8], sizes = [4, 8, 8], strides = [1, 1, 1]} : vector<4x8x32xf32> to vector<4x8x8xf32>
    "tpu.trace_start"() <{level = 10 : i32, message = "btd,bsd->bts"}> : () -> ()
    %cst_26 = arith.constant dense<0.000000e+00> : vector<4x8x8xf32>
    %45 = tpu.matmul %42, %43, %cst_26 {dimension_numbers = #tpu.dot_dimension_numbers<[2], [2], [1], [1], [0, 0, 0, 1, 1, 1], [0], [0]>} : vector<4x8x8xf32>, vector<4x8x8xf32>, vector<4x8x8xf32> -> vector<4x8x8xf32>
    "tpu.trace_stop"() : () -> ()
    %cst_27 = arith.constant dense<0xFF800000> : vector<4x8xf32>
    %46 = vector.multi_reduction <maximumf>, %45, %cst_27 [2] : vector<4x8x8xf32> to vector<4x8xf32>
    %47 = vector.shape_cast %46 : vector<4x8xf32> to vector<4x8x1xf32>
    %48 = vector.broadcast %47 : vector<4x8x1xf32> to vector<4x8x8xf32>
    %49 = arith.subf %45, %48 : vector<4x8x8xf32>
    %50 = math.exp %49 : vector<4x8x8xf32>
    %cst_28 = arith.constant dense<0.000000e+00> : vector<4x8xf32>
    %51 = vector.multi_reduction <add>, %50, %cst_28 [2] : vector<4x8x8xf32> to vector<4x8xf32>
    %52 = vector.shape_cast %51 : vector<4x8xf32> to vector<4x8x1xf32>
    %53 = tpu.reciprocal %52 {approx = true} : vector<4x8x1xf32> -> vector<4x8x1xf32>
    %54 = arith.mulf %52, %53 : vector<4x8x1xf32>
    %cst_29 = arith.constant 2.000000e+00 : f32
    %55 = vector.broadcast %cst_29 : f32 to vector<4x8x1xf32>
    %56 = arith.subf %55, %54 : vector<4x8x1xf32>
    %57 = arith.mulf %53, %56 : vector<4x8x1xf32>
    %58 = vector.broadcast %57 : vector<4x8x1xf32> to vector<4x8x8xf32>
    %59 = arith.mulf %50, %58 : vector<4x8x8xf32>
    "tpu.trace_start"() <{level = 10 : i32, message = "bts,bsd->btd"}> : () -> ()
    %cst_30 = arith.constant dense<0.000000e+00> : vector<4x8x8xf32>
    %60 = tpu.matmul %59, %44, %cst_30 {dimension_numbers = #tpu.dot_dimension_numbers<[2], [1], [1], [2], [0, 0, 0, 1, 1, 2], [0], [0]>} : vector<4x8x8xf32>, vector<4x8x8xf32>, vector<4x8x8xf32> -> vector<4x8x8xf32>
    "tpu.trace_stop"() : () -> ()
    %61 = vector.shape_cast %60 : vector<4x8x8xf32> to vector<32x8xf32>
    %62 = vector.extract_strided_slice %17 {offsets = [8, 0], sizes = [8, 32], strides = [1, 1]} : vector<32x32xf32> to vector<8x32xf32>
    %cst_31 = arith.constant dense<0.000000e+00> : vector<32x32xf32>
    %63 = tpu.matmul %61, %62, %cst_31 {dimension_numbers = #tpu.dot_dimension_numbers<[1], [0], [0], [1], [0, 0, 1, 1], [], []>} : vector<32x8xf32>, vector<8x32xf32>, vector<32x32xf32> -> vector<32x32xf32>
    %64 = arith.addf %41, %63 : vector<32x32xf32>
    %65 = vector.extract_strided_slice %14 {offsets = [0, 0, 16], sizes = [4, 8, 8], strides = [1, 1, 1]} : vector<4x8x32xf32> to vector<4x8x8xf32>
    %66 = vector.extract_strided_slice %15 {offsets = [0, 0, 16], sizes = [4, 8, 8], strides = [1, 1, 1]} : vector<4x8x32xf32> to vector<4x8x8xf32>
    %67 = vector.extract_strided_slice %16 {offsets = [0, 0, 16], sizes = [4, 8, 8], strides = [1, 1, 1]} : vector<4x8x32xf32> to vector<4x8x8xf32>
    "tpu.trace_start"() <{level = 10 : i32, message = "btd,bsd->bts"}> : () -> ()
    %cst_32 = arith.constant dense<0.000000e+00> : vector<4x8x8xf32>
    %68 = tpu.matmul %65, %66, %cst_32 {dimension_numbers = #tpu.dot_dimension_numbers<[2], [2], [1], [1], [0, 0, 0, 1, 1, 1], [0], [0]>} : vector<4x8x8xf32>, vector<4x8x8xf32>, vector<4x8x8xf32> -> vector<4x8x8xf32>
    "tpu.trace_stop"() : () -> ()
    %cst_33 = arith.constant dense<0xFF800000> : vector<4x8xf32>
    %69 = vector.multi_reduction <maximumf>, %68, %cst_33 [2] : vector<4x8x8xf32> to vector<4x8xf32>
    %70 = vector.shape_cast %69 : vector<4x8xf32> to vector<4x8x1xf32>
    %71 = vector.broadcast %70 : vector<4x8x1xf32> to vector<4x8x8xf32>
    %72 = arith.subf %68, %71 : vector<4x8x8xf32>
    %73 = math.exp %72 : vector<4x8x8xf32>
    %cst_34 = arith.constant dense<0.000000e+00> : vector<4x8xf32>
    %74 = vector.multi_reduction <add>, %73, %cst_34 [2] : vector<4x8x8xf32> to vector<4x8xf32>
    %75 = vector.shape_cast %74 : vector<4x8xf32> to vector<4x8x1xf32>
    %76 = tpu.reciprocal %75 {approx = true} : vector<4x8x1xf32> -> vector<4x8x1xf32>
    %77 = arith.mulf %75, %76 : vector<4x8x1xf32>
    %cst_35 = arith.constant 2.000000e+00 : f32
    %78 = vector.broadcast %cst_35 : f32 to vector<4x8x1xf32>
    %79 = arith.subf %78, %77 : vector<4x8x1xf32>
    %80 = arith.mulf %76, %79 : vector<4x8x1xf32>
    %81 = vector.broadcast %80 : vector<4x8x1xf32> to vector<4x8x8xf32>
    %82 = arith.mulf %73, %81 : vector<4x8x8xf32>
    "tpu.trace_start"() <{level = 10 : i32, message = "bts,bsd->btd"}> : () -> ()
    %cst_36 = arith.constant dense<0.000000e+00> : vector<4x8x8xf32>
    %83 = tpu.matmul %82, %67, %cst_36 {dimension_numbers = #tpu.dot_dimension_numbers<[2], [1], [1], [2], [0, 0, 0, 1, 1, 2], [0], [0]>} : vector<4x8x8xf32>, vector<4x8x8xf32>, vector<4x8x8xf32> -> vector<4x8x8xf32>
    "tpu.trace_stop"() : () -> ()
    %84 = vector.shape_cast %83 : vector<4x8x8xf32> to vector<32x8xf32>
    %85 = vector.extract_strided_slice %17 {offsets = [16, 0], sizes = [8, 32], strides = [1, 1]} : vector<32x32xf32> to vector<8x32xf32>
    %cst_37 = arith.constant dense<0.000000e+00> : vector<32x32xf32>
    %86 = tpu.matmul %84, %85, %cst_37 {dimension_numbers = #tpu.dot_dimension_numbers<[1], [0], [0], [1], [0, 0, 1, 1], [], []>} : vector<32x8xf32>, vector<8x32xf32>, vector<32x32xf32> -> vector<32x32xf32>
    %87 = arith.addf %64, %86 : vector<32x32xf32>
    %88 = vector.extract_strided_slice %14 {offsets = [0, 0, 24], sizes = [4, 8, 8], strides = [1, 1, 1]} : vector<4x8x32xf32> to vector<4x8x8xf32>
    %89 = vector.extract_strided_slice %15 {offsets = [0, 0, 24], sizes = [4, 8, 8], strides = [1, 1, 1]} : vector<4x8x32xf32> to vector<4x8x8xf32>
    %90 = vector.extract_strided_slice %16 {offsets = [0, 0, 24], sizes = [4, 8, 8], strides = [1, 1, 1]} : vector<4x8x32xf32> to vector<4x8x8xf32>
    "tpu.trace_start"() <{level = 10 : i32, message = "btd,bsd->bts"}> : () -> ()
    %cst_38 = arith.constant dense<0.000000e+00> : vector<4x8x8xf32>
    %91 = tpu.matmul %88, %89, %cst_38 {dimension_numbers = #tpu.dot_dimension_numbers<[2], [2], [1], [1], [0, 0, 0, 1, 1, 1], [0], [0]>} : vector<4x8x8xf32>, vector<4x8x8xf32>, vector<4x8x8xf32> -> vector<4x8x8xf32>
    "tpu.trace_stop"() : () -> ()
    %cst_39 = arith.constant dense<0xFF800000> : vector<4x8xf32>
    %92 = vector.multi_reduction <maximumf>, %91, %cst_39 [2] : vector<4x8x8xf32> to vector<4x8xf32>
    %93 = vector.shape_cast %92 : vector<4x8xf32> to vector<4x8x1xf32>
    %94 = vector.broadcast %93 : vector<4x8x1xf32> to vector<4x8x8xf32>
    %95 = arith.subf %91, %94 : vector<4x8x8xf32>
    %96 = math.exp %95 : vector<4x8x8xf32>
    %cst_40 = arith.constant dense<0.000000e+00> : vector<4x8xf32>
    %97 = vector.multi_reduction <add>, %96, %cst_40 [2] : vector<4x8x8xf32> to vector<4x8xf32>
    %98 = vector.shape_cast %97 : vector<4x8xf32> to vector<4x8x1xf32>
    %99 = tpu.reciprocal %98 {approx = true} : vector<4x8x1xf32> -> vector<4x8x1xf32>
    %100 = arith.mulf %98, %99 : vector<4x8x1xf32>
    %cst_41 = arith.constant 2.000000e+00 : f32
    %101 = vector.broadcast %cst_41 : f32 to vector<4x8x1xf32>
    %102 = arith.subf %101, %100 : vector<4x8x1xf32>
    %103 = arith.mulf %99, %102 : vector<4x8x1xf32>
    %104 = vector.broadcast %103 : vector<4x8x1xf32> to vector<4x8x8xf32>
    %105 = arith.mulf %96, %104 : vector<4x8x8xf32>
    "tpu.trace_start"() <{level = 10 : i32, message = "bts,bsd->btd"}> : () -> ()
    %cst_42 = arith.constant dense<0.000000e+00> : vector<4x8x8xf32>
    %106 = tpu.matmul %105, %90, %cst_42 {dimension_numbers = #tpu.dot_dimension_numbers<[2], [1], [1], [2], [0, 0, 0, 1, 1, 2], [0], [0]>} : vector<4x8x8xf32>, vector<4x8x8xf32>, vector<4x8x8xf32> -> vector<4x8x8xf32>
    "tpu.trace_stop"() : () -> ()
    %107 = vector.shape_cast %106 : vector<4x8x8xf32> to vector<32x8xf32>
    %108 = vector.extract_strided_slice %17 {offsets = [24, 0], sizes = [8, 32], strides = [1, 1]} : vector<32x32xf32> to vector<8x32xf32>
    %cst_43 = arith.constant dense<0.000000e+00> : vector<32x32xf32>
    %109 = tpu.matmul %107, %108, %cst_43 {dimension_numbers = #tpu.dot_dimension_numbers<[1], [0], [0], [1], [0, 0, 1, 1], [], []>} : vector<32x8xf32>, vector<8x32xf32>, vector<32x32xf32> -> vector<32x32xf32>
    %110 = arith.addf %87, %109 : vector<32x32xf32>
    %c0_44 = arith.constant 0 : index
    %c0_45 = arith.constant 0 : index
    %111 = vector.load %arg8[%c0_44, %c0_45] : memref<8x32xf32, #tpu.memory_space<vmem>>, vector<1x32xf32>
    %c1 = arith.constant 1 : index
    %c0_46 = arith.constant 0 : index
    %112 = vector.load %arg8[%c1, %c0_46] : memref<8x32xf32, #tpu.memory_space<vmem>>, vector<1x32xf32>
    %c2 = arith.constant 2 : index
    %c0_47 = arith.constant 0 : index
    %113 = vector.load %arg8[%c2, %c0_47] : memref<8x32xf32, #tpu.memory_space<vmem>>, vector<1x32xf32>
    %c3 = arith.constant 3 : index
    %c0_48 = arith.constant 0 : index
    %114 = vector.load %arg8[%c3, %c0_48] : memref<8x32xf32, #tpu.memory_space<vmem>>, vector<1x32xf32>
    %c4 = arith.constant 4 : index
    %c0_49 = arith.constant 0 : index
    %115 = vector.load %arg8[%c4, %c0_49] : memref<8x32xf32, #tpu.memory_space<vmem>>, vector<1x32xf32>
    %c5 = arith.constant 5 : index
    %c0_50 = arith.constant 0 : index
    %116 = vector.load %arg8[%c5, %c0_50] : memref<8x32xf32, #tpu.memory_space<vmem>>, vector<1x32xf32>
    %c0_51 = arith.constant 0 : index
    %c0_52 = arith.constant 0 : index
    %c0_53 = arith.constant 0 : index
    %117 = vector.load %arg1[%c0_51, %c0_52, %c0_53] : memref<4x8x32xf32, #tpu.memory_space<vmem>>, vector<4x8x32xf32>
    %118 = vector.shape_cast %117 : vector<4x8x32xf32> to vector<32x32xf32>
    %cst_54 = arith.constant 0.000000e+00 : f32
    %119 = vector.broadcast %cst_54 : f32 to vector<32x32xf32>
    %120 = arith.maximumf %110, %119 : vector<32x32xf32>
    %121 = arith.addf %120, %118 : vector<32x32xf32>
    %cst_55 = arith.constant dense<0.000000e+00> : vector<32xf32>
    %122 = vector.multi_reduction <add>, %121, %cst_55 [1] : vector<32x32xf32> to vector<32xf32>
    %123 = vector.shape_cast %122 : vector<32xf32> to vector<32x1xf32>
    %cst_56 = arith.constant 3.200000e+01 : f32
    %124 = vector.broadcast %cst_56 : f32 to vector<32x1xf32>
    %125 = arith.divf %123, %124 : vector<32x1xf32>
    %126 = vector.broadcast %125 : vector<32x1xf32> to vector<32x32xf32>
    %127 = arith.subf %121, %126 : vector<32x32xf32>
    %128 = arith.mulf %127, %127 : vector<32x32xf32>
    %cst_57 = arith.constant dense<0.000000e+00> : vector<32xf32>
    %129 = vector.multi_reduction <add>, %128, %cst_57 [1] : vector<32x32xf32> to vector<32xf32>
    %130 = vector.shape_cast %129 : vector<32xf32> to vector<32x1xf32>
    %cst_58 = arith.constant 3.200000e+01 : f32
    %131 = vector.broadcast %cst_58 : f32 to vector<32x1xf32>
    %132 = arith.divf %130, %131 : vector<32x1xf32>
    %cst_59 = arith.constant 9.99999974E-6 : f32
    %133 = vector.broadcast %cst_59 : f32 to vector<32x1xf32>
    %134 = arith.addf %132, %133 : vector<32x1xf32>
    %135 = math.rsqrt %134 : vector<32x1xf32>
    %136 = vector.broadcast %135 : vector<32x1xf32> to vector<32x32xf32>
    %137 = arith.mulf %127, %136 : vector<32x32xf32>
    %138 = vector.broadcast %111 : vector<1x32xf32> to vector<32x32xf32>
    %139 = arith.mulf %137, %138 : vector<32x32xf32>
    %140 = vector.broadcast %112 : vector<1x32xf32> to vector<32x32xf32>
    %141 = arith.addf %139, %140 : vector<32x32xf32>
    %c0_60 = arith.constant 0 : index
    %c0_61 = arith.constant 0 : index
    %142 = vector.load %arg9[%c0_60, %c0_61] : memref<32x32xf32, #tpu.memory_space<vmem>>, vector<32x32xf32>
    %cst_62 = arith.constant dense<0.000000e+00> : vector<32x32xf32>
    %143 = tpu.matmul %141, %142, %cst_62 {dimension_numbers = #tpu.dot_dimension_numbers<[1], [0], [0], [1], [0, 0, 1, 1], [], []>} : vector<32x32xf32>, vector<32x32xf32>, vector<32x32xf32> -> vector<32x32xf32>
    %144 = vector.broadcast %113 : vector<1x32xf32> to vector<32x32xf32>
    %145 = arith.addf %143, %144 : vector<32x32xf32>
    %cst_63 = arith.constant 0.000000e+00 : f32
    %146 = vector.broadcast %cst_63 : f32 to vector<32x32xf32>
    %147 = arith.maximumf %145, %146 : vector<32x32xf32>
    %c0_64 = arith.constant 0 : index
    %c0_65 = arith.constant 0 : index
    %148 = vector.load %arg10[%c0_64, %c0_65] : memref<32x32xf32, #tpu.memory_space<vmem>>, vector<32x32xf32>
    %cst_66 = arith.constant dense<0.000000e+00> : vector<32x32xf32>
    %149 = tpu.matmul %147, %148, %cst_66 {dimension_numbers = #tpu.dot_dimension_numbers<[1], [0], [0], [1], [0, 0, 1, 1], [], []>} : vector<32x32xf32>, vector<32x32xf32>, vector<32x32xf32> -> vector<32x32xf32>
    %150 = vector.broadcast %114 : vector<1x32xf32> to vector<32x32xf32>
    %151 = arith.addf %149, %150 : vector<32x32xf32>
    %cst_67 = arith.constant 0.000000e+00 : f32
    %152 = vector.broadcast %cst_67 : f32 to vector<32x32xf32>
    %153 = arith.maximumf %151, %152 : vector<32x32xf32>
    %154 = arith.addf %153, %141 : vector<32x32xf32>
    %cst_68 = arith.constant dense<0.000000e+00> : vector<32xf32>
    %155 = vector.multi_reduction <add>, %154, %cst_68 [1] : vector<32x32xf32> to vector<32xf32>
    %156 = vector.shape_cast %155 : vector<32xf32> to vector<32x1xf32>
    %cst_69 = arith.constant 3.200000e+01 : f32
    %157 = vector.broadcast %cst_69 : f32 to vector<32x1xf32>
    %158 = arith.divf %156, %157 : vector<32x1xf32>
    %159 = vector.broadcast %158 : vector<32x1xf32> to vector<32x32xf32>
    %160 = arith.subf %154, %159 : vector<32x32xf32>
    %161 = arith.mulf %160, %160 : vector<32x32xf32>
    %cst_70 = arith.constant dense<0.000000e+00> : vector<32xf32>
    %162 = vector.multi_reduction <add>, %161, %cst_70 [1] : vector<32x32xf32> to vector<32xf32>
    %163 = vector.shape_cast %162 : vector<32xf32> to vector<32x1xf32>
    %cst_71 = arith.constant 3.200000e+01 : f32
    %164 = vector.broadcast %cst_71 : f32 to vector<32x1xf32>
    %165 = arith.divf %163, %164 : vector<32x1xf32>
    %cst_72 = arith.constant 9.99999974E-6 : f32
    %166 = vector.broadcast %cst_72 : f32 to vector<32x1xf32>
    %167 = arith.addf %165, %166 : vector<32x1xf32>
    %168 = math.rsqrt %167 : vector<32x1xf32>
    %169 = vector.broadcast %168 : vector<32x1xf32> to vector<32x32xf32>
    %170 = arith.mulf %160, %169 : vector<32x32xf32>
    %171 = vector.broadcast %115 : vector<1x32xf32> to vector<32x32xf32>
    %172 = arith.mulf %170, %171 : vector<32x32xf32>
    %173 = vector.broadcast %116 : vector<1x32xf32> to vector<32x32xf32>
    %174 = arith.addf %172, %173 : vector<32x32xf32>
    %175 = vector.shape_cast %174 : vector<32x32xf32> to vector<4x8x32xf32>
    %c0_73 = arith.constant 0 : index
    %c0_74 = arith.constant 0 : index
    %c0_75 = arith.constant 0 : index
    %176 = vector.load %arg11[%c0_73, %c0_74, %c0_75] : memref<4x8x32xf32, #tpu.memory_space<vmem>>, vector<4x8x32xf32>
    tpu.vector_store %arg11[%c0_73, %c0_74, %c0_75], %175 {strides = array<i32>} : memref<4x8x32xf32, #tpu.memory_space<vmem>>, vector<4x8x32xf32>,
    return
  }
  func.func @transform_0(%arg0: i32) -> (i32, i32, i32) {
    %c0_i32 = arith.constant 0 : i32
    %c0_i32_0 = arith.constant 0 : i32
    %c0_i32_1 = arith.constant 0 : i32
    return %arg0, %c0_i32, %c0_i32_0 : i32, i32, i32
  }
  func.func @transform_1(%arg0: i32) -> (i32, i32, i32) {
    %c0_i32 = arith.constant 0 : i32
    %c0_i32_0 = arith.constant 0 : i32
    %c0_i32_1 = arith.constant 0 : i32
    return %arg0, %c0_i32, %c0_i32_0 : i32, i32, i32
  }
  func.func @transform_2(%arg0: i32) -> (i32, i32, i32) {
    %c0_i32 = arith.constant 0 : i32
    %c0_i32_0 = arith.constant 0 : i32
    %c0_i32_1 = arith.constant 0 : i32
    return %arg0, %c0_i32, %c0_i32_0 : i32, i32, i32
  }
  func.func @transform_3(%arg0: i32) -> (i32, i32) {
    %c0_i32 = arith.constant 0 : i32
    %c0_i32_0 = arith.constant 0 : i32
    %c0_i32_1 = arith.constant 0 : i32
    return %c0_i32, %c0_i32_0 : i32, i32
  }
  func.func @transform_4(%arg0: i32) -> (i32, i32) {
    %c0_i32 = arith.constant 0 : i32
    %c0_i32_0 = arith.constant 0 : i32
    %c0_i32_1 = arith.constant 0 : i32
    return %c0_i32, %c0_i32_0 : i32, i32
  }
  func.func @transform_5(%arg0: i32) -> (i32, i32) {
    %c0_i32 = arith.constant 0 : i32
    %c0_i32_0 = arith.constant 0 : i32
    %c0_i32_1 = arith.constant 0 : i32
    return %c0_i32, %c0_i32_0 : i32, i32
  }
  func.func @transform_6(%arg0: i32) -> (i32, i32) {
    %c0_i32 = arith.constant 0 : i32
    %c0_i32_0 = arith.constant 0 : i32
    %c0_i32_1 = arith.constant 0 : i32
    return %c0_i32, %c0_i32_0 : i32, i32
  }
  func.func @transform_7(%arg0: i32) -> (i32, i32) {
    %c0_i32 = arith.constant 0 : i32
    %c0_i32_0 = arith.constant 0 : i32
    %c0_i32_1 = arith.constant 0 : i32
    return %c0_i32, %c0_i32_0 : i32, i32
  }
  func.func @transform_8(%arg0: i32) -> (i32, i32) {
    %c0_i32 = arith.constant 0 : i32
    %c0_i32_0 = arith.constant 0 : i32
    %c0_i32_1 = arith.constant 0 : i32
    return %c0_i32, %c0_i32_0 : i32, i32
  }
  func.func @transform_9(%arg0: i32) -> (i32, i32) {
    %c0_i32 = arith.constant 0 : i32
    %c0_i32_0 = arith.constant 0 : i32
    %c0_i32_1 = arith.constant 0 : i32
    return %c0_i32, %c0_i32_0 : i32, i32
  }
  func.func @transform_10(%arg0: i32) -> (i32, i32, i32) {
    %c0_i32 = arith.constant 0 : i32
    %c0_i32_0 = arith.constant 0 : i32
    %c0_i32_1 = arith.constant 0 : i32
    return %arg0, %c0_i32, %c0_i32_0 : i32, i32, i32
  }
}

</mosaic_0001>

<llo_original>
// kernel: tpu_custom_call.1
$region0: #{tpu_custom_call.1}
  #allocation0 [shape = 'u32[]', space=smem, size = 0x4, offset = 0x4, fixed_abs, tag = 'smem constant byte address 0x4 - core index']
  #allocation1 [shape = 'u32[144,128]{1,0:T(1,128)}', space=vmem, size = 0x12000, scoped, tag = 'internal scratch']
  %s0 = inlined_call_operand.hbm [shape: f32[4,8,32], index: 0, kind: input, shape index: {}]
  %s1 = inlined_call_operand.hbm [shape: f32[4,8,32], index: 1, kind: input, shape index: {}]
  %s2 = inlined_call_operand.hbm [shape: f32[4,8,32], index: 2, kind: input, shape index: {}]
  %s3 = inlined_call_operand.hbm [shape: f32[32,32], index: 3, kind: input, shape index: {}]
  %s4 = inlined_call_operand.hbm [shape: f32[32,32], index: 4, kind: input, shape index: {}]
  %s5 = inlined_call_operand.hbm [shape: f32[32,32], index: 5, kind: input, shape index: {}]
  %s6 = inlined_call_operand.hbm [shape: f32[32,32], index: 6, kind: input, shape index: {}]
  %s7 = inlined_call_operand.hbm [shape: f32[8,32], index: 7, kind: input, shape index: {}]
  %s8 = inlined_call_operand.hbm [shape: f32[32,32], index: 8, kind: input, shape index: {}]
  %s9 = inlined_call_operand.vmem [shape: f32[32,32], index: 9, kind: input, shape index: {}]
  %s10 = inlined_call_operand.hbm [shape: f32[4,8,32], index: 10, kind: output, shape index: {}]
  %s11 = sld [smem:[#allocation0]]
  $region86: #{tpu_custom_call.1} parent=0
    _
  %s13 = ssub.s32 1, %s11
  %s14 = scalar_select 0, %s13, %s11
  $region1: #{tpu_custom_call.1} parent=0
    #allocation2 [shape = 'u8[16384]{0}', space=vmem, size = 0x4000, scoped, tag = 'input window, operand 0, single buffered']
    #allocation3 [shape = 's32[1]{0}', space=sflag, size = 0x4, scoped, tag = 'scoped memory for tpu_custom_call.1']
    #allocation4 [shape = 's32[1]{0}', space=sflag, size = 0x4, scoped, tag = 'scoped memory for tpu_custom_call.1']
    #allocation5 [shape = 'u8[16384]{0}', space=vmem, size = 0x4000, scoped, tag = 'input window, operand 1, single buffered']
    #allocation6 [shape = 's32[1]{0}', space=sflag, size = 0x4, scoped, tag = 'scoped memory for tpu_custom_call.1']
    #allocation7 [shape = 'u8[16384]{0}', space=vmem, size = 0x4000, scoped, tag = 'input window, operand 2, single buffered']
    #allocation8 [shape = 'u8[16384]{0}', space=vmem, size = 0x4000, scoped, tag = 'input window, operand 3, single buffered']
    #allocation9 [shape = 's32[1]{0}', space=sflag, size = 0x4, scoped, tag = 'scoped memory for tpu_custom_call.1']
    #allocation10 [shape = 'u8[16384]{0}', space=vmem, size = 0x4000, scoped, tag = 'input window, operand 4, single buffered']
    #allocation11 [shape = 'u8[16384]{0}', space=vmem, size = 0x4000, scoped, tag = 'input window, operand 5, single buffered']
    #allocation12 [shape = 's32[1]{0}', space=sflag, size = 0x4, scoped, tag = 'scoped memory for tpu_custom_call.1']
    #allocation13 [shape = 'u8[16384]{0}', space=vmem, size = 0x4000, scoped, tag = 'input window, operand 6, single buffered']
    #allocation14 [shape = 'u8[4096]{0}', space=vmem, size = 0x1000, scoped, tag = 'input window, operand 7, single buffered']
    #allocation15 [shape = 's32[1]{0}', space=sflag, size = 0x4, scoped, tag = 'scoped memory for tpu_custom_call.1']
    #allocation16 [shape = 'u8[16384]{0}', space=vmem, size = 0x4000, scoped, tag = 'input window, operand 8, single buffered']
    #allocation17 [shape = 'u8[16384]{0}', space=vmem, size = 0x4000, scoped, tag = 'output window, operand 0, single buffered']
    %15 = vsyncpa [#allocation3], 0
    %16 = vsyncpa [#allocation6], 0
    %17 = vsyncpa [#allocation9], 0
    %18 = vsyncpa [#allocation12], 0
    %19 = vsyncpa [#allocation15], 0
    %20 = vsyncpa [#allocation4], 0
    // Predicated region
    $region2: #{tpu_custom_call.1} parent=1 // pred_check
      _
    $region3: #{tpu_custom_call.1} parent=1 // pred_check_branch
      %22 = sbr.rel (0) target = $region5
    $region4: #{tpu_custom_call.1} parent=1 // pred_region
      %s24 = ssub.s32 512, 512
      %25 = vsyncadd [#allocation3], %s24
      %s26 = sshll.u32 [#allocation2], 4
      %s27 = int_to_ptr.vmem [resolvable:$true] %s26
      %32 = dma.hbm_to_vmem [thread:$0]  %s0, 512, %s27, [#allocation3], 128, 128, 8
    $region5: #{tpu_custom_call.1} parent=1 // pred_fallthru
      _
    // Predicated region
    $region6: #{tpu_custom_call.1} parent=1 // pred_check
      _
    $region7: #{tpu_custom_call.1} parent=1 // pred_check_branch
      %34 = sbr.rel (0) target = $region9
    $region8: #{tpu_custom_call.1} parent=1 // pred_region
      %s36 = ssub.s32 512, 512
      %37 = vsyncadd [#allocation6], %s36
      %s38 = sshll.u32 [#allocation5], 4
      %s39 = int_to_ptr.vmem [resolvable:$true] %s38
      %44 = dma.hbm_to_vmem [thread:$0]  %s1, 512, %s39, [#allocation6], 128, 128, 8
    $region9: #{tpu_custom_call.1} parent=1 // pred_fallthru
      _
    // Predicated region
    $region10: #{tpu_custom_call.1} parent=1 // pred_check
      _
    $region11: #{tpu_custom_call.1} parent=1 // pred_check_branch
      %46 = sbr.rel (0) target = $region13
    $region12: #{tpu_custom_call.1} parent=1 // pred_region
      %s48 = ssub.s32 512, 512
      %49 = vsyncadd [#allocation6], %s48
      %s50 = sshll.u32 [#allocation7], 4
      %s51 = int_to_ptr.vmem [resolvable:$true] %s50
      %56 = dma.hbm_to_vmem [thread:$0]  %s2, 512, %s51, [#allocation6], 128, 128, 8
    $region13: #{tpu_custom_call.1} parent=1 // pred_fallthru
      _
    // Predicated region
    $region14: #{tpu_custom_call.1} parent=1 // pred_check
      _
    $region15: #{tpu_custom_call.1} parent=1 // pred_check_branch
      %58 = sbr.rel (0) target = $region17
    $region16: #{tpu_custom_call.1} parent=1 // pred_region
      %s60 = ssub.s32 512, 512
      %61 = vsyncadd [#allocation9], %s60
      %s62 = sshll.u32 [#allocation8], 4
      %s63 = int_to_ptr.vmem [resolvable:$true] %s62
      %68 = dma.hbm_to_vmem [thread:$0]  %s3, 512, %s63, [#allocation9], 128, 128, 8
    $region17: #{tpu_custom_call.1} parent=1 // pred_fallthru
      _
    // Predicated region
    $region18: #{tpu_custom_call.1} parent=1 // pred_check
      _
    $region19: #{tpu_custom_call.1} parent=1 // pred_check_branch
      %70 = sbr.rel (0) target = $region21
    $region20: #{tpu_custom_call.1} parent=1 // pred_region
      %s72 = ssub.s32 512, 512
      %73 = vsyncadd [#allocation9], %s72
      %s74 = sshll.u32 [#allocation10], 4
      %s75 = int_to_ptr.vmem [resolvable:$true] %s74
      %80 = dma.hbm_to_vmem [thread:$0]  %s4, 512, %s75, [#allocation9], 128, 128, 8
    $region21: #{tpu_custom_call.1} parent=1 // pred_fallthru
      _
    // Predicated region
    $region22: #{tpu_custom_call.1} parent=1 // pred_check
      _
    $region23: #{tpu_custom_call.1} parent=1 // pred_check_branch
      %82 = sbr.rel (0) target = $region25
    $region24: #{tpu_custom_call.1} parent=1 // pred_region
      %s84 = ssub.s32 512, 512
      %85 = vsyncadd [#allocation12], %s84
      %s86 = sshll.u32 [#allocation11], 4
      %s87 = int_to_ptr.vmem [resolvable:$true] %s86
      %92 = dma.hbm_to_vmem [thread:$0]  %s5, 512, %s87, [#allocation12], 128, 128, 8
    $region25: #{tpu_custom_call.1} parent=1 // pred_fallthru
      _
    // Predicated region
    $region26: #{tpu_custom_call.1} parent=1 // pred_check
      _
    $region27: #{tpu_custom_call.1} parent=1 // pred_check_branch
      %94 = sbr.rel (0) target = $region29
    $region28: #{tpu_custom_call.1} parent=1 // pred_region
      %s96 = ssub.s32 512, 512
      %97 = vsyncadd [#allocation12], %s96
      %s98 = sshll.u32 [#allocation13], 4
      %s99 = int_to_ptr.vmem [resolvable:$true] %s98
      %104 = dma.hbm_to_vmem [thread:$0]  %s6, 512, %s99, [#allocation12], 128, 128, 8
    $region29: #{tpu_custom_call.1} parent=1 // pred_fallthru
      _
    // Predicated region
    $region30: #{tpu_custom_call.1} parent=1 // pred_check
      _
    $region31: #{tpu_custom_call.1} parent=1 // pred_check_branch
      %106 = sbr.rel (0) target = $region33
    $region32: #{tpu_custom_call.1} parent=1 // pred_region
      %s108 = ssub.s32 128, 128
      %109 = vsyncadd [#allocation15], %s108
      %s111 = sshll.u32 [#allocation14], 4
      %s112 = int_to_ptr.vmem [resolvable:$true] %s111
      %114 = dma.hbm_to_vmem [thread:$0]  %s7, 128, %s112, [#allocation15]
    $region33: #{tpu_custom_call.1} parent=1 // pred_fallthru
      _
    // Predicated region
    $region34: #{tpu_custom_call.1} parent=1 // pred_check
      _
    $region35: #{tpu_custom_call.1} parent=1 // pred_check_branch
      %116 = sbr.rel (0) target = $region37
    $region36: #{tpu_custom_call.1} parent=1 // pred_region
      %s118 = ssub.s32 512, 512
      %119 = vsyncadd [#allocation15], %s118
      %s120 = sshll.u32 [#allocation16], 4
      %s121 = int_to_ptr.vmem [resolvable:$true] %s120
      %126 = dma.hbm_to_vmem [thread:$0]  %s8, 512, %s121, [#allocation15], 128, 128, 8
    $region37: #{tpu_custom_call.1} parent=1 // pred_fallthru
      _
    // Predicated region
    $region38: #{tpu_custom_call.1} parent=1 // pred_check
      _
    $region39: #{tpu_custom_call.1} parent=1 // pred_check_branch
      %128 = sbr.rel (0) target = $region41
    $region40: #{tpu_custom_call.1} parent=1 // pred_region
      _
    $region41: #{tpu_custom_call.1} parent=1 // pred_fallthru
      _
    // Predicated region
    $region42: #{tpu_custom_call.1} parent=1 // pred_check
      _
    $region43: #{tpu_custom_call.1} parent=1 // pred_check_branch
      %130 = sbr.rel (0) target = $region45
    $region44: #{tpu_custom_call.1} parent=1 // pred_region
      %131 = dma.done [#allocation3], 512
    $region45: #{tpu_custom_call.1} parent=1 // pred_fallthru
      _
    // Predicated region
    $region46: #{tpu_custom_call.1} parent=1 // pred_check
      _
    $region47: #{tpu_custom_call.1} parent=1 // pred_check_branch
      %133 = sbr.rel (0) target = $region49
    $region48: #{tpu_custom_call.1} parent=1 // pred_region
      %134 = dma.done [#allocation6], 512
    $region49: #{tpu_custom_call.1} parent=1 // pred_fallthru
      _
    // Predicated region
    $region50: #{tpu_custom_call.1} parent=1 // pred_check
      _
    $region51: #{tpu_custom_call.1} parent=1 // pred_check_branch
      %136 = sbr.rel (0) target = $region53
    $region52: #{tpu_custom_call.1} parent=1 // pred_region
      %137 = dma.done [#allocation6], 512
    $region53: #{tpu_custom_call.1} parent=1 // pred_fallthru
      _
    // Predicated region
    $region54: #{tpu_custom_call.1} parent=1 // pred_check
      _
    $region55: #{tpu_custom_call.1} parent=1 // pred_check_branch
      %139 = sbr.rel (0) target = $region57
    $region56: #{tpu_custom_call.1} parent=1 // pred_region
      %140 = dma.done [#allocation9], 512
    $region57: #{tpu_custom_call.1} parent=1 // pred_fallthru
      _
    // Predicated region
    $region58: #{tpu_custom_call.1} parent=1 // pred_check
      _
    $region59: #{tpu_custom_call.1} parent=1 // pred_check_branch
      %142 = sbr.rel (0) target = $region61
    $region60: #{tpu_custom_call.1} parent=1 // pred_region
      %143 = dma.done [#allocation9], 512
    $region61: #{tpu_custom_call.1} parent=1 // pred_fallthru
      _
    // Predicated region
    $region62: #{tpu_custom_call.1} parent=1 // pred_check
      _
    $region63: #{tpu_custom_call.1} parent=1 // pred_check_branch
      %145 = sbr.rel (0) target = $region65
    $region64: #{tpu_custom_call.1} parent=1 // pred_region
      %146 = dma.done [#allocation12], 512
    $region65: #{tpu_custom_call.1} parent=1 // pred_fallthru
      _
    // Predicated region
    $region66: #{tpu_custom_call.1} parent=1 // pred_check
      _
    $region67: #{tpu_custom_call.1} parent=1 // pred_check_branch
      %148 = sbr.rel (0) target = $region69
    $region68: #{tpu_custom_call.1} parent=1 // pred_region
      %149 = dma.done [#allocation12], 512
    $region69: #{tpu_custom_call.1} parent=1 // pred_fallthru
      _
    // Predicated region
    $region70: #{tpu_custom_call.1} parent=1 // pred_check
      _
    $region71: #{tpu_custom_call.1} parent=1 // pred_check_branch
      %151 = sbr.rel (0) target = $region73
    $region72: #{tpu_custom_call.1} parent=1 // pred_region
      %152 = dma.done [#allocation15], 128
    $region73: #{tpu_custom_call.1} parent=1 // pred_fallthru
      _
    // Predicated region
    $region74: #{tpu_custom_call.1} parent=1 // pred_check
      _
    $region75: #{tpu_custom_call.1} parent=1 // pred_check_branch
      %154 = sbr.rel (0) target = $region77
    $region76: #{tpu_custom_call.1} parent=1 // pred_region
      %155 = dma.done [#allocation15], 512
    $region77: #{tpu_custom_call.1} parent=1 // pred_fallthru
      _
    %v156 = vld [vmem:[#allocation2] sm:$0xff]
    %v157 = vld [vmem:[#allocation2 + $0x8] sm:$0xff]
    %v158 = vld [vmem:[#allocation2 + $0x10] sm:$0xff]
    %v159 = vld [vmem:[#allocation2 + $0x18] sm:$0xff]
    %v160 = vld [vmem:[#allocation8] sm:$0xff]
    %v161 = vld [vmem:[#allocation8 + $0x8] sm:$0xff]
    %v162 = vld [vmem:[#allocation8 + $0x10] sm:$0xff]
    %v163 = vld [vmem:[#allocation8 + $0x18] sm:$0xff]
    %vm164 = vcmask 261120
    %v166 = vsel %vm164, %v156, 0
    %v169 = vsel %vm164, %v157, 0
    %v172 = vsel %vm164, %v158, 0
    %v175 = vsel %vm164, %v159, 0
    %177 = vmatprep.subr.mxu0 0.0
    %178 = vmatpush1.msra.mxu0 %v160
    %179 = vmatprep.subr.mxu0 0.0
    %180 = vmatpush1.msra.mxu0 %v161
    %181 = vmatprep.subr.mxu0 0.0
    %182 = vmatpush1.msra.mxu0 %v162
    %183 = vmatprep.subr.mxu0 0.0
    %184 = vmatpush1.msra.mxu0 %v163
    %185 = vmatprep.subr.mxu0 0.0
    %186 = vmatpush1.msra.mxu0 0.0
    %187 = vmatprep.subr.mxu0 0.0
    %188 = vmatpush1.msra.mxu0 0.0
    %189 = vmatprep.subr.mxu0 0.0
    %190 = vmatpush1.msra.mxu0 0.0
    %191 = vmatprep.subr.mxu0 0.0
    %192 = vmatpush1.msra.mxu0 0.0
    %193 = vmatprep.subr.mxu0 0.0
    %194 = vmatpush1.msra.mxu0 0.0
    %195 = vmatprep.subr.mxu0 0.0
    %196 = vmatpush1.msra.mxu0 0.0
    %197 = vmatprep.subr.mxu0 0.0
    %198 = vmatpush1.msra.mxu0 0.0
    %199 = vmatprep.subr.mxu0 0.0
    %200 = vmatpush1.msra.mxu0 0.0
    %201 = vmatprep.subr.mxu0 0.0
    %202 = vmatpush1.msra.mxu0 0.0
    %203 = vmatprep.subr.mxu0 0.0
    %204 = vmatpush1.msra.mxu0 0.0
    %205 = vmatprep.subr.mxu0 0.0
    %206 = vmatpush1.msra.mxu0 0.0
    %207 = vmatprep.subr.mxu0 0.0
    %208 = vmatpush1.msra.mxu0 0.0
    %209 = vmatprep.subr.mxu0 0.0
    %210 = vmatpush1.msra.mxu0 0.0
    %211 = vmatprep.subr.mxu0 0.0
    %212 = vmatpush1.msra.mxu0 0.0
    %213 = vmatprep.subr.mxu0 0.0
    %214 = vmatpush1.msra.mxu0 0.0
    %215 = vmatprep.subr.mxu0 0.0
    %216 = vmatpush1.msra.mxu0 0.0
    %217 = vmatprep.subr.mxu0 0.0
    %218 = vmatpush1.msra.mxu0 0.0
    %219 = vmatprep.subr.mxu0 0.0
    %220 = vmatpush1.msra.mxu0 0.0
    %221 = vmatprep.subr.mxu0 0.0
    %222 = vmatpush1.msra.mxu0 0.0
    %223 = vmatprep.subr.mxu0 0.0
    %224 = vmatpush1.msra.mxu0 0.0
    %225 = vmatprep.subr.mxu0 0.0
    %226 = vmatpush1.msra.mxu0 0.0
    %227 = vmatprep.subr.mxu0 0.0
    %228 = vmatpush1.msra.mxu0 0.0
    %229 = vmatprep.subr.mxu0 0.0
    %230 = vmatpush1.msra.mxu0 0.0
    %231 = vmatprep.subr.mxu0 0.0
    %232 = vmatpush1.msra.mxu0 0.0
    %233 = vmatprep.subr.mxu0 0.0
    %234 = vmatpush1.msra.mxu0 0.0
    %235 = vmatprep.subr.mxu0 0.0
    %236 = vmatpush1.msra.mxu0 0.0
    %237 = vmatprep.subr.mxu0 0.0
    %238 = vmatpush1.msra.mxu0 0.0
    %239 = vmatprep.subr.mxu0 0.0
    %240 = vmatpush1.msra.mxu0 0.0
    %241 = vmatprep.mubr.f32.mxu0 0.0
    %242 = vmatmul.mubr.f32.gmra.mrb[0].mxu0 %v166
    %v243 = vpop.f32.mrb[0].mxu0
    %v244 = vadd.f32 0.0, %v243
    %v245 = vpop.f32.mrb[0].mxu0
    %246 = vmatprep.mubr.f32.mxu0 0.0
    %247 = vmatmul.mubr.f32.gmra.mrb[0].mxu0 %v169
    %v248 = vpop.f32.mrb[0].mxu0
    %v249 = vadd.f32 0.0, %v248
    %v250 = vpop.f32.mrb[0].mxu0
    %251 = vmatprep.mubr.f32.mxu0 0.0
    %252 = vmatmul.mubr.f32.gmra.mrb[0].mxu0 %v172
    %v253 = vpop.f32.mrb[0].mxu0
    %v254 = vadd.f32 0.0, %v253
    %v255 = vpop.f32.mrb[0].mxu0
    %256 = vmatprep.mubr.f32.mxu0 0.0
    %257 = vmatmul.mubr.f32.gmra.mrb[0].mxu0 %v175
    %v258 = vpop.f32.mrb[0].mxu0
    %v259 = vadd.f32 0.0, %v258
    %v260 = vpop.f32.mrb[0].mxu0
    %261 = vdwg.mxu0
    %v262 = vld [vmem:[#allocation5] sm:$0xff]
    %v263 = vld [vmem:[#allocation5 + $0x8] sm:$0xff]
    %v264 = vld [vmem:[#allocation5 + $0x10] sm:$0xff]
    %v265 = vld [vmem:[#allocation5 + $0x18] sm:$0xff]
    %v266 = vld [vmem:[#allocation10] sm:$0xff]
    %v267 = vld [vmem:[#allocation10 + $0x8] sm:$0xff]
    %v268 = vld [vmem:[#allocation10 + $0x10] sm:$0xff]
    %v269 = vld [vmem:[#allocation10 + $0x18] sm:$0xff]
    %v271 = vsel %vm164, %v262, 0
    %v274 = vsel %vm164, %v263, 0
    %v277 = vsel %vm164, %v264, 0
    %v280 = vsel %vm164, %v265, 0
    %282 = vmatprep.subr.mxu0 0.0
    %283 = vmatpush1.msra.mxu0 %v266
    %284 = vmatprep.subr.mxu0 0.0
    %285 = vmatpush1.msra.mxu0 %v267
    %286 = vmatprep.subr.mxu0 0.0
    %287 = vmatpush1.msra.mxu0 %v268
    %288 = vmatprep.subr.mxu0 0.0
    %289 = vmatpush1.msra.mxu0 %v269
    %290 = vmatprep.subr.mxu0 0.0
    %291 = vmatpush1.msra.mxu0 0.0
    %292 = vmatprep.subr.mxu0 0.0
    %293 = vmatpush1.msra.mxu0 0.0
    %294 = vmatprep.subr.mxu0 0.0
    %295 = vmatpush1.msra.mxu0 0.0
    %296 = vmatprep.subr.mxu0 0.0
    %297 = vmatpush1.msra.mxu0 0.0
    %298 = vmatprep.subr.mxu0 0.0
    %299 = vmatpush1.msra.mxu0 0.0
    %300 = vmatprep.subr.mxu0 0.0
    %301 = vmatpush1.msra.mxu0 0.0
    %302 = vmatprep.subr.mxu0 0.0
    %303 = vmatpush1.msra.mxu0 0.0
    %304 = vmatprep.subr.mxu0 0.0
    %305 = vmatpush1.msra.mxu0 0.0
    %306 = vmatprep.subr.mxu0 0.0
    %307 = vmatpush1.msra.mxu0 0.0
    %308 = vmatprep.subr.mxu0 0.0
    %309 = vmatpush1.msra.mxu0 0.0
    %310 = vmatprep.subr.mxu0 0.0
    %311 = vmatpush1.msra.mxu0 0.0
    %312 = vmatprep.subr.mxu0 0.0
    %313 = vmatpush1.msra.mxu0 0.0
    %314 = vmatprep.subr.mxu0 0.0
    %315 = vmatpush1.msra.mxu0 0.0
    %316 = vmatprep.subr.mxu0 0.0
    %317 = vmatpush1.msra.mxu0 0.0
    %318 = vmatprep.subr.mxu0 0.0
    %319 = vmatpush1.msra.mxu0 0.0
    %320 = vmatprep.subr.mxu0 0.0
    %321 = vmatpush1.msra.mxu0 0.0
    %322 = vmatprep.subr.mxu0 0.0
    %323 = vmatpush1.msra.mxu0 0.0
    %324 = vmatprep.subr.mxu0 0.0
    %325 = vmatpush1.msra.mxu0 0.0
    %326 = vmatprep.subr.mxu0 0.0
    %327 = vmatpush1.msra.mxu0 0.0
    %328 = vmatprep.subr.mxu0 0.0
    %329 = vmatpush1.msra.mxu0 0.0
    %330 = vmatprep.subr.mxu0 0.0
    %331 = vmatpush1.msra.mxu0 0.0
    %332 = vmatprep.subr.mxu0 0.0
    %333 = vmatpush1.msra.mxu0 0.0
    %334 = vmatprep.subr.mxu0 0.0
    %335 = vmatpush1.msra.mxu0 0.0
    %336 = vmatprep.subr.mxu0 0.0
    %337 = vmatpush1.msra.mxu0 0.0
    %338 = vmatprep.subr.mxu0 0.0
    %339 = vmatpush1.msra.mxu0 0.0
    %340 = vmatprep.subr.mxu0 0.0
    %341 = vmatpush1.msra.mxu0 0.0
    %342 = vmatprep.subr.mxu0 0.0
    %343 = vmatpush1.msra.mxu0 0.0
    %344 = vmatprep.subr.mxu0 0.0
    %345 = vmatpush1.msra.mxu0 0.0
    %346 = vmatprep.mubr.f32.mxu0 0.0
    %347 = vmatmul.mubr.f32.gmra.mrb[0].mxu0 %v271
    %v348 = vpop.f32.mrb[0].mxu0
    %v349 = vadd.f32 0.0, %v348
    %v350 = vpop.f32.mrb[0].mxu0
    %351 = vmatprep.mubr.f32.mxu0 0.0
    %352 = vmatmul.mubr.f32.gmra.mrb[0].mxu0 %v274
    %v353 = vpop.f32.mrb[0].mxu0
    %v354 = vadd.f32 0.0, %v353
    %v355 = vpop.f32.mrb[0].mxu0
    %356 = vmatprep.mubr.f32.mxu0 0.0
    %357 = vmatmul.mubr.f32.gmra.mrb[0].mxu0 %v277
    %v358 = vpop.f32.mrb[0].mxu0
    %v359 = vadd.f32 0.0, %v358
    %v360 = vpop.f32.mrb[0].mxu0
    %361 = vmatprep.mubr.f32.mxu0 0.0
    %362 = vmatmul.mubr.f32.gmra.mrb[0].mxu0 %v280
    %v363 = vpop.f32.mrb[0].mxu0
    %v364 = vadd.f32 0.0, %v363
    %v365 = vpop.f32.mrb[0].mxu0
    %366 = vdwg.mxu0
    %v367 = vld [vmem:[#allocation7] sm:$0xff]
    %v368 = vld [vmem:[#allocation7 + $0x8] sm:$0xff]
    %v369 = vld [vmem:[#allocation7 + $0x10] sm:$0xff]
    %v370 = vld [vmem:[#allocation7 + $0x18] sm:$0xff]
    %v371 = vld [vmem:[#allocation11] sm:$0xff]
    %v372 = vld [vmem:[#allocation11 + $0x8] sm:$0xff]
    %v373 = vld [vmem:[#allocation11 + $0x10] sm:$0xff]
    %v374 = vld [vmem:[#allocation11 + $0x18] sm:$0xff]
    %v376 = vsel %vm164, %v367, 0
    %v379 = vsel %vm164, %v368, 0
    %v382 = vsel %vm164, %v369, 0
    %v385 = vsel %vm164, %v370, 0
    %387 = vmatprep.subr.mxu0 0.0
    %388 = vmatpush1.msra.mxu0 %v371
    %389 = vmatprep.subr.mxu0 0.0
    %390 = vmatpush1.msra.mxu0 %v372
    %391 = vmatprep.subr.mxu0 0.0
    %392 = vmatpush1.msra.mxu0 %v373
    %393 = vmatprep.subr.mxu0 0.0
    %394 = vmatpush1.msra.mxu0 %v374
    %395 = vmatprep.subr.mxu0 0.0
    %396 = vmatpush1.msra.mxu0 0.0
    %397 = vmatprep.subr.mxu0 0.0
    %398 = vmatpush1.msra.mxu0 0.0
    %399 = vmatprep.subr.mxu0 0.0
    %400 = vmatpush1.msra.mxu0 0.0
    %401 = vmatprep.subr.mxu0 0.0
    %402 = vmatpush1.msra.mxu0 0.0
    %403 = vmatprep.subr.mxu0 0.0
    %404 = vmatpush1.msra.mxu0 0.0
    %405 = vmatprep.subr.mxu0 0.0
    %406 = vmatpush1.msra.mxu0 0.0
    %407 = vmatprep.subr.mxu0 0.0
    %408 = vmatpush1.msra.mxu0 0.0
    %409 = vmatprep.subr.mxu0 0.0
    %410 = vmatpush1.msra.mxu0 0.0
    %411 = vmatprep.subr.mxu0 0.0
    %412 = vmatpush1.msra.mxu0 0.0
    %413 = vmatprep.subr.mxu0 0.0
    %414 = vmatpush1.msra.mxu0 0.0
    %415 = vmatprep.subr.mxu0 0.0
    %416 = vmatpush1.msra.mxu0 0.0
    %417 = vmatprep.subr.mxu0 0.0
    %418 = vmatpush1.msra.mxu0 0.0
    %419 = vmatprep.subr.mxu0 0.0
    %420 = vmatpush1.msra.mxu0 0.0
    %421 = vmatprep.subr.mxu0 0.0
    %422 = vmatpush1.msra.mxu0 0.0
    %423 = vmatprep.subr.mxu0 0.0
    %424 = vmatpush1.msra.mxu0 0.0
    %425 = vmatprep.subr.mxu0 0.0
    %426 = vmatpush1.msra.mxu0 0.0
    %427 = vmatprep.subr.mxu0 0.0
    %428 = vmatpush1.msra.mxu0 0.0
    %429 = vmatprep.subr.mxu0 0.0
    %430 = vmatpush1.msra.mxu0 0.0
    %431 = vmatprep.subr.mxu0 0.0
    %432 = vmatpush1.msra.mxu0 0.0
    %433 = vmatprep.subr.mxu0 0.0
    %434 = vmatpush1.msra.mxu0 0.0
    %435 = vmatprep.subr.mxu0 0.0
    %436 = vmatpush1.msra.mxu0 0.0
    %437 = vmatprep.subr.mxu0 0.0
    %438 = vmatpush1.msra.mxu0 0.0
    %439 = vmatprep.subr.mxu0 0.0
    %440 = vmatpush1.msra.mxu0 0.0
    %441 = vmatprep.subr.mxu0 0.0
    %442 = vmatpush1.msra.mxu0 0.0
    %443 = vmatprep.subr.mxu0 0.0
    %444 = vmatpush1.msra.mxu0 0.0
    %445 = vmatprep.subr.mxu0 0.0
    %446 = vmatpush1.msra.mxu0 0.0
    %447 = vmatprep.subr.mxu0 0.0
    %448 = vmatpush1.msra.mxu0 0.0
    %449 = vmatprep.subr.mxu0 0.0
    %450 = vmatpush1.msra.mxu0 0.0
    %451 = vmatprep.mubr.f32.mxu0 0.0
    %452 = vmatmul.mubr.f32.gmra.mrb[0].mxu0 %v376
    %v453 = vpop.f32.mrb[0].mxu0
    %v454 = vadd.f32 0.0, %v453
    %v455 = vpop.f32.mrb[0].mxu0
    %456 = vmatprep.mubr.f32.mxu0 0.0
    %457 = vmatmul.mubr.f32.gmra.mrb[0].mxu0 %v379
    %v458 = vpop.f32.mrb[0].mxu0
    %v459 = vadd.f32 0.0, %v458
    %v460 = vpop.f32.mrb[0].mxu0
    %461 = vmatprep.mubr.f32.mxu0 0.0
    %462 = vmatmul.mubr.f32.gmra.mrb[0].mxu0 %v382
    %v463 = vpop.f32.mrb[0].mxu0
    %v464 = vadd.f32 0.0, %v463
    %v465 = vpop.f32.mrb[0].mxu0
    %466 = vmatprep.mubr.f32.mxu0 0.0
    %467 = vmatmul.mubr.f32.gmra.mrb[0].mxu0 %v385
    %v468 = vpop.f32.mrb[0].mxu0
    %v469 = vadd.f32 0.0, %v468
    %v470 = vpop.f32.mrb[0].mxu0
    %471 = vdwg.mxu0
    %v472 = vmul.f32 %v244, 0.35355338
    %v473 = vmul.f32 %v249, 0.35355338
    %v474 = vmul.f32 %v254, 0.35355338
    %v475 = vmul.f32 %v259, 0.35355338
    %v476 = vld [vmem:[#allocation13] sm:$0xff]
    %v477 = vld [vmem:[#allocation13 + $0x8] sm:$0xff]
    %v478 = vld [vmem:[#allocation13 + $0x10] sm:$0xff]
    %v479 = vld [vmem:[#allocation13 + $0x18] sm:$0xff]
    %vm480 = vcmask 64512
    %v482 = vsel %vm480, %v472, 0
    %v485 = vsel %vm480, %v349, 0
    %487 = vmatprep.subr.mxu0 0.0
    %488 = vmatpush1.xpose.msra.mxu0 %v485
    %489 = vmatprep.subr.mxu0 0.0
    %490 = vmatpush1.xpose.msra.mxu0 0.0
    %491 = vmatprep.subr.mxu0 0.0
    %492 = vmatpush1.xpose.msra.mxu0 0.0
    %493 = vmatprep.subr.mxu0 0.0
    %494 = vmatpush1.xpose.msra.mxu0 0.0
    %495 = vmatprep.subr.mxu0 0.0
    %496 = vmatpush1.xpose.msra.mxu0 0.0
    %497 = vmatprep.subr.mxu0 0.0
    %498 = vmatpush1.xpose.msra.mxu0 0.0
    %499 = vmatprep.subr.mxu0 0.0
    %500 = vmatpush1.xpose.msra.mxu0 0.0
    %501 = vmatprep.subr.mxu0 0.0
    %502 = vmatpush1.xpose.msra.mxu0 0.0
    %503 = vmatprep.subr.mxu0 0.0
    %504 = vmatpush1.xpose.msra.mxu0 0.0
    %505 = vmatprep.subr.mxu0 0.0
    %506 = vmatpush1.xpose.msra.mxu0 0.0
    %507 = vmatprep.subr.mxu0 0.0
    %508 = vmatpush1.xpose.msra.mxu0 0.0
    %509 = vmatprep.subr.mxu0 0.0
    %510 = vmatpush1.xpose.msra.mxu0 0.0
    %511 = vmatprep.subr.mxu0 0.0
    %512 = vmatpush1.xpose.msra.mxu0 0.0
    %513 = vmatprep.subr.mxu0 0.0
    %514 = vmatpush1.xpose.msra.mxu0 0.0
    %515 = vmatprep.subr.mxu0 0.0
    %516 = vmatpush1.xpose.msra.mxu0 0.0
    %517 = vmatprep.subr.mxu0 0.0
    %518 = vmatpush1.xpose.msra.mxu0 0.0
    %519 = vmatprep.subr.mxu0 0.0
    %520 = vmatpush1.xpose.msra.mxu0 0.0
    %521 = vmatprep.subr.mxu0 0.0
    %522 = vmatpush1.xpose.msra.mxu0 0.0
    %523 = vmatprep.subr.mxu0 0.0
    %524 = vmatpush1.xpose.msra.mxu0 0.0
    %525 = vmatprep.subr.mxu0 0.0
    %526 = vmatpush1.xpose.msra.mxu0 0.0
    %527 = vmatprep.subr.mxu0 0.0
    %528 = vmatpush1.xpose.msra.mxu0 0.0
    %529 = vmatprep.subr.mxu0 0.0
    %530 = vmatpush1.xpose.msra.mxu0 0.0
    %531 = vmatprep.subr.mxu0 0.0
    %532 = vmatpush1.xpose.msra.mxu0 0.0
    %533 = vmatprep.subr.mxu0 0.0
    %534 = vmatpush1.xpose.msra.mxu0 0.0
    %535 = vmatprep.subr.mxu0 0.0
    %536 = vmatpush1.xpose.msra.mxu0 0.0
    %537 = vmatprep.subr.mxu0 0.0
    %538 = vmatpush1.xpose.msra.mxu0 0.0
    %539 = vmatprep.subr.mxu0 0.0
    %540 = vmatpush1.xpose.msra.mxu0 0.0
    %541 = vmatprep.subr.mxu0 0.0
    %542 = vmatpush1.xpose.msra.mxu0 0.0
    %543 = vmatprep.subr.mxu0 0.0
    %544 = vmatpush1.xpose.msra.mxu0 0.0
    %545 = vmatprep.subr.mxu0 0.0
    %546 = vmatpush1.xpose.msra.mxu0 0.0
    %547 = vmatprep.subr.mxu0 0.0
    %548 = vmatpush1.xpose.msra.mxu0 0.0
    %549 = vmatprep.subr.mxu0 0.0
    %550 = vmatpush1.xpose.msra.mxu0 0.0
    %551 = vmatprep.mubr.f32.mxu0 0.0
    %552 = vmatmul.mubr.f32.gmra.mrb[0].mxu0 %v482
    %v553 = vpop.f32.mrb[0].mxu0
    %v554 = vadd.f32 0.0, %v553
    %v555 = vpop.f32.mrb[0].mxu0
    %556 = vdwg.mxu0
    %v558 = vsel %vm480, %v473, 0
    %v561 = vsel %vm480, %v354, 0
    %563 = vmatprep.subr.mxu0 0.0
    %564 = vmatpush1.xpose.msra.mxu0 %v561
    %565 = vmatprep.subr.mxu0 0.0
    %566 = vmatpush1.xpose.msra.mxu0 0.0
    %567 = vmatprep.subr.mxu0 0.0
    %568 = vmatpush1.xpose.msra.mxu0 0.0
    %569 = vmatprep.subr.mxu0 0.0
    %570 = vmatpush1.xpose.msra.mxu0 0.0
    %571 = vmatprep.subr.mxu0 0.0
    %572 = vmatpush1.xpose.msra.mxu0 0.0
    %573 = vmatprep.subr.mxu0 0.0
    %574 = vmatpush1.xpose.msra.mxu0 0.0
    %575 = vmatprep.subr.mxu0 0.0
    %576 = vmatpush1.xpose.msra.mxu0 0.0
    %577 = vmatprep.subr.mxu0 0.0
    %578 = vmatpush1.xpose.msra.mxu0 0.0
    %579 = vmatprep.subr.mxu0 0.0
    %580 = vmatpush1.xpose.msra.mxu0 0.0
    %581 = vmatprep.subr.mxu0 0.0
    %582 = vmatpush1.xpose.msra.mxu0 0.0
    %583 = vmatprep.subr.mxu0 0.0
    %584 = vmatpush1.xpose.msra.mxu0 0.0
    %585 = vmatprep.subr.mxu0 0.0
    %586 = vmatpush1.xpose.msra.mxu0 0.0
    %587 = vmatprep.subr.mxu0 0.0
    %588 = vmatpush1.xpose.msra.mxu0 0.0
    %589 = vmatprep.subr.mxu0 0.0
    %590 = vmatpush1.xpose.msra.mxu0 0.0
    %591 = vmatprep.subr.mxu0 0.0
    %592 = vmatpush1.xpose.msra.mxu0 0.0
    %593 = vmatprep.subr.mxu0 0.0
    %594 = vmatpush1.xpose.msra.mxu0 0.0
    %595 = vmatprep.subr.mxu0 0.0
    %596 = vmatpush1.xpose.msra.mxu0 0.0
    %597 = vmatprep.subr.mxu0 0.0
    %598 = vmatpush1.xpose.msra.mxu0 0.0
    %599 = vmatprep.subr.mxu0 0.0
    %600 = vmatpush1.xpose.msra.mxu0 0.0
    %601 = vmatprep.subr.mxu0 0.0
    %602 = vmatpush1.xpose.msra.mxu0 0.0
    %603 = vmatprep.subr.mxu0 0.0
    %604 = vmatpush1.xpose.msra.mxu0 0.0
    %605 = vmatprep.subr.mxu0 0.0
    %606 = vmatpush1.xpose.msra.mxu0 0.0
    %607 = vmatprep.subr.mxu0 0.0
    %608 = vmatpush1.xpose.msra.mxu0 0.0
    %609 = vmatprep.subr.mxu0 0.0
    %610 = vmatpush1.xpose.msra.mxu0 0.0
    %611 = vmatprep.subr.mxu0 0.0
    %612 = vmatpush1.xpose.msra.mxu0 0.0
    %613 = vmatprep.subr.mxu0 0.0
    %614 = vmatpush1.xpose.msra.mxu0 0.0
    %615 = vmatprep.subr.mxu0 0.0
    %616 = vmatpush1.xpose.msra.mxu0 0.0
    %617 = vmatprep.subr.mxu0 0.0
    %618 = vmatpush1.xpose.msra.mxu0 0.0
    %619 = vmatprep.subr.mxu0 0.0
    %620 = vmatpush1.xpose.msra.mxu0 0.0
    %621 = vmatprep.subr.mxu0 0.0
    %622 = vmatpush1.xpose.msra.mxu0 0.0
    %623 = vmatprep.subr.mxu0 0.0
    %624 = vmatpush1.xpose.msra.mxu0 0.0
    %625 = vmatprep.subr.mxu0 0.0
    %626 = vmatpush1.xpose.msra.mxu0 0.0
    %627 = vmatprep.mubr.f32.mxu0 0.0
    %628 = vmatmul.mubr.f32.gmra.mrb[0].mxu0 %v558
    %v629 = vpop.f32.mrb[0].mxu0
    %v630 = vadd.f32 0.0, %v629
    %v631 = vpop.f32.mrb[0].mxu0
    %632 = vdwg.mxu0
    %v634 = vsel %vm480, %v474, 0
    %v637 = vsel %vm480, %v359, 0
    %639 = vmatprep.subr.mxu0 0.0
    %640 = vmatpush1.xpose.msra.mxu0 %v637
    %641 = vmatprep.subr.mxu0 0.0
    %642 = vmatpush1.xpose.msra.mxu0 0.0
    %643 = vmatprep.subr.mxu0 0.0
    %644 = vmatpush1.xpose.msra.mxu0 0.0
    %645 = vmatprep.subr.mxu0 0.0
    %646 = vmatpush1.xpose.msra.mxu0 0.0
    %647 = vmatprep.subr.mxu0 0.0
    %648 = vmatpush1.xpose.msra.mxu0 0.0
    %649 = vmatprep.subr.mxu0 0.0
    %650 = vmatpush1.xpose.msra.mxu0 0.0
    %651 = vmatprep.subr.mxu0 0.0
    %652 = vmatpush1.xpose.msra.mxu0 0.0
    %653 = vmatprep.subr.mxu0 0.0
    %654 = vmatpush1.xpose.msra.mxu0 0.0
    %655 = vmatprep.subr.mxu0 0.0
    %656 = vmatpush1.xpose.msra.mxu0 0.0
    %657 = vmatprep.subr.mxu0 0.0
    %658 = vmatpush1.xpose.msra.mxu0 0.0
    %659 = vmatprep.subr.mxu0 0.0
    %660 = vmatpush1.xpose.msra.mxu0 0.0
    %661 = vmatprep.subr.mxu0 0.0
    %662 = vmatpush1.xpose.msra.mxu0 0.0
    %663 = vmatprep.subr.mxu0 0.0
    %664 = vmatpush1.xpose.msra.mxu0 0.0
    %665 = vmatprep.subr.mxu0 0.0
    %666 = vmatpush1.xpose.msra.mxu0 0.0
    %667 = vmatprep.subr.mxu0 0.0
    %668 = vmatpush1.xpose.msra.mxu0 0.0
    %669 = vmatprep.subr.mxu0 0.0
    %670 = vmatpush1.xpose.msra.mxu0 0.0
    %671 = vmatprep.subr.mxu0 0.0
    %672 = vmatpush1.xpose.msra.mxu0 0.0
    %673 = vmatprep.subr.mxu0 0.0
    %674 = vmatpush1.xpose.msra.mxu0 0.0
    %675 = vmatprep.subr.mxu0 0.0
    %676 = vmatpush1.xpose.msra.mxu0 0.0
    %677 = vmatprep.subr.mxu0 0.0
    %678 = vmatpush1.xpose.msra.mxu0 0.0
    %679 = vmatprep.subr.mxu0 0.0
    %680 = vmatpush1.xpose.msra.mxu0 0.0
    %681 = vmatprep.subr.mxu0 0.0
    %682 = vmatpush1.xpose.msra.mxu0 0.0
    %683 = vmatprep.subr.mxu0 0.0
    %684 = vmatpush1.xpose.msra.mxu0 0.0
    %685 = vmatprep.subr.mxu0 0.0
    %686 = vmatpush1.xpose.msra.mxu0 0.0
    %687 = vmatprep.subr.mxu0 0.0
    %688 = vmatpush1.xpose.msra.mxu0 0.0
    %689 = vmatprep.subr.mxu0 0.0
    %690 = vmatpush1.xpose.msra.mxu0 0.0
    %691 = vmatprep.subr.mxu0 0.0
    %692 = vmatpush1.xpose.msra.mxu0 0.0
    %693 = vmatprep.subr.mxu0 0.0
    %694 = vmatpush1.xpose.msra.mxu0 0.0
    %695 = vmatprep.subr.mxu0 0.0
    %696 = vmatpush1.xpose.msra.mxu0 0.0
    %697 = vmatprep.subr.mxu0 0.0
    %698 = vmatpush1.xpose.msra.mxu0 0.0
    %699 = vmatprep.subr.mxu0 0.0
    %700 = vmatpush1.xpose.msra.mxu0 0.0
    %701 = vmatprep.subr.mxu0 0.0
    %702 = vmatpush1.xpose.msra.mxu0 0.0
    %703 = vmatprep.mubr.f32.mxu0 0.0
    %704 = vmatmul.mubr.f32.gmra.mrb[0].mxu0 %v634
    %v705 = vpop.f32.mrb[0].mxu0
    %v706 = vadd.f32 0.0, %v705
    %v707 = vpop.f32.mrb[0].mxu0
    %708 = vdwg.mxu0
    %v710 = vsel %vm480, %v475, 0
    %v713 = vsel %vm480, %v364, 0
    %715 = vmatprep.subr.mxu0 0.0
    %716 = vmatpush1.xpose.msra.mxu0 %v713
    %717 = vmatprep.subr.mxu0 0.0
    %718 = vmatpush1.xpose.msra.mxu0 0.0
    %719 = vmatprep.subr.mxu0 0.0
    %720 = vmatpush1.xpose.msra.mxu0 0.0
    %721 = vmatprep.subr.mxu0 0.0
    %722 = vmatpush1.xpose.msra.mxu0 0.0
    %723 = vmatprep.subr.mxu0 0.0
    %724 = vmatpush1.xpose.msra.mxu0 0.0
    %725 = vmatprep.subr.mxu0 0.0
    %726 = vmatpush1.xpose.msra.mxu0 0.0
    %727 = vmatprep.subr.mxu0 0.0
    %728 = vmatpush1.xpose.msra.mxu0 0.0
    %729 = vmatprep.subr.mxu0 0.0
    %730 = vmatpush1.xpose.msra.mxu0 0.0
    %731 = vmatprep.subr.mxu0 0.0
    %732 = vmatpush1.xpose.msra.mxu0 0.0
    %733 = vmatprep.subr.mxu0 0.0
    %734 = vmatpush1.xpose.msra.mxu0 0.0
    %735 = vmatprep.subr.mxu0 0.0
    %736 = vmatpush1.xpose.msra.mxu0 0.0
    %737 = vmatprep.subr.mxu0 0.0
    %738 = vmatpush1.xpose.msra.mxu0 0.0
    %739 = vmatprep.subr.mxu0 0.0
    %740 = vmatpush1.xpose.msra.mxu0 0.0
    %741 = vmatprep.subr.mxu0 0.0
    %742 = vmatpush1.xpose.msra.mxu0 0.0
    %743 = vmatprep.subr.mxu0 0.0
    %744 = vmatpush1.xpose.msra.mxu0 0.0
    %745 = vmatprep.subr.mxu0 0.0
    %746 = vmatpush1.xpose.msra.mxu0 0.0
    %747 = vmatprep.subr.mxu0 0.0
    %748 = vmatpush1.xpose.msra.mxu0 0.0
    %749 = vmatprep.subr.mxu0 0.0
    %750 = vmatpush1.xpose.msra.mxu0 0.0
    %751 = vmatprep.subr.mxu0 0.0
    %752 = vmatpush1.xpose.msra.mxu0 0.0
    %753 = vmatprep.subr.mxu0 0.0
    %754 = vmatpush1.xpose.msra.mxu0 0.0
    %755 = vmatprep.subr.mxu0 0.0
    %756 = vmatpush1.xpose.msra.mxu0 0.0
    %757 = vmatprep.subr.mxu0 0.0
    %758 = vmatpush1.xpose.msra.mxu0 0.0
    %759 = vmatprep.subr.mxu0 0.0
    %760 = vmatpush1.xpose.msra.mxu0 0.0
    %761 = vmatprep.subr.mxu0 0.0
    %762 = vmatpush1.xpose.msra.mxu0 0.0
    %763 = vmatprep.subr.mxu0 0.0
    %764 = vmatpush1.xpose.msra.mxu0 0.0
    %765 = vmatprep.subr.mxu0 0.0
    %766 = vmatpush1.xpose.msra.mxu0 0.0
    %767 = vmatprep.subr.mxu0 0.0
    %768 = vmatpush1.xpose.msra.mxu0 0.0
    %769 = vmatprep.subr.mxu0 0.0
    %770 = vmatpush1.xpose.msra.mxu0 0.0
    %771 = vmatprep.subr.mxu0 0.0
    %772 = vmatpush1.xpose.msra.mxu0 0.0
    %773 = vmatprep.subr.mxu0 0.0
    %774 = vmatpush1.xpose.msra.mxu0 0.0
    %775 = vmatprep.subr.mxu0 0.0
    %776 = vmatpush1.xpose.msra.mxu0 0.0
    %777 = vmatprep.subr.mxu0 0.0
    %778 = vmatpush1.xpose.msra.mxu0 0.0
    %779 = vmatprep.mubr.f32.mxu0 0.0
    %780 = vmatmul.mubr.f32.gmra.mrb[0].mxu0 %v710
    %v781 = vpop.f32.mrb[0].mxu0
    %v782 = vadd.f32 0.0, %v781
    %v783 = vpop.f32.mrb[0].mxu0
    %784 = vdwg.mxu0
    %v785 = vsel %vm480, %v554, -inf
    %786 = vmax.xlane.f32.xlu0 %v785
    %v787 = vpop.xlane.xlu0 %786
    %v788 = vsel %vm480, %v630, -inf
    %789 = vmax.xlane.f32.xlu0 %v788
    %v790 = vpop.xlane.xlu0 %789
    %v791 = vsel %vm480, %v706, -inf
    %792 = vmax.xlane.f32.xlu0 %v791
    %v793 = vpop.xlane.xlu0 %792
    %v794 = vsel %vm480, %v782, -inf
    %795 = vmax.xlane.f32.xlu0 %v794
    %v796 = vpop.xlane.xlu0 %795
    %v797 = vsub.f32 %v554, %v787
    %v798 = vsub.f32 %v630, %v790
    %v799 = vsub.f32 %v706, %v793
    %v800 = vsub.f32 %v782, %v796
    %v801 = vmul.f32 %v797, 1.442695
    %v802 = vpow.pop %v801
    %v803 = vmul.f32 %v798, 1.442695
    %v804 = vpow.pop %v803
    %v805 = vmul.f32 %v799, 1.442695
    %v806 = vpow.pop %v805
    %v807 = vmul.f32 %v800, 1.442695
    %v808 = vpow.pop %v807
    %v809 = vsel %vm480, %v802, 0.0
    %810 = vadd.xlane.f32.xlu0 %v809
    %v811 = vpop.xlane.xlu0 %810
    %v812 = vsel %vm480, %v804, 0.0
    %813 = vadd.xlane.f32.xlu0 %v812
    %v814 = vpop.xlane.xlu0 %813
    %v815 = vsel %vm480, %v806, 0.0
    %816 = vadd.xlane.f32.xlu0 %v815
    %v817 = vpop.xlane.xlu0 %816
    %v818 = vsel %vm480, %v808, 0.0
    %819 = vadd.xlane.f32.xlu0 %v818
    %v820 = vpop.xlane.xlu0 %819
    %v821 = vrcp.pop %v811
    %v822 = vrcp.pop %v814
    %v823 = vrcp.pop %v817
    %v824 = vrcp.pop %v820
    %v825 = vmul.f32 %v811, %v821
    %v826 = vmul.f32 %v814, %v822
    %v827 = vmul.f32 %v817, %v823
    %v828 = vmul.f32 %v820, %v824
    %v829 = vsub.f32 2.0, %v825
    %v830 = vsub.f32 2.0, %v826
    %v831 = vsub.f32 2.0, %v827
    %v832 = vsub.f32 2.0, %v828
    %v833 = vmul.f32 %v821, %v829
    %v834 = vmul.f32 %v822, %v830
    %v835 = vmul.f32 %v823, %v831
    %v836 = vmul.f32 %v824, %v832
    %v837 = vmul.f32 %v802, %v833
    %v838 = vmul.f32 %v804, %v834
    %v839 = vmul.f32 %v806, %v835
    %v840 = vmul.f32 %v808, %v836
    %v842 = vsel %vm480, %v837, 0
    %844 = vmatprep.subr.mxu0 0.0
    %845 = vmatpush1.msra.mxu0 %v454
    %846 = vmatprep.subr.mxu0 0.0
    %847 = vmatpush1.msra.mxu0 0.0
    %848 = vmatprep.subr.mxu0 0.0
    %849 = vmatpush1.msra.mxu0 0.0
    %850 = vmatprep.subr.mxu0 0.0
    %851 = vmatpush1.msra.mxu0 0.0
    %852 = vmatprep.subr.mxu0 0.0
    %853 = vmatpush1.msra.mxu0 0.0
    %854 = vmatprep.subr.mxu0 0.0
    %855 = vmatpush1.msra.mxu0 0.0
    %856 = vmatprep.subr.mxu0 0.0
    %857 = vmatpush1.msra.mxu0 0.0
    %858 = vmatprep.subr.mxu0 0.0
    %859 = vmatpush1.msra.mxu0 0.0
    %860 = vmatprep.subr.mxu0 0.0
    %861 = vmatpush1.msra.mxu0 0.0
    %862 = vmatprep.subr.mxu0 0.0
    %863 = vmatpush1.msra.mxu0 0.0
    %864 = vmatprep.subr.mxu0 0.0
    %865 = vmatpush1.msra.mxu0 0.0
    %866 = vmatprep.subr.mxu0 0.0
    %867 = vmatpush1.msra.mxu0 0.0
    %868 = vmatprep.subr.mxu0 0.0
    %869 = vmatpush1.msra.mxu0 0.0
    %870 = vmatprep.subr.mxu0 0.0
    %871 = vmatpush1.msra.mxu0 0.0
    %872 = vmatprep.subr.mxu0 0.0
    %873 = vmatpush1.msra.mxu0 0.0
    %874 = vmatprep.subr.mxu0 0.0
    %875 = vmatpush1.msra.mxu0 0.0
    %876 = vmatprep.subr.mxu0 0.0
    %877 = vmatpush1.msra.mxu0 0.0
    %878 = vmatprep.subr.mxu0 0.0
    %879 = vmatpush1.msra.mxu0 0.0
    %880 = vmatprep.subr.mxu0 0.0
    %881 = vmatpush1.msra.mxu0 0.0
    %882 = vmatprep.subr.mxu0 0.0
    %883 = vmatpush1.msra.mxu0 0.0
    %884 = vmatprep.subr.mxu0 0.0
    %885 = vmatpush1.msra.mxu0 0.0
    %886 = vmatprep.subr.mxu0 0.0
    %887 = vmatpush1.msra.mxu0 0.0
    %888 = vmatprep.subr.mxu0 0.0
    %889 = vmatpush1.msra.mxu0 0.0
    %890 = vmatprep.subr.mxu0 0.0
    %891 = vmatpush1.msra.mxu0 0.0
    %892 = vmatprep.subr.mxu0 0.0
    %893 = vmatpush1.msra.mxu0 0.0
    %894 = vmatprep.subr.mxu0 0.0
    %895 = vmatpush1.msra.mxu0 0.0
    %896 = vmatprep.subr.mxu0 0.0
    %897 = vmatpush1.msra.mxu0 0.0
    %898 = vmatprep.subr.mxu0 0.0
    %899 = vmatpush1.msra.mxu0 0.0
    %900 = vmatprep.subr.mxu0 0.0
    %901 = vmatpush1.msra.mxu0 0.0
    %902 = vmatprep.subr.mxu0 0.0
    %903 = vmatpush1.msra.mxu0 0.0
    %904 = vmatprep.subr.mxu0 0.0
    %905 = vmatpush1.msra.mxu0 0.0
    %906 = vmatprep.subr.mxu0 0.0
    %907 = vmatpush1.msra.mxu0 0.0
    %908 = vmatprep.mubr.f32.mxu0 0.0
    %909 = vmatmul.mubr.f32.gmra.mrb[0].mxu0 %v842
    %v910 = vpop.f32.mrb[0].mxu0
    %v911 = vadd.f32 0.0, %v910
    %v912 = vpop.f32.mrb[0].mxu0
    %913 = vdwg.mxu0
    %v915 = vsel %vm480, %v838, 0
    %917 = vmatprep.subr.mxu0 0.0
    %918 = vmatpush1.msra.mxu0 %v459
    %919 = vmatprep.subr.mxu0 0.0
    %920 = vmatpush1.msra.mxu0 0.0
    %921 = vmatprep.subr.mxu0 0.0
    %922 = vmatpush1.msra.mxu0 0.0
    %923 = vmatprep.subr.mxu0 0.0
    %924 = vmatpush1.msra.mxu0 0.0
    %925 = vmatprep.subr.mxu0 0.0
    %926 = vmatpush1.msra.mxu0 0.0
    %927 = vmatprep.subr.mxu0 0.0
    %928 = vmatpush1.msra.mxu0 0.0
    %929 = vmatprep.subr.mxu0 0.0
    %930 = vmatpush1.msra.mxu0 0.0
    %931 = vmatprep.subr.mxu0 0.0
    %932 = vmatpush1.msra.mxu0 0.0
    %933 = vmatprep.subr.mxu0 0.0
    %934 = vmatpush1.msra.mxu0 0.0
    %935 = vmatprep.subr.mxu0 0.0
    %936 = vmatpush1.msra.mxu0 0.0
    %937 = vmatprep.subr.mxu0 0.0
    %938 = vmatpush1.msra.mxu0 0.0
    %939 = vmatprep.subr.mxu0 0.0
    %940 = vmatpush1.msra.mxu0 0.0
    %941 = vmatprep.subr.mxu0 0.0
    %942 = vmatpush1.msra.mxu0 0.0
    %943 = vmatprep.subr.mxu0 0.0
    %944 = vmatpush1.msra.mxu0 0.0
    %945 = vmatprep.subr.mxu0 0.0
    %946 = vmatpush1.msra.mxu0 0.0
    %947 = vmatprep.subr.mxu0 0.0
    %948 = vmatpush1.msra.mxu0 0.0
    %949 = vmatprep.subr.mxu0 0.0
    %950 = vmatpush1.msra.mxu0 0.0
    %951 = vmatprep.subr.mxu0 0.0
    %952 = vmatpush1.msra.mxu0 0.0
    %953 = vmatprep.subr.mxu0 0.0
    %954 = vmatpush1.msra.mxu0 0.0
    %955 = vmatprep.subr.mxu0 0.0
    %956 = vmatpush1.msra.mxu0 0.0
    %957 = vmatprep.subr.mxu0 0.0
    %958 = vmatpush1.msra.mxu0 0.0
    %959 = vmatprep.subr.mxu0 0.0
    %960 = vmatpush1.msra.mxu0 0.0
    %961 = vmatprep.subr.mxu0 0.0
    %962 = vmatpush1.msra.mxu0 0.0
    %963 = vmatprep.subr.mxu0 0.0
    %964 = vmatpush1.msra.mxu0 0.0
    %965 = vmatprep.subr.mxu0 0.0
    %966 = vmatpush1.msra.mxu0 0.0
    %967 = vmatprep.subr.mxu0 0.0
    %968 = vmatpush1.msra.mxu0 0.0
    %969 = vmatprep.subr.mxu0 0.0
    %970 = vmatpush1.msra.mxu0 0.0
    %971 = vmatprep.subr.mxu0 0.0
    %972 = vmatpush1.msra.mxu0 0.0
    %973 = vmatprep.subr.mxu0 0.0
    %974 = vmatpush1.msra.mxu0 0.0
    %975 = vmatprep.subr.mxu0 0.0
    %976 = vmatpush1.msra.mxu0 0.0
    %977 = vmatprep.subr.mxu0 0.0
    %978 = vmatpush1.msra.mxu0 0.0
    %979 = vmatprep.subr.mxu0 0.0
    %980 = vmatpush1.msra.mxu0 0.0
    %981 = vmatprep.mubr.f32.mxu0 0.0
    %982 = vmatmul.mubr.f32.gmra.mrb[0].mxu0 %v915
    %v983 = vpop.f32.mrb[0].mxu0
    %v984 = vadd.f32 0.0, %v983
    %v985 = vpop.f32.mrb[0].mxu0
    %986 = vdwg.mxu0
    %v988 = vsel %vm480, %v839, 0
    %990 = vmatprep.subr.mxu0 0.0
    %991 = vmatpush1.msra.mxu0 %v464
    %992 = vmatprep.subr.mxu0 0.0
    %993 = vmatpush1.msra.mxu0 0.0
    %994 = vmatprep.subr.mxu0 0.0
    %995 = vmatpush1.msra.mxu0 0.0
    %996 = vmatprep.subr.mxu0 0.0
    %997 = vmatpush1.msra.mxu0 0.0
    %998 = vmatprep.subr.mxu0 0.0
    %999 = vmatpush1.msra.mxu0 0.0
    %1000 = vmatprep.subr.mxu0 0.0
    %1001 = vmatpush1.msra.mxu0 0.0
    %1002 = vmatprep.subr.mxu0 0.0
    %1003 = vmatpush1.msra.mxu0 0.0
    %1004 = vmatprep.subr.mxu0 0.0
    %1005 = vmatpush1.msra.mxu0 0.0
    %1006 = vmatprep.subr.mxu0 0.0
    %1007 = vmatpush1.msra.mxu0 0.0
    %1008 = vmatprep.subr.mxu0 0.0
    %1009 = vmatpush1.msra.mxu0 0.0
    %1010 = vmatprep.subr.mxu0 0.0
    %1011 = vmatpush1.msra.mxu0 0.0
    %1012 = vmatprep.subr.mxu0 0.0
    %1013 = vmatpush1.msra.mxu0 0.0
    %1014 = vmatprep.subr.mxu0 0.0
    %1015 = vmatpush1.msra.mxu0 0.0
    %1016 = vmatprep.subr.mxu0 0.0
    %1017 = vmatpush1.msra.mxu0 0.0
    %1018 = vmatprep.subr.mxu0 0.0
    %1019 = vmatpush1.msra.mxu0 0.0
    %1020 = vmatprep.subr.mxu0 0.0
    %1021 = vmatpush1.msra.mxu0 0.0
    %1022 = vmatprep.subr.mxu0 0.0
    %1023 = vmatpush1.msra.mxu0 0.0
    %1024 = vmatprep.subr.mxu0 0.0
    %1025 = vmatpush1.msra.mxu0 0.0
    %1026 = vmatprep.subr.mxu0 0.0
    %1027 = vmatpush1.msra.mxu0 0.0
    %1028 = vmatprep.subr.mxu0 0.0
    %1029 = vmatpush1.msra.mxu0 0.0
    %1030 = vmatprep.subr.mxu0 0.0
    %1031 = vmatpush1.msra.mxu0 0.0
    %1032 = vmatprep.subr.mxu0 0.0
    %1033 = vmatpush1.msra.mxu0 0.0
    %1034 = vmatprep.subr.mxu0 0.0
    %1035 = vmatpush1.msra.mxu0 0.0
    %1036 = vmatprep.subr.mxu0 0.0
    %1037 = vmatpush1.msra.mxu0 0.0
    %1038 = vmatprep.subr.mxu0 0.0
    %1039 = vmatpush1.msra.mxu0 0.0
    %1040 = vmatprep.subr.mxu0 0.0
    %1041 = vmatpush1.msra.mxu0 0.0
    %1042 = vmatprep.subr.mxu0 0.0
    %1043 = vmatpush1.msra.mxu0 0.0
    %1044 = vmatprep.subr.mxu0 0.0
    %1045 = vmatpush1.msra.mxu0 0.0
    %1046 = vmatprep.subr.mxu0 0.0
    %1047 = vmatpush1.msra.mxu0 0.0
    %1048 = vmatprep.subr.mxu0 0.0
    %1049 = vmatpush1.msra.mxu0 0.0
    %1050 = vmatprep.subr.mxu0 0.0
    %1051 = vmatpush1.msra.mxu0 0.0
    %1052 = vmatprep.subr.mxu0 0.0
    %1053 = vmatpush1.msra.mxu0 0.0
    %1054 = vmatprep.mubr.f32.mxu0 0.0
    %1055 = vmatmul.mubr.f32.gmra.mrb[0].mxu0 %v988
    %v1056 = vpop.f32.mrb[0].mxu0
    %v1057 = vadd.f32 0.0, %v1056
    %v1058 = vpop.f32.mrb[0].mxu0
    %1059 = vdwg.mxu0
    %v1061 = vsel %vm480, %v840, 0
    %1063 = vmatprep.subr.mxu0 0.0
    %1064 = vmatpush1.msra.mxu0 %v469
    %1065 = vmatprep.subr.mxu0 0.0
    %1066 = vmatpush1.msra.mxu0 0.0
    %1067 = vmatprep.subr.mxu0 0.0
    %1068 = vmatpush1.msra.mxu0 0.0
    %1069 = vmatprep.subr.mxu0 0.0
    %1070 = vmatpush1.msra.mxu0 0.0
    %1071 = vmatprep.subr.mxu0 0.0
    %1072 = vmatpush1.msra.mxu0 0.0
    %1073 = vmatprep.subr.mxu0 0.0
    %1074 = vmatpush1.msra.mxu0 0.0
    %1075 = vmatprep.subr.mxu0 0.0
    %1076 = vmatpush1.msra.mxu0 0.0
    %1077 = vmatprep.subr.mxu0 0.0
    %1078 = vmatpush1.msra.mxu0 0.0
    %1079 = vmatprep.subr.mxu0 0.0
    %1080 = vmatpush1.msra.mxu0 0.0
    %1081 = vmatprep.subr.mxu0 0.0
    %1082 = vmatpush1.msra.mxu0 0.0
    %1083 = vmatprep.subr.mxu0 0.0
    %1084 = vmatpush1.msra.mxu0 0.0
    %1085 = vmatprep.subr.mxu0 0.0
    %1086 = vmatpush1.msra.mxu0 0.0
    %1087 = vmatprep.subr.mxu0 0.0
    %1088 = vmatpush1.msra.mxu0 0.0
    %1089 = vmatprep.subr.mxu0 0.0
    %1090 = vmatpush1.msra.mxu0 0.0
    %1091 = vmatprep.subr.mxu0 0.0
    %1092 = vmatpush1.msra.mxu0 0.0
    %1093 = vmatprep.subr.mxu0 0.0
    %1094 = vmatpush1.msra.mxu0 0.0
    %1095 = vmatprep.subr.mxu0 0.0
    %1096 = vmatpush1.msra.mxu0 0.0
    %1097 = vmatprep.subr.mxu0 0.0
    %1098 = vmatpush1.msra.mxu0 0.0
    %1099 = vmatprep.subr.mxu0 0.0
    %1100 = vmatpush1.msra.mxu0 0.0
    %1101 = vmatprep.subr.mxu0 0.0
    %1102 = vmatpush1.msra.mxu0 0.0
    %1103 = vmatprep.subr.mxu0 0.0
    %1104 = vmatpush1.msra.mxu0 0.0
    %1105 = vmatprep.subr.mxu0 0.0
    %1106 = vmatpush1.msra.mxu0 0.0
    %1107 = vmatprep.subr.mxu0 0.0
    %1108 = vmatpush1.msra.mxu0 0.0
    %1109 = vmatprep.subr.mxu0 0.0
    %1110 = vmatpush1.msra.mxu0 0.0
    %1111 = vmatprep.subr.mxu0 0.0
    %1112 = vmatpush1.msra.mxu0 0.0
    %1113 = vmatprep.subr.mxu0 0.0
    %1114 = vmatpush1.msra.mxu0 0.0
    %1115 = vmatprep.subr.mxu0 0.0
    %1116 = vmatpush1.msra.mxu0 0.0
    %1117 = vmatprep.subr.mxu0 0.0
    %1118 = vmatpush1.msra.mxu0 0.0
    %1119 = vmatprep.subr.mxu0 0.0
    %1120 = vmatpush1.msra.mxu0 0.0
    %1121 = vmatprep.subr.mxu0 0.0
    %1122 = vmatpush1.msra.mxu0 0.0
    %1123 = vmatprep.subr.mxu0 0.0
    %1124 = vmatpush1.msra.mxu0 0.0
    %1125 = vmatprep.subr.mxu0 0.0
    %1126 = vmatpush1.msra.mxu0 0.0
    %1127 = vmatprep.mubr.f32.mxu0 0.0
    %1128 = vmatmul.mubr.f32.gmra.mrb[0].mxu0 %v1061
    %v1129 = vpop.f32.mrb[0].mxu0
    %v1130 = vadd.f32 0.0, %v1129
    %v1131 = vpop.f32.mrb[0].mxu0
    %1132 = vdwg.mxu0
    %1133 = vrot.lane.b32.xlu0 %v472, 120
    %v1134 = vpop.permute.xlu0 %1133
    %1135 = vrot.lane.b32.xlu0 %v349, 120
    %v1136 = vpop.permute.xlu0 %1135
    %v1137 = vsel %vm480, %v1134, 0
    %v1139 = vsel %vm480, %v1136, 0
    %1141 = vmatprep.subr.mxu0 0.0
    %1142 = vmatpush1.xpose.msra.mxu0 %v1139
    %1143 = vmatprep.subr.mxu0 0.0
    %1144 = vmatpush1.xpose.msra.mxu0 0.0
    %1145 = vmatprep.subr.mxu0 0.0
    %1146 = vmatpush1.xpose.msra.mxu0 0.0
    %1147 = vmatprep.subr.mxu0 0.0
    %1148 = vmatpush1.xpose.msra.mxu0 0.0
    %1149 = vmatprep.subr.mxu0 0.0
    %1150 = vmatpush1.xpose.msra.mxu0 0.0
    %1151 = vmatprep.subr.mxu0 0.0
    %1152 = vmatpush1.xpose.msra.mxu0 0.0
    %1153 = vmatprep.subr.mxu0 0.0
    %1154 = vmatpush1.xpose.msra.mxu0 0.0
    %1155 = vmatprep.subr.mxu0 0.0
    %1156 = vmatpush1.xpose.msra.mxu0 0.0
    %1157 = vmatprep.subr.mxu0 0.0
    %1158 = vmatpush1.xpose.msra.mxu0 0.0
    %1159 = vmatprep.subr.mxu0 0.0
    %1160 = vmatpush1.xpose.msra.mxu0 0.0
    %1161 = vmatprep.subr.mxu0 0.0
    %1162 = vmatpush1.xpose.msra.mxu0 0.0
    %1163 = vmatprep.subr.mxu0 0.0
    %1164 = vmatpush1.xpose.msra.mxu0 0.0
    %1165 = vmatprep.subr.mxu0 0.0
    %1166 = vmatpush1.xpose.msra.mxu0 0.0
    %1167 = vmatprep.subr.mxu0 0.0
    %1168 = vmatpush1.xpose.msra.mxu0 0.0
    %1169 = vmatprep.subr.mxu0 0.0
    %1170 = vmatpush1.xpose.msra.mxu0 0.0
    %1171 = vmatprep.subr.mxu0 0.0
    %1172 = vmatpush1.xpose.msra.mxu0 0.0
    %1173 = vmatprep.subr.mxu0 0.0
    %1174 = vmatpush1.xpose.msra.mxu0 0.0
    %1175 = vmatprep.subr.mxu0 0.0
    %1176 = vmatpush1.xpose.msra.mxu0 0.0
    %1177 = vmatprep.subr.mxu0 0.0
    %1178 = vmatpush1.xpose.msra.mxu0 0.0
    %1179 = vmatprep.subr.mxu0 0.0
    %1180 = vmatpush1.xpose.msra.mxu0 0.0
    %1181 = vmatprep.subr.mxu0 0.0
    %1182 = vmatpush1.xpose.msra.mxu0 0.0
    %1183 = vmatprep.subr.mxu0 0.0
    %1184 = vmatpush1.xpose.msra.mxu0 0.0
    %1185 = vmatprep.subr.mxu0 0.0
    %1186 = vmatpush1.xpose.msra.mxu0 0.0
    %1187 = vmatprep.subr.mxu0 0.0
    %1188 = vmatpush1.xpose.msra.mxu0 0.0
    %1189 = vmatprep.subr.mxu0 0.0
    %1190 = vmatpush1.xpose.msra.mxu0 0.0
    %1191 = vmatprep.subr.mxu0 0.0
    %1192 = vmatpush1.xpose.msra.mxu0 0.0
    %1193 = vmatprep.subr.mxu0 0.0
    %1194 = vmatpush1.xpose.msra.mxu0 0.0
    %1195 = vmatprep.subr.mxu0 0.0
    %1196 = vmatpush1.xpose.msra.mxu0 0.0
    %1197 = vmatprep.subr.mxu0 0.0
    %1198 = vmatpush1.xpose.msra.mxu0 0.0
    %1199 = vmatprep.subr.mxu0 0.0
    %1200 = vmatpush1.xpose.msra.mxu0 0.0
    %1201 = vmatprep.subr.mxu0 0.0
    %1202 = vmatpush1.xpose.msra.mxu0 0.0
    %1203 = vmatprep.subr.mxu0 0.0
    %1204 = vmatpush1.xpose.msra.mxu0 0.0
    %1205 = vmatprep.mubr.f32.mxu0 0.0
    %1206 = vmatmul.mubr.f32.gmra.mrb[0].mxu0 %v1137
    %v1207 = vpop.f32.mrb[0].mxu0
    %v1208 = vadd.f32 0.0, %v1207
    %v1209 = vpop.f32.mrb[0].mxu0
    %1210 = vdwg.mxu0
    %1211 = vrot.lane.b32.xlu0 %v473, 120
    %v1212 = vpop.permute.xlu0 %1211
    %1213 = vrot.lane.b32.xlu0 %v354, 120
    %v1214 = vpop.permute.xlu0 %1213
    %v1215 = vsel %vm480, %v1212, 0
    %v1217 = vsel %vm480, %v1214, 0
    %1219 = vmatprep.subr.mxu0 0.0
    %1220 = vmatpush1.xpose.msra.mxu0 %v1217
    %1221 = vmatprep.subr.mxu0 0.0
    %1222 = vmatpush1.xpose.msra.mxu0 0.0
    %1223 = vmatprep.subr.mxu0 0.0
    %1224 = vmatpush1.xpose.msra.mxu0 0.0
    %1225 = vmatprep.subr.mxu0 0.0
    %1226 = vmatpush1.xpose.msra.mxu0 0.0
    %1227 = vmatprep.subr.mxu0 0.0
    %1228 = vmatpush1.xpose.msra.mxu0 0.0
    %1229 = vmatprep.subr.mxu0 0.0
    %1230 = vmatpush1.xpose.msra.mxu0 0.0
    %1231 = vmatprep.subr.mxu0 0.0
    %1232 = vmatpush1.xpose.msra.mxu0 0.0
    %1233 = vmatprep.subr.mxu0 0.0
    %1234 = vmatpush1.xpose.msra.mxu0 0.0
    %1235 = vmatprep.subr.mxu0 0.0
    %1236 = vmatpush1.xpose.msra.mxu0 0.0
    %1237 = vmatprep.subr.mxu0 0.0
    %1238 = vmatpush1.xpose.msra.mxu0 0.0
    %1239 = vmatprep.subr.mxu0 0.0
    %1240 = vmatpush1.xpose.msra.mxu0 0.0
    %1241 = vmatprep.subr.mxu0 0.0
    %1242 = vmatpush1.xpose.msra.mxu0 0.0
    %1243 = vmatprep.subr.mxu0 0.0
    %1244 = vmatpush1.xpose.msra.mxu0 0.0
    %1245 = vmatprep.subr.mxu0 0.0
    %1246 = vmatpush1.xpose.msra.mxu0 0.0
    %1247 = vmatprep.subr.mxu0 0.0
    %1248 = vmatpush1.xpose.msra.mxu0 0.0
    %1249 = vmatprep.subr.mxu0 0.0
    %1250 = vmatpush1.xpose.msra.mxu0 0.0
    %1251 = vmatprep.subr.mxu0 0.0
    %1252 = vmatpush1.xpose.msra.mxu0 0.0
    %1253 = vmatprep.subr.mxu0 0.0
    %1254 = vmatpush1.xpose.msra.mxu0 0.0
    %1255 = vmatprep.subr.mxu0 0.0
    %1256 = vmatpush1.xpose.msra.mxu0 0.0
    %1257 = vmatprep.subr.mxu0 0.0
    %1258 = vmatpush1.xpose.msra.mxu0 0.0
    %1259 = vmatprep.subr.mxu0 0.0
    %1260 = vmatpush1.xpose.msra.mxu0 0.0
    %1261 = vmatprep.subr.mxu0 0.0
    %1262 = vmatpush1.xpose.msra.mxu0 0.0
    %1263 = vmatprep.subr.mxu0 0.0
    %1264 = vmatpush1.xpose.msra.mxu0 0.0
    %1265 = vmatprep.subr.mxu0 0.0
    %1266 = vmatpush1.xpose.msra.mxu0 0.0
    %1267 = vmatprep.subr.mxu0 0.0
    %1268 = vmatpush1.xpose.msra.mxu0 0.0
    %1269 = vmatprep.subr.mxu0 0.0
    %1270 = vmatpush1.xpose.msra.mxu0 0.0
    %1271 = vmatprep.subr.mxu0 0.0
    %1272 = vmatpush1.xpose.msra.mxu0 0.0
    %1273 = vmatprep.subr.mxu0 0.0
    %1274 = vmatpush1.xpose.msra.mxu0 0.0
    %1275 = vmatprep.subr.mxu0 0.0
    %1276 = vmatpush1.xpose.msra.mxu0 0.0
    %1277 = vmatprep.subr.mxu0 0.0
    %1278 = vmatpush1.xpose.msra.mxu0 0.0
    %1279 = vmatprep.subr.mxu0 0.0
    %1280 = vmatpush1.xpose.msra.mxu0 0.0
    %1281 = vmatprep.subr.mxu0 0.0
    %1282 = vmatpush1.xpose.msra.mxu0 0.0
    %1283 = vmatprep.mubr.f32.mxu0 0.0
    %1284 = vmatmul.mubr.f32.gmra.mrb[0].mxu0 %v1215
    %v1285 = vpop.f32.mrb[0].mxu0
    %v1286 = vadd.f32 0.0, %v1285
    %v1287 = vpop.f32.mrb[0].mxu0
    %1288 = vdwg.mxu0
    %1289 = vrot.lane.b32.xlu0 %v474, 120
    %v1290 = vpop.permute.xlu0 %1289
    %1291 = vrot.lane.b32.xlu0 %v359, 120
    %v1292 = vpop.permute.xlu0 %1291
    %v1293 = vsel %vm480, %v1290, 0
    %v1295 = vsel %vm480, %v1292, 0
    %1297 = vmatprep.subr.mxu0 0.0
    %1298 = vmatpush1.xpose.msra.mxu0 %v1295
    %1299 = vmatprep.subr.mxu0 0.0
    %1300 = vmatpush1.xpose.msra.mxu0 0.0
    %1301 = vmatprep.subr.mxu0 0.0
    %1302 = vmatpush1.xpose.msra.mxu0 0.0
    %1303 = vmatprep.subr.mxu0 0.0
    %1304 = vmatpush1.xpose.msra.mxu0 0.0
    %1305 = vmatprep.subr.mxu0 0.0
    %1306 = vmatpush1.xpose.msra.mxu0 0.0
    %1307 = vmatprep.subr.mxu0 0.0
    %1308 = vmatpush1.xpose.msra.mxu0 0.0
    %1309 = vmatprep.subr.mxu0 0.0
    %1310 = vmatpush1.xpose.msra.mxu0 0.0
    %1311 = vmatprep.subr.mxu0 0.0
    %1312 = vmatpush1.xpose.msra.mxu0 0.0
    %1313 = vmatprep.subr.mxu0 0.0
    %1314 = vmatpush1.xpose.msra.mxu0 0.0
    %1315 = vmatprep.subr.mxu0 0.0
    %1316 = vmatpush1.xpose.msra.mxu0 0.0
    %1317 = vmatprep.subr.mxu0 0.0
    %1318 = vmatpush1.xpose.msra.mxu0 0.0
    %1319 = vmatprep.subr.mxu0 0.0
    %1320 = vmatpush1.xpose.msra.mxu0 0.0
    %1321 = vmatprep.subr.mxu0 0.0
    %1322 = vmatpush1.xpose.msra.mxu0 0.0
    %1323 = vmatprep.subr.mxu0 0.0
    %1324 = vmatpush1.xpose.msra.mxu0 0.0
    %1325 = vmatprep.subr.mxu0 0.0
    %1326 = vmatpush1.xpose.msra.mxu0 0.0
    %1327 = vmatprep.subr.mxu0 0.0
    %1328 = vmatpush1.xpose.msra.mxu0 0.0
    %1329 = vmatprep.subr.mxu0 0.0
    %1330 = vmatpush1.xpose.msra.mxu0 0.0
    %1331 = vmatprep.subr.mxu0 0.0
    %1332 = vmatpush1.xpose.msra.mxu0 0.0
    %1333 = vmatprep.subr.mxu0 0.0
    %1334 = vmatpush1.xpose.msra.mxu0 0.0
    %1335 = vmatprep.subr.mxu0 0.0
    %1336 = vmatpush1.xpose.msra.mxu0 0.0
    %1337 = vmatprep.subr.mxu0 0.0
    %1338 = vmatpush1.xpose.msra.mxu0 0.0
    %1339 = vmatprep.subr.mxu0 0.0
    %1340 = vmatpush1.xpose.msra.mxu0 0.0
    %1341 = vmatprep.subr.mxu0 0.0
    %1342 = vmatpush1.xpose.msra.mxu0 0.0
    %1343 = vmatprep.subr.mxu0 0.0
    %1344 = vmatpush1.xpose.msra.mxu0 0.0
    %1345 = vmatprep.subr.mxu0 0.0
    %1346 = vmatpush1.xpose.msra.mxu0 0.0
    %1347 = vmatprep.subr.mxu0 0.0
    %1348 = vmatpush1.xpose.msra.mxu0 0.0
    %1349 = vmatprep.subr.mxu0 0.0
    %1350 = vmatpush1.xpose.msra.mxu0 0.0
    %1351 = vmatprep.subr.mxu0 0.0
    %1352 = vmatpush1.xpose.msra.mxu0 0.0
    %1353 = vmatprep.subr.mxu0 0.0
    %1354 = vmatpush1.xpose.msra.mxu0 0.0
    %1355 = vmatprep.subr.mxu0 0.0
    %1356 = vmatpush1.xpose.msra.mxu0 0.0
    %1357 = vmatprep.subr.mxu0 0.0
    %1358 = vmatpush1.xpose.msra.mxu0 0.0
    %1359 = vmatprep.subr.mxu0 0.0
    %1360 = vmatpush1.xpose.msra.mxu0 0.0
    %1361 = vmatprep.mubr.f32.mxu0 0.0
    %1362 = vmatmul.mubr.f32.gmra.mrb[0].mxu0 %v1293
    %v1363 = vpop.f32.mrb[0].mxu0
    %v1364 = vadd.f32 0.0, %v1363
    %v1365 = vpop.f32.mrb[0].mxu0
    %1366 = vdwg.mxu0
    %1367 = vrot.lane.b32.xlu0 %v475, 120
    %v1368 = vpop.permute.xlu0 %1367
    %1369 = vrot.lane.b32.xlu0 %v364, 120
    %v1370 = vpop.permute.xlu0 %1369
    %v1371 = vsel %vm480, %v1368, 0
    %v1373 = vsel %vm480, %v1370, 0
    %1375 = vmatprep.subr.mxu0 0.0
    %1376 = vmatpush1.xpose.msra.mxu0 %v1373
    %1377 = vmatprep.subr.mxu0 0.0
    %1378 = vmatpush1.xpose.msra.mxu0 0.0
    %1379 = vmatprep.subr.mxu0 0.0
    %1380 = vmatpush1.xpose.msra.mxu0 0.0
    %1381 = vmatprep.subr.mxu0 0.0
    %1382 = vmatpush1.xpose.msra.mxu0 0.0
    %1383 = vmatprep.subr.mxu0 0.0
    %1384 = vmatpush1.xpose.msra.mxu0 0.0
    %1385 = vmatprep.subr.mxu0 0.0
    %1386 = vmatpush1.xpose.msra.mxu0 0.0
    %1387 = vmatprep.subr.mxu0 0.0
    %1388 = vmatpush1.xpose.msra.mxu0 0.0
    %1389 = vmatprep.subr.mxu0 0.0
    %1390 = vmatpush1.xpose.msra.mxu0 0.0
    %1391 = vmatprep.subr.mxu0 0.0
    %1392 = vmatpush1.xpose.msra.mxu0 0.0
    %1393 = vmatprep.subr.mxu0 0.0
    %1394 = vmatpush1.xpose.msra.mxu0 0.0
    %1395 = vmatprep.subr.mxu0 0.0
    %1396 = vmatpush1.xpose.msra.mxu0 0.0
    %1397 = vmatprep.subr.mxu0 0.0
    %1398 = vmatpush1.xpose.msra.mxu0 0.0
    %1399 = vmatprep.subr.mxu0 0.0
    %1400 = vmatpush1.xpose.msra.mxu0 0.0
    %1401 = vmatprep.subr.mxu0 0.0
    %1402 = vmatpush1.xpose.msra.mxu0 0.0
    %1403 = vmatprep.subr.mxu0 0.0
    %1404 = vmatpush1.xpose.msra.mxu0 0.0
    %1405 = vmatprep.subr.mxu0 0.0
    %1406 = vmatpush1.xpose.msra.mxu0 0.0
    %1407 = vmatprep.subr.mxu0 0.0
    %1408 = vmatpush1.xpose.msra.mxu0 0.0
    %1409 = vmatprep.subr.mxu0 0.0
    %1410 = vmatpush1.xpose.msra.mxu0 0.0
    %1411 = vmatprep.subr.mxu0 0.0
    %1412 = vmatpush1.xpose.msra.mxu0 0.0
    %1413 = vmatprep.subr.mxu0 0.0
    %1414 = vmatpush1.xpose.msra.mxu0 0.0
    %1415 = vmatprep.subr.mxu0 0.0
    %1416 = vmatpush1.xpose.msra.mxu0 0.0
    %1417 = vmatprep.subr.mxu0 0.0
    %1418 = vmatpush1.xpose.msra.mxu0 0.0
    %1419 = vmatprep.subr.mxu0 0.0
    %1420 = vmatpush1.xpose.msra.mxu0 0.0
    %1421 = vmatprep.subr.mxu0 0.0
    %1422 = vmatpush1.xpose.msra.mxu0 0.0
    %1423 = vmatprep.subr.mxu0 0.0
    %1424 = vmatpush1.xpose.msra.mxu0 0.0
    %1425 = vmatprep.subr.mxu0 0.0
    %1426 = vmatpush1.xpose.msra.mxu0 0.0
    %1427 = vmatprep.subr.mxu0 0.0
    %1428 = vmatpush1.xpose.msra.mxu0 0.0
    %1429 = vmatprep.subr.mxu0 0.0
    %1430 = vmatpush1.xpose.msra.mxu0 0.0
    %1431 = vmatprep.subr.mxu0 0.0
    %1432 = vmatpush1.xpose.msra.mxu0 0.0
    %1433 = vmatprep.subr.mxu0 0.0
    %1434 = vmatpush1.xpose.msra.mxu0 0.0
    %1435 = vmatprep.subr.mxu0 0.0
    %1436 = vmatpush1.xpose.msra.mxu0 0.0
    %1437 = vmatprep.subr.mxu0 0.0
    %1438 = vmatpush1.xpose.msra.mxu0 0.0
    %1439 = vmatprep.mubr.f32.mxu0 0.0
    %1440 = vmatmul.mubr.f32.gmra.mrb[0].mxu0 %v1371
    %v1441 = vpop.f32.mrb[0].mxu0
    %v1442 = vadd.f32 0.0, %v1441
    %v1443 = vpop.f32.mrb[0].mxu0
    %1444 = vdwg.mxu0
    %v1445 = vsel %vm480, %v1208, -inf
    %1446 = vmax.xlane.f32.xlu0 %v1445
    %v1447 = vpop.xlane.xlu0 %1446
    %v1448 = vsel %vm480, %v1286, -inf
    %1449 = vmax.xlane.f32.xlu0 %v1448
    %v1450 = vpop.xlane.xlu0 %1449
    %v1451 = vsel %vm480, %v1364, -inf
    %1452 = vmax.xlane.f32.xlu0 %v1451
    %v1453 = vpop.xlane.xlu0 %1452
    %v1454 = vsel %vm480, %v1442, -inf
    %1455 = vmax.xlane.f32.xlu0 %v1454
    %v1456 = vpop.xlane.xlu0 %1455
    %v1457 = vsub.f32 %v1208, %v1447
    %v1458 = vsub.f32 %v1286, %v1450
    %v1459 = vsub.f32 %v1364, %v1453
    %v1460 = vsub.f32 %v1442, %v1456
    %v1461 = vmul.f32 %v1457, 1.442695
    %v1462 = vpow.pop %v1461
    %v1463 = vmul.f32 %v1458, 1.442695
    %v1464 = vpow.pop %v1463
    %v1465 = vmul.f32 %v1459, 1.442695
    %v1466 = vpow.pop %v1465
    %v1467 = vmul.f32 %v1460, 1.442695
    %v1468 = vpow.pop %v1467
    %v1469 = vsel %vm480, %v1462, 0.0
    %1470 = vadd.xlane.f32.xlu0 %v1469
    %v1471 = vpop.xlane.xlu0 %1470
    %v1472 = vsel %vm480, %v1464, 0.0
    %1473 = vadd.xlane.f32.xlu0 %v1472
    %v1474 = vpop.xlane.xlu0 %1473
    %v1475 = vsel %vm480, %v1466, 0.0
    %1476 = vadd.xlane.f32.xlu0 %v1475
    %v1477 = vpop.xlane.xlu0 %1476
    %v1478 = vsel %vm480, %v1468, 0.0
    %1479 = vadd.xlane.f32.xlu0 %v1478
    %v1480 = vpop.xlane.xlu0 %1479
    %v1481 = vrcp.pop %v1471
    %v1482 = vrcp.pop %v1474
    %v1483 = vrcp.pop %v1477
    %v1484 = vrcp.pop %v1480
    %v1485 = vmul.f32 %v1471, %v1481
    %v1486 = vmul.f32 %v1474, %v1482
    %v1487 = vmul.f32 %v1477, %v1483
    %v1488 = vmul.f32 %v1480, %v1484
    %v1489 = vsub.f32 2.0, %v1485
    %v1490 = vsub.f32 2.0, %v1486
    %v1491 = vsub.f32 2.0, %v1487
    %v1492 = vsub.f32 2.0, %v1488
    %v1493 = vmul.f32 %v1481, %v1489
    %v1494 = vmul.f32 %v1482, %v1490
    %v1495 = vmul.f32 %v1483, %v1491
    %v1496 = vmul.f32 %v1484, %v1492
    %v1497 = vmul.f32 %v1462, %v1493
    %v1498 = vmul.f32 %v1464, %v1494
    %v1499 = vmul.f32 %v1466, %v1495
    %v1500 = vmul.f32 %v1468, %v1496
    %1502 = vrot.lane.b32.xlu0 %v454, 120
    %v1503 = vpop.permute.xlu0 %1502
    %v1506 = vsel %vm480, %v1497, 0
    %1508 = vmatprep.subr.mxu0 0.0
    %1509 = vmatpush1.msra.mxu0 %v1503
    %1510 = vmatprep.subr.mxu0 0.0
    %1511 = vmatpush1.msra.mxu0 0.0
    %1512 = vmatprep.subr.mxu0 0.0
    %1513 = vmatpush1.msra.mxu0 0.0
    %1514 = vmatprep.subr.mxu0 0.0
    %1515 = vmatpush1.msra.mxu0 0.0
    %1516 = vmatprep.subr.mxu0 0.0
    %1517 = vmatpush1.msra.mxu0 0.0
    %1518 = vmatprep.subr.mxu0 0.0
    %1519 = vmatpush1.msra.mxu0 0.0
    %1520 = vmatprep.subr.mxu0 0.0
    %1521 = vmatpush1.msra.mxu0 0.0
    %1522 = vmatprep.subr.mxu0 0.0
    %1523 = vmatpush1.msra.mxu0 0.0
    %1524 = vmatprep.subr.mxu0 0.0
    %1525 = vmatpush1.msra.mxu0 0.0
    %1526 = vmatprep.subr.mxu0 0.0
    %1527 = vmatpush1.msra.mxu0 0.0
    %1528 = vmatprep.subr.mxu0 0.0
    %1529 = vmatpush1.msra.mxu0 0.0
    %1530 = vmatprep.subr.mxu0 0.0
    %1531 = vmatpush1.msra.mxu0 0.0
    %1532 = vmatprep.subr.mxu0 0.0
    %1533 = vmatpush1.msra.mxu0 0.0
    %1534 = vmatprep.subr.mxu0 0.0
    %1535 = vmatpush1.msra.mxu0 0.0
    %1536 = vmatprep.subr.mxu0 0.0
    %1537 = vmatpush1.msra.mxu0 0.0
    %1538 = vmatprep.subr.mxu0 0.0
    %1539 = vmatpush1.msra.mxu0 0.0
    %1540 = vmatprep.subr.mxu0 0.0
    %1541 = vmatpush1.msra.mxu0 0.0
    %1542 = vmatprep.subr.mxu0 0.0
    %1543 = vmatpush1.msra.mxu0 0.0
    %1544 = vmatprep.subr.mxu0 0.0
    %1545 = vmatpush1.msra.mxu0 0.0
    %1546 = vmatprep.subr.mxu0 0.0
    %1547 = vmatpush1.msra.mxu0 0.0
    %1548 = vmatprep.subr.mxu0 0.0
    %1549 = vmatpush1.msra.mxu0 0.0
    %1550 = vmatprep.subr.mxu0 0.0
    %1551 = vmatpush1.msra.mxu0 0.0
    %1552 = vmatprep.subr.mxu0 0.0
    %1553 = vmatpush1.msra.mxu0 0.0
    %1554 = vmatprep.subr.mxu0 0.0
    %1555 = vmatpush1.msra.mxu0 0.0
    %1556 = vmatprep.subr.mxu0 0.0
    %1557 = vmatpush1.msra.mxu0 0.0
    %1558 = vmatprep.subr.mxu0 0.0
    %1559 = vmatpush1.msra.mxu0 0.0
    %1560 = vmatprep.subr.mxu0 0.0
    %1561 = vmatpush1.msra.mxu0 0.0
    %1562 = vmatprep.subr.mxu0 0.0
    %1563 = vmatpush1.msra.mxu0 0.0
    %1564 = vmatprep.subr.mxu0 0.0
    %1565 = vmatpush1.msra.mxu0 0.0
    %1566 = vmatprep.subr.mxu0 0.0
    %1567 = vmatpush1.msra.mxu0 0.0
    %1568 = vmatprep.subr.mxu0 0.0
    %1569 = vmatpush1.msra.mxu0 0.0
    %1570 = vmatprep.subr.mxu0 0.0
    %1571 = vmatpush1.msra.mxu0 0.0
    %1572 = vmatprep.mubr.f32.mxu0 0.0
    %1573 = vmatmul.mubr.f32.gmra.mrb[0].mxu0 %v1506
    %v1574 = vpop.f32.mrb[0].mxu0
    %v1575 = vadd.f32 0.0, %v1574
    %v1576 = vpop.f32.mrb[0].mxu0
    %1577 = vdwg.mxu0
    %1579 = vrot.lane.b32.xlu0 %v459, 120
    %v1580 = vpop.permute.xlu0 %1579
    %v1583 = vsel %vm480, %v1498, 0
    %1585 = vmatprep.subr.mxu0 0.0
    %1586 = vmatpush1.msra.mxu0 %v1580
    %1587 = vmatprep.subr.mxu0 0.0
    %1588 = vmatpush1.msra.mxu0 0.0
    %1589 = vmatprep.subr.mxu0 0.0
    %1590 = vmatpush1.msra.mxu0 0.0
    %1591 = vmatprep.subr.mxu0 0.0
    %1592 = vmatpush1.msra.mxu0 0.0
    %1593 = vmatprep.subr.mxu0 0.0
    %1594 = vmatpush1.msra.mxu0 0.0
    %1595 = vmatprep.subr.mxu0 0.0
    %1596 = vmatpush1.msra.mxu0 0.0
    %1597 = vmatprep.subr.mxu0 0.0
    %1598 = vmatpush1.msra.mxu0 0.0
    %1599 = vmatprep.subr.mxu0 0.0
    %1600 = vmatpush1.msra.mxu0 0.0
    %1601 = vmatprep.subr.mxu0 0.0
    %1602 = vmatpush1.msra.mxu0 0.0
    %1603 = vmatprep.subr.mxu0 0.0
    %1604 = vmatpush1.msra.mxu0 0.0
    %1605 = vmatprep.subr.mxu0 0.0
    %1606 = vmatpush1.msra.mxu0 0.0
    %1607 = vmatprep.subr.mxu0 0.0
    %1608 = vmatpush1.msra.mxu0 0.0
    %1609 = vmatprep.subr.mxu0 0.0
    %1610 = vmatpush1.msra.mxu0 0.0
    %1611 = vmatprep.subr.mxu0 0.0
    %1612 = vmatpush1.msra.mxu0 0.0
    %1613 = vmatprep.subr.mxu0 0.0
    %1614 = vmatpush1.msra.mxu0 0.0
    %1615 = vmatprep.subr.mxu0 0.0
    %1616 = vmatpush1.msra.mxu0 0.0
    %1617 = vmatprep.subr.mxu0 0.0
    %1618 = vmatpush1.msra.mxu0 0.0
    %1619 = vmatprep.subr.mxu0 0.0
    %1620 = vmatpush1.msra.mxu0 0.0
    %1621 = vmatprep.subr.mxu0 0.0
    %1622 = vmatpush1.msra.mxu0 0.0
    %1623 = vmatprep.subr.mxu0 0.0
    %1624 = vmatpush1.msra.mxu0 0.0
    %1625 = vmatprep.subr.mxu0 0.0
    %1626 = vmatpush1.msra.mxu0 0.0
    %1627 = vmatprep.subr.mxu0 0.0
    %1628 = vmatpush1.msra.mxu0 0.0
    %1629 = vmatprep.subr.mxu0 0.0
    %1630 = vmatpush1.msra.mxu0 0.0
    %1631 = vmatprep.subr.mxu0 0.0
    %1632 = vmatpush1.msra.mxu0 0.0
    %1633 = vmatprep.subr.mxu0 0.0
    %1634 = vmatpush1.msra.mxu0 0.0
    %1635 = vmatprep.subr.mxu0 0.0
    %1636 = vmatpush1.msra.mxu0 0.0
    %1637 = vmatprep.subr.mxu0 0.0
    %1638 = vmatpush1.msra.mxu0 0.0
    %1639 = vmatprep.subr.mxu0 0.0
    %1640 = vmatpush1.msra.mxu0 0.0
    %1641 = vmatprep.subr.mxu0 0.0
    %1642 = vmatpush1.msra.mxu0 0.0
    %1643 = vmatprep.subr.mxu0 0.0
    %1644 = vmatpush1.msra.mxu0 0.0
    %1645 = vmatprep.subr.mxu0 0.0
    %1646 = vmatpush1.msra.mxu0 0.0
    %1647 = vmatprep.subr.mxu0 0.0
    %1648 = vmatpush1.msra.mxu0 0.0
    %1649 = vmatprep.mubr.f32.mxu0 0.0
    %1650 = vmatmul.mubr.f32.gmra.mrb[0].mxu0 %v1583
    %v1651 = vpop.f32.mrb[0].mxu0
    %v1652 = vadd.f32 0.0, %v1651
    %v1653 = vpop.f32.mrb[0].mxu0
    %1654 = vdwg.mxu0
    %1656 = vrot.lane.b32.xlu0 %v464, 120
    %v1657 = vpop.permute.xlu0 %1656
    %v1660 = vsel %vm480, %v1499, 0
    %1662 = vmatprep.subr.mxu0 0.0
    %1663 = vmatpush1.msra.mxu0 %v1657
    %1664 = vmatprep.subr.mxu0 0.0
    %1665 = vmatpush1.msra.mxu0 0.0
    %1666 = vmatprep.subr.mxu0 0.0
    %1667 = vmatpush1.msra.mxu0 0.0
    %1668 = vmatprep.subr.mxu0 0.0
    %1669 = vmatpush1.msra.mxu0 0.0
    %1670 = vmatprep.subr.mxu0 0.0
    %1671 = vmatpush1.msra.mxu0 0.0
    %1672 = vmatprep.subr.mxu0 0.0
    %1673 = vmatpush1.msra.mxu0 0.0
    %1674 = vmatprep.subr.mxu0 0.0
    %1675 = vmatpush1.msra.mxu0 0.0
    %1676 = vmatprep.subr.mxu0 0.0
    %1677 = vmatpush1.msra.mxu0 0.0
    %1678 = vmatprep.subr.mxu0 0.0
    %1679 = vmatpush1.msra.mxu0 0.0
    %1680 = vmatprep.subr.mxu0 0.0
    %1681 = vmatpush1.msra.mxu0 0.0
    %1682 = vmatprep.subr.mxu0 0.0
    %1683 = vmatpush1.msra.mxu0 0.0
    %1684 = vmatprep.subr.mxu0 0.0
    %1685 = vmatpush1.msra.mxu0 0.0
    %1686 = vmatprep.subr.mxu0 0.0
    %1687 = vmatpush1.msra.mxu0 0.0
    %1688 = vmatprep.subr.mxu0 0.0
    %1689 = vmatpush1.msra.mxu0 0.0
    %1690 = vmatprep.subr.mxu0 0.0
    %1691 = vmatpush1.msra.mxu0 0.0
    %1692 = vmatprep.subr.mxu0 0.0
    %1693 = vmatpush1.msra.mxu0 0.0
    %1694 = vmatprep.subr.mxu0 0.0
    %1695 = vmatpush1.msra.mxu0 0.0
    %1696 = vmatprep.subr.mxu0 0.0
    %1697 = vmatpush1.msra.mxu0 0.0
    %1698 = vmatprep.subr.mxu0 0.0
    %1699 = vmatpush1.msra.mxu0 0.0
    %1700 = vmatprep.subr.mxu0 0.0
    %1701 = vmatpush1.msra.mxu0 0.0
    %1702 = vmatprep.subr.mxu0 0.0
    %1703 = vmatpush1.msra.mxu0 0.0
    %1704 = vmatprep.subr.mxu0 0.0
    %1705 = vmatpush1.msra.mxu0 0.0
    %1706 = vmatprep.subr.mxu0 0.0
    %1707 = vmatpush1.msra.mxu0 0.0
    %1708 = vmatprep.subr.mxu0 0.0
    %1709 = vmatpush1.msra.mxu0 0.0
    %1710 = vmatprep.subr.mxu0 0.0
    %1711 = vmatpush1.msra.mxu0 0.0
    %1712 = vmatprep.subr.mxu0 0.0
    %1713 = vmatpush1.msra.mxu0 0.0
    %1714 = vmatprep.subr.mxu0 0.0
    %1715 = vmatpush1.msra.mxu0 0.0
    %1716 = vmatprep.subr.mxu0 0.0
    %1717 = vmatpush1.msra.mxu0 0.0
    %1718 = vmatprep.subr.mxu0 0.0
    %1719 = vmatpush1.msra.mxu0 0.0
    %1720 = vmatprep.subr.mxu0 0.0
    %1721 = vmatpush1.msra.mxu0 0.0
    %1722 = vmatprep.subr.mxu0 0.0
    %1723 = vmatpush1.msra.mxu0 0.0
    %1724 = vmatprep.subr.mxu0 0.0
    %1725 = vmatpush1.msra.mxu0 0.0
    %1726 = vmatprep.mubr.f32.mxu0 0.0
    %1727 = vmatmul.mubr.f32.gmra.mrb[0].mxu0 %v1660
    %v1728 = vpop.f32.mrb[0].mxu0
    %v1729 = vadd.f32 0.0, %v1728
    %v1730 = vpop.f32.mrb[0].mxu0
    %1731 = vdwg.mxu0
    %1733 = vrot.lane.b32.xlu0 %v469, 120
    %v1734 = vpop.permute.xlu0 %1733
    %v1737 = vsel %vm480, %v1500, 0
    %1739 = vmatprep.subr.mxu0 0.0
    %1740 = vmatpush1.msra.mxu0 %v1734
    %1741 = vmatprep.subr.mxu0 0.0
    %1742 = vmatpush1.msra.mxu0 0.0
    %1743 = vmatprep.subr.mxu0 0.0
    %1744 = vmatpush1.msra.mxu0 0.0
    %1745 = vmatprep.subr.mxu0 0.0
    %1746 = vmatpush1.msra.mxu0 0.0
    %1747 = vmatprep.subr.mxu0 0.0
    %1748 = vmatpush1.msra.mxu0 0.0
    %1749 = vmatprep.subr.mxu0 0.0
    %1750 = vmatpush1.msra.mxu0 0.0
    %1751 = vmatprep.subr.mxu0 0.0
    %1752 = vmatpush1.msra.mxu0 0.0
    %1753 = vmatprep.subr.mxu0 0.0
    %1754 = vmatpush1.msra.mxu0 0.0
    %1755 = vmatprep.subr.mxu0 0.0
    %1756 = vmatpush1.msra.mxu0 0.0
    %1757 = vmatprep.subr.mxu0 0.0
    %1758 = vmatpush1.msra.mxu0 0.0
    %1759 = vmatprep.subr.mxu0 0.0
    %1760 = vmatpush1.msra.mxu0 0.0
    %1761 = vmatprep.subr.mxu0 0.0
    %1762 = vmatpush1.msra.mxu0 0.0
    %1763 = vmatprep.subr.mxu0 0.0
    %1764 = vmatpush1.msra.mxu0 0.0
    %1765 = vmatprep.subr.mxu0 0.0
    %1766 = vmatpush1.msra.mxu0 0.0
    %1767 = vmatprep.subr.mxu0 0.0
    %1768 = vmatpush1.msra.mxu0 0.0
    %1769 = vmatprep.subr.mxu0 0.0
    %1770 = vmatpush1.msra.mxu0 0.0
    %1771 = vmatprep.subr.mxu0 0.0
    %1772 = vmatpush1.msra.mxu0 0.0
    %1773 = vmatprep.subr.mxu0 0.0
    %1774 = vmatpush1.msra.mxu0 0.0
    %1775 = vmatprep.subr.mxu0 0.0
    %1776 = vmatpush1.msra.mxu0 0.0
    %1777 = vmatprep.subr.mxu0 0.0
    %1778 = vmatpush1.msra.mxu0 0.0
    %1779 = vmatprep.subr.mxu0 0.0
    %1780 = vmatpush1.msra.mxu0 0.0
    %1781 = vmatprep.subr.mxu0 0.0
    %1782 = vmatpush1.msra.mxu0 0.0
    %1783 = vmatprep.subr.mxu0 0.0
    %1784 = vmatpush1.msra.mxu0 0.0
    %1785 = vmatprep.subr.mxu0 0.0
    %1786 = vmatpush1.msra.mxu0 0.0
    %1787 = vmatprep.subr.mxu0 0.0
    %1788 = vmatpush1.msra.mxu0 0.0
    %1789 = vmatprep.subr.mxu0 0.0
    %1790 = vmatpush1.msra.mxu0 0.0
    %1791 = vmatprep.subr.mxu0 0.0
    %1792 = vmatpush1.msra.mxu0 0.0
    %1793 = vmatprep.subr.mxu0 0.0
    %1794 = vmatpush1.msra.mxu0 0.0
    %1795 = vmatprep.subr.mxu0 0.0
    %1796 = vmatpush1.msra.mxu0 0.0
    %1797 = vmatprep.subr.mxu0 0.0
    %1798 = vmatpush1.msra.mxu0 0.0
    %1799 = vmatprep.subr.mxu0 0.0
    %1800 = vmatpush1.msra.mxu0 0.0
    %1801 = vmatprep.subr.mxu0 0.0
    %1802 = vmatpush1.msra.mxu0 0.0
    %1803 = vmatprep.mubr.f32.mxu0 0.0
    %1804 = vmatmul.mubr.f32.gmra.mrb[0].mxu0 %v1737
    %v1805 = vpop.f32.mrb[0].mxu0
    %v1806 = vadd.f32 0.0, %v1805
    %v1807 = vpop.f32.mrb[0].mxu0
    %1808 = vdwg.mxu0
    %v1810 = vsel %vm480, %v1575, 0
    %v1813 = vsel %vm480, %v1652, 0
    %v1816 = vsel %vm480, %v1729, 0
    %v1819 = vsel %vm480, %v1806, 0
    %1821 = vmatprep.subr.mxu0 0.0
    %1822 = vmatpush1.msra.mxu0 %v477
    %1823 = vmatprep.subr.mxu0 0.0
    %1824 = vmatpush1.msra.mxu0 0.0
    %1825 = vmatprep.subr.mxu0 0.0
    %1826 = vmatpush1.msra.mxu0 0.0
    %1827 = vmatprep.subr.mxu0 0.0
    %1828 = vmatpush1.msra.mxu0 0.0
    %1829 = vmatprep.subr.mxu0 0.0
    %1830 = vmatpush1.msra.mxu0 0.0
    %1831 = vmatprep.subr.mxu0 0.0
    %1832 = vmatpush1.msra.mxu0 0.0
    %1833 = vmatprep.subr.mxu0 0.0
    %1834 = vmatpush1.msra.mxu0 0.0
    %1835 = vmatprep.subr.mxu0 0.0
    %1836 = vmatpush1.msra.mxu0 0.0
    %1837 = vmatprep.subr.mxu0 0.0
    %1838 = vmatpush1.msra.mxu0 0.0
    %1839 = vmatprep.subr.mxu0 0.0
    %1840 = vmatpush1.msra.mxu0 0.0
    %1841 = vmatprep.subr.mxu0 0.0
    %1842 = vmatpush1.msra.mxu0 0.0
    %1843 = vmatprep.subr.mxu0 0.0
    %1844 = vmatpush1.msra.mxu0 0.0
    %1845 = vmatprep.subr.mxu0 0.0
    %1846 = vmatpush1.msra.mxu0 0.0
    %1847 = vmatprep.subr.mxu0 0.0
    %1848 = vmatpush1.msra.mxu0 0.0
    %1849 = vmatprep.subr.mxu0 0.0
    %1850 = vmatpush1.msra.mxu0 0.0
    %1851 = vmatprep.subr.mxu0 0.0
    %1852 = vmatpush1.msra.mxu0 0.0
    %1853 = vmatprep.subr.mxu0 0.0
    %1854 = vmatpush1.msra.mxu0 0.0
    %1855 = vmatprep.subr.mxu0 0.0
    %1856 = vmatpush1.msra.mxu0 0.0
    %1857 = vmatprep.subr.mxu0 0.0
    %1858 = vmatpush1.msra.mxu0 0.0
    %1859 = vmatprep.subr.mxu0 0.0
    %1860 = vmatpush1.msra.mxu0 0.0
    %1861 = vmatprep.subr.mxu0 0.0
    %1862 = vmatpush1.msra.mxu0 0.0
    %1863 = vmatprep.subr.mxu0 0.0
    %1864 = vmatpush1.msra.mxu0 0.0
    %1865 = vmatprep.subr.mxu0 0.0
    %1866 = vmatpush1.msra.mxu0 0.0
    %1867 = vmatprep.subr.mxu0 0.0
    %1868 = vmatpush1.msra.mxu0 0.0
    %1869 = vmatprep.subr.mxu0 0.0
    %1870 = vmatpush1.msra.mxu0 0.0
    %1871 = vmatprep.subr.mxu0 0.0
    %1872 = vmatpush1.msra.mxu0 0.0
    %1873 = vmatprep.subr.mxu0 0.0
    %1874 = vmatpush1.msra.mxu0 0.0
    %1875 = vmatprep.subr.mxu0 0.0
    %1876 = vmatpush1.msra.mxu0 0.0
    %1877 = vmatprep.subr.mxu0 0.0
    %1878 = vmatpush1.msra.mxu0 0.0
    %1879 = vmatprep.subr.mxu0 0.0
    %1880 = vmatpush1.msra.mxu0 0.0
    %1881 = vmatprep.subr.mxu0 0.0
    %1882 = vmatpush1.msra.mxu0 0.0
    %1883 = vmatprep.subr.mxu0 0.0
    %1884 = vmatpush1.msra.mxu0 0.0
    %1885 = vmatprep.mubr.f32.mxu0 0.0
    %1886 = vmatmul.mubr.f32.gmra.mrb[0].mxu0 %v1810
    %v1887 = vpop.f32.mrb[0].mxu0
    %v1888 = vadd.f32 0.0, %v1887
    %v1889 = vpop.f32.mrb[0].mxu0
    %1890 = vmatprep.mubr.f32.mxu0 0.0
    %1891 = vmatmul.mubr.f32.gmra.mrb[0].mxu0 %v1813
    %v1892 = vpop.f32.mrb[0].mxu0
    %v1893 = vadd.f32 0.0, %v1892
    %v1894 = vpop.f32.mrb[0].mxu0
    %1895 = vmatprep.mubr.f32.mxu0 0.0
    %1896 = vmatmul.mubr.f32.gmra.mrb[0].mxu0 %v1816
    %v1897 = vpop.f32.mrb[0].mxu0
    %v1898 = vadd.f32 0.0, %v1897
    %v1899 = vpop.f32.mrb[0].mxu0
    %1900 = vmatprep.mubr.f32.mxu0 0.0
    %1901 = vmatmul.mubr.f32.gmra.mrb[0].mxu0 %v1819
    %v1902 = vpop.f32.mrb[0].mxu0
    %v1903 = vadd.f32 0.0, %v1902
    %v1904 = vpop.f32.mrb[0].mxu0
    %1905 = vdwg.mxu0
    %v1907 = vsel %vm480, %v911, 0
    %v1910 = vsel %vm480, %v984, 0
    %v1913 = vsel %vm480, %v1057, 0
    %v1916 = vsel %vm480, %v1130, 0
    %1918 = vmatprep.subr.mxu0 0.0
    %1919 = vmatpush1.msra.mxu0 %v476
    %1920 = vmatprep.subr.mxu0 0.0
    %1921 = vmatpush1.msra.mxu0 0.0
    %1922 = vmatprep.subr.mxu0 0.0
    %1923 = vmatpush1.msra.mxu0 0.0
    %1924 = vmatprep.subr.mxu0 0.0
    %1925 = vmatpush1.msra.mxu0 0.0
    %1926 = vmatprep.subr.mxu0 0.0
    %1927 = vmatpush1.msra.mxu0 0.0
    %1928 = vmatprep.subr.mxu0 0.0
    %1929 = vmatpush1.msra.mxu0 0.0
    %1930 = vmatprep.subr.mxu0 0.0
    %1931 = vmatpush1.msra.mxu0 0.0
    %1932 = vmatprep.subr.mxu0 0.0
    %1933 = vmatpush1.msra.mxu0 0.0
    %1934 = vmatprep.subr.mxu0 0.0
    %1935 = vmatpush1.msra.mxu0 0.0
    %1936 = vmatprep.subr.mxu0 0.0
    %1937 = vmatpush1.msra.mxu0 0.0
    %1938 = vmatprep.subr.mxu0 0.0
    %1939 = vmatpush1.msra.mxu0 0.0
    %1940 = vmatprep.subr.mxu0 0.0
    %1941 = vmatpush1.msra.mxu0 0.0
    %1942 = vmatprep.subr.mxu0 0.0
    %1943 = vmatpush1.msra.mxu0 0.0
    %1944 = vmatprep.subr.mxu0 0.0
    %1945 = vmatpush1.msra.mxu0 0.0
    %1946 = vmatprep.subr.mxu0 0.0
    %1947 = vmatpush1.msra.mxu0 0.0
    %1948 = vmatprep.subr.mxu0 0.0
    %1949 = vmatpush1.msra.mxu0 0.0
    %1950 = vmatprep.subr.mxu0 0.0
    %1951 = vmatpush1.msra.mxu0 0.0
    %1952 = vmatprep.subr.mxu0 0.0
    %1953 = vmatpush1.msra.mxu0 0.0
    %1954 = vmatprep.subr.mxu0 0.0
    %1955 = vmatpush1.msra.mxu0 0.0
    %1956 = vmatprep.subr.mxu0 0.0
    %1957 = vmatpush1.msra.mxu0 0.0
    %1958 = vmatprep.subr.mxu0 0.0
    %1959 = vmatpush1.msra.mxu0 0.0
    %1960 = vmatprep.subr.mxu0 0.0
    %1961 = vmatpush1.msra.mxu0 0.0
    %1962 = vmatprep.subr.mxu0 0.0
    %1963 = vmatpush1.msra.mxu0 0.0
    %1964 = vmatprep.subr.mxu0 0.0
    %1965 = vmatpush1.msra.mxu0 0.0
    %1966 = vmatprep.subr.mxu0 0.0
    %1967 = vmatpush1.msra.mxu0 0.0
    %1968 = vmatprep.subr.mxu0 0.0
    %1969 = vmatpush1.msra.mxu0 0.0
    %1970 = vmatprep.subr.mxu0 0.0
    %1971 = vmatpush1.msra.mxu0 0.0
    %1972 = vmatprep.subr.mxu0 0.0
    %1973 = vmatpush1.msra.mxu0 0.0
    %1974 = vmatprep.subr.mxu0 0.0
    %1975 = vmatpush1.msra.mxu0 0.0
    %1976 = vmatprep.subr.mxu0 0.0
    %1977 = vmatpush1.msra.mxu0 0.0
    %1978 = vmatprep.subr.mxu0 0.0
    %1979 = vmatpush1.msra.mxu0 0.0
    %1980 = vmatprep.subr.mxu0 0.0
    %1981 = vmatpush1.msra.mxu0 0.0
    %1982 = vmatprep.mubr.f32.mxu0 0.0
    %1983 = vmatmul.mubr.f32.gmra.mrb[0].mxu0 %v1907
    %v1984 = vpop.f32.mrb[0].mxu0
    %v1985 = vadd.f32 %v1888, %v1984
    %v1986 = vpop.f32.mrb[0].mxu0
    %1987 = vmatprep.mubr.f32.mxu0 0.0
    %1988 = vmatmul.mubr.f32.gmra.mrb[0].mxu0 %v1910
    %v1989 = vpop.f32.mrb[0].mxu0
    %v1990 = vadd.f32 %v1893, %v1989
    %v1991 = vpop.f32.mrb[0].mxu0
    %1992 = vmatprep.mubr.f32.mxu0 0.0
    %1993 = vmatmul.mubr.f32.gmra.mrb[0].mxu0 %v1913
    %v1994 = vpop.f32.mrb[0].mxu0
    %v1995 = vadd.f32 %v1898, %v1994
    %v1996 = vpop.f32.mrb[0].mxu0
    %1997 = vmatprep.mubr.f32.mxu0 0.0
    %1998 = vmatmul.mubr.f32.gmra.mrb[0].mxu0 %v1916
    %v1999 = vpop.f32.mrb[0].mxu0
    %v2000 = vadd.f32 %v1903, %v1999
    %v2001 = vpop.f32.mrb[0].mxu0
    %2002 = vdwg.mxu0
    %2003 = vrot.lane.b32.xlu0 %v472, 112
    %v2004 = vpop.permute.xlu0 %2003
    %2005 = vrot.lane.b32.xlu0 %v349, 112
    %v2006 = vpop.permute.xlu0 %2005
    %v2007 = vsel %vm480, %v2004, 0
    %v2009 = vsel %vm480, %v2006, 0
    %2011 = vmatprep.subr.mxu0 0.0
    %2012 = vmatpush1.xpose.msra.mxu0 %v2009
    %2013 = vmatprep.subr.mxu0 0.0
    %2014 = vmatpush1.xpose.msra.mxu0 0.0
    %2015 = vmatprep.subr.mxu0 0.0
    %2016 = vmatpush1.xpose.msra.mxu0 0.0
    %2017 = vmatprep.subr.mxu0 0.0
    %2018 = vmatpush1.xpose.msra.mxu0 0.0
    %2019 = vmatprep.subr.mxu0 0.0
    %2020 = vmatpush1.xpose.msra.mxu0 0.0
    %2021 = vmatprep.subr.mxu0 0.0
    %2022 = vmatpush1.xpose.msra.mxu0 0.0
    %2023 = vmatprep.subr.mxu0 0.0
    %2024 = vmatpush1.xpose.msra.mxu0 0.0
    %2025 = vmatprep.subr.mxu0 0.0
    %2026 = vmatpush1.xpose.msra.mxu0 0.0
    %2027 = vmatprep.subr.mxu0 0.0
    %2028 = vmatpush1.xpose.msra.mxu0 0.0
    %2029 = vmatprep.subr.mxu0 0.0
    %2030 = vmatpush1.xpose.msra.mxu0 0.0
    %2031 = vmatprep.subr.mxu0 0.0
    %2032 = vmatpush1.xpose.msra.mxu0 0.0
    %2033 = vmatprep.subr.mxu0 0.0
    %2034 = vmatpush1.xpose.msra.mxu0 0.0
    %2035 = vmatprep.subr.mxu0 0.0
    %2036 = vmatpush1.xpose.msra.mxu0 0.0
    %2037 = vmatprep.subr.mxu0 0.0
    %2038 = vmatpush1.xpose.msra.mxu0 0.0
    %2039 = vmatprep.subr.mxu0 0.0
    %2040 = vmatpush1.xpose.msra.mxu0 0.0
    %2041 = vmatprep.subr.mxu0 0.0
    %2042 = vmatpush1.xpose.msra.mxu0 0.0
    %2043 = vmatprep.subr.mxu0 0.0
    %2044 = vmatpush1.xpose.msra.mxu0 0.0
    %2045 = vmatprep.subr.mxu0 0.0
    %2046 = vmatpush1.xpose.msra.mxu0 0.0
    %2047 = vmatprep.subr.mxu0 0.0
    %2048 = vmatpush1.xpose.msra.mxu0 0.0
    %2049 = vmatprep.subr.mxu0 0.0
    %2050 = vmatpush1.xpose.msra.mxu0 0.0
    %2051 = vmatprep.subr.mxu0 0.0
    %2052 = vmatpush1.xpose.msra.mxu0 0.0
    %2053 = vmatprep.subr.mxu0 0.0
    %2054 = vmatpush1.xpose.msra.mxu0 0.0
    %2055 = vmatprep.subr.mxu0 0.0
    %2056 = vmatpush1.xpose.msra.mxu0 0.0
    %2057 = vmatprep.subr.mxu0 0.0
    %2058 = vmatpush1.xpose.msra.mxu0 0.0
    %2059 = vmatprep.subr.mxu0 0.0
    %2060 = vmatpush1.xpose.msra.mxu0 0.0
    %2061 = vmatprep.subr.mxu0 0.0
    %2062 = vmatpush1.xpose.msra.mxu0 0.0
    %2063 = vmatprep.subr.mxu0 0.0
    %2064 = vmatpush1.xpose.msra.mxu0 0.0
    %2065 = vmatprep.subr.mxu0 0.0
    %2066 = vmatpush1.xpose.msra.mxu0 0.0
    %2067 = vmatprep.subr.mxu0 0.0
    %2068 = vmatpush1.xpose.msra.mxu0 0.0
    %2069 = vmatprep.subr.mxu0 0.0
    %2070 = vmatpush1.xpose.msra.mxu0 0.0
    %2071 = vmatprep.subr.mxu0 0.0
    %2072 = vmatpush1.xpose.msra.mxu0 0.0
    %2073 = vmatprep.subr.mxu0 0.0
    %2074 = vmatpush1.xpose.msra.mxu0 0.0
    %2075 = vmatprep.mubr.f32.mxu0 0.0
    %2076 = vmatmul.mubr.f32.gmra.mrb[0].mxu0 %v2007
    %v2077 = vpop.f32.mrb[0].mxu0
    %v2078 = vadd.f32 0.0, %v2077
    %v2079 = vpop.f32.mrb[0].mxu0
    %2080 = vdwg.mxu0
    %2081 = vrot.lane.b32.xlu0 %v473, 112
    %v2082 = vpop.permute.xlu0 %2081
    %2083 = vrot.lane.b32.xlu0 %v354, 112
    %v2084 = vpop.permute.xlu0 %2083
    %v2085 = vsel %vm480, %v2082, 0
    %v2087 = vsel %vm480, %v2084, 0
    %2089 = vmatprep.subr.mxu0 0.0
    %2090 = vmatpush1.xpose.msra.mxu0 %v2087
    %2091 = vmatprep.subr.mxu0 0.0
    %2092 = vmatpush1.xpose.msra.mxu0 0.0
    %2093 = vmatprep.subr.mxu0 0.0
    %2094 = vmatpush1.xpose.msra.mxu0 0.0
    %2095 = vmatprep.subr.mxu0 0.0
    %2096 = vmatpush1.xpose.msra.mxu0 0.0
    %2097 = vmatprep.subr.mxu0 0.0
    %2098 = vmatpush1.xpose.msra.mxu0 0.0
    %2099 = vmatprep.subr.mxu0 0.0
    %2100 = vmatpush1.xpose.msra.mxu0 0.0
    %2101 = vmatprep.subr.mxu0 0.0
    %2102 = vmatpush1.xpose.msra.mxu0 0.0
    %2103 = vmatprep.subr.mxu0 0.0
    %2104 = vmatpush1.xpose.msra.mxu0 0.0
    %2105 = vmatprep.subr.mxu0 0.0
    %2106 = vmatpush1.xpose.msra.mxu0 0.0
    %2107 = vmatprep.subr.mxu0 0.0
    %2108 = vmatpush1.xpose.msra.mxu0 0.0
    %2109 = vmatprep.subr.mxu0 0.0
    %2110 = vmatpush1.xpose.msra.mxu0 0.0
    %2111 = vmatprep.subr.mxu0 0.0
    %2112 = vmatpush1.xpose.msra.mxu0 0.0
    %2113 = vmatprep.subr.mxu0 0.0
    %2114 = vmatpush1.xpose.msra.mxu0 0.0
    %2115 = vmatprep.subr.mxu0 0.0
    %2116 = vmatpush1.xpose.msra.mxu0 0.0
    %2117 = vmatprep.subr.mxu0 0.0
    %2118 = vmatpush1.xpose.msra.mxu0 0.0
    %2119 = vmatprep.subr.mxu0 0.0
    %2120 = vmatpush1.xpose.msra.mxu0 0.0
    %2121 = vmatprep.subr.mxu0 0.0
    %2122 = vmatpush1.xpose.msra.mxu0 0.0
    %2123 = vmatprep.subr.mxu0 0.0
    %2124 = vmatpush1.xpose.msra.mxu0 0.0
    %2125 = vmatprep.subr.mxu0 0.0
    %2126 = vmatpush1.xpose.msra.mxu0 0.0
    %2127 = vmatprep.subr.mxu0 0.0
    %2128 = vmatpush1.xpose.msra.mxu0 0.0
    %2129 = vmatprep.subr.mxu0 0.0
    %2130 = vmatpush1.xpose.msra.mxu0 0.0
    %2131 = vmatprep.subr.mxu0 0.0
    %2132 = vmatpush1.xpose.msra.mxu0 0.0
    %2133 = vmatprep.subr.mxu0 0.0
    %2134 = vmatpush1.xpose.msra.mxu0 0.0
    %2135 = vmatprep.subr.mxu0 0.0
    %2136 = vmatpush1.xpose.msra.mxu0 0.0
    %2137 = vmatprep.subr.mxu0 0.0
    %2138 = vmatpush1.xpose.msra.mxu0 0.0
    %2139 = vmatprep.subr.mxu0 0.0
    %2140 = vmatpush1.xpose.msra.mxu0 0.0
    %2141 = vmatprep.subr.mxu0 0.0
    %2142 = vmatpush1.xpose.msra.mxu0 0.0
    %2143 = vmatprep.subr.mxu0 0.0
    %2144 = vmatpush1.xpose.msra.mxu0 0.0
    %2145 = vmatprep.subr.mxu0 0.0
    %2146 = vmatpush1.xpose.msra.mxu0 0.0
    %2147 = vmatprep.subr.mxu0 0.0
    %2148 = vmatpush1.xpose.msra.mxu0 0.0
    %2149 = vmatprep.subr.mxu0 0.0
    %2150 = vmatpush1.xpose.msra.mxu0 0.0
    %2151 = vmatprep.subr.mxu0 0.0
    %2152 = vmatpush1.xpose.msra.mxu0 0.0
    %2153 = vmatprep.mubr.f32.mxu0 0.0
    %2154 = vmatmul.mubr.f32.gmra.mrb[0].mxu0 %v2085
    %v2155 = vpop.f32.mrb[0].mxu0
    %v2156 = vadd.f32 0.0, %v2155
    %v2157 = vpop.f32.mrb[0].mxu0
    %2158 = vdwg.mxu0
    %2159 = vrot.lane.b32.xlu0 %v474, 112
    %v2160 = vpop.permute.xlu0 %2159
    %2161 = vrot.lane.b32.xlu0 %v359, 112
    %v2162 = vpop.permute.xlu0 %2161
    %v2163 = vsel %vm480, %v2160, 0
    %v2165 = vsel %vm480, %v2162, 0
    %2167 = vmatprep.subr.mxu0 0.0
    %2168 = vmatpush1.xpose.msra.mxu0 %v2165
    %2169 = vmatprep.subr.mxu0 0.0
    %2170 = vmatpush1.xpose.msra.mxu0 0.0
    %2171 = vmatprep.subr.mxu0 0.0
    %2172 = vmatpush1.xpose.msra.mxu0 0.0
    %2173 = vmatprep.subr.mxu0 0.0
    %2174 = vmatpush1.xpose.msra.mxu0 0.0
    %2175 = vmatprep.subr.mxu0 0.0
    %2176 = vmatpush1.xpose.msra.mxu0 0.0
    %2177 = vmatprep.subr.mxu0 0.0
    %2178 = vmatpush1.xpose.msra.mxu0 0.0
    %2179 = vmatprep.subr.mxu0 0.0
    %2180 = vmatpush1.xpose.msra.mxu0 0.0
    %2181 = vmatprep.subr.mxu0 0.0
    %2182 = vmatpush1.xpose.msra.mxu0 0.0
    %2183 = vmatprep.subr.mxu0 0.0
    %2184 = vmatpush1.xpose.msra.mxu0 0.0
    %2185 = vmatprep.subr.mxu0 0.0
    %2186 = vmatpush1.xpose.msra.mxu0 0.0
    %2187 = vmatprep.subr.mxu0 0.0
    %2188 = vmatpush1.xpose.msra.mxu0 0.0
    %2189 = vmatprep.subr.mxu0 0.0
    %2190 = vmatpush1.xpose.msra.mxu0 0.0
    %2191 = vmatprep.subr.mxu0 0.0
    %2192 = vmatpush1.xpose.msra.mxu0 0.0
    %2193 = vmatprep.subr.mxu0 0.0
    %2194 = vmatpush1.xpose.msra.mxu0 0.0
    %2195 = vmatprep.subr.mxu0 0.0
    %2196 = vmatpush1.xpose.msra.mxu0 0.0
    %2197 = vmatprep.subr.mxu0 0.0
    %2198 = vmatpush1.xpose.msra.mxu0 0.0
    %2199 = vmatprep.subr.mxu0 0.0
    %2200 = vmatpush1.xpose.msra.mxu0 0.0
    %2201 = vmatprep.subr.mxu0 0.0
    %2202 = vmatpush1.xpose.msra.mxu0 0.0
    %2203 = vmatprep.subr.mxu0 0.0
    %2204 = vmatpush1.xpose.msra.mxu0 0.0
    %2205 = vmatprep.subr.mxu0 0.0
    %2206 = vmatpush1.xpose.msra.mxu0 0.0
    %2207 = vmatprep.subr.mxu0 0.0
    %2208 = vmatpush1.xpose.msra.mxu0 0.0
    %2209 = vmatprep.subr.mxu0 0.0
    %2210 = vmatpush1.xpose.msra.mxu0 0.0
    %2211 = vmatprep.subr.mxu0 0.0
    %2212 = vmatpush1.xpose.msra.mxu0 0.0
    %2213 = vmatprep.subr.mxu0 0.0
    %2214 = vmatpush1.xpose.msra.mxu0 0.0
    %2215 = vmatprep.subr.mxu0 0.0
    %2216 = vmatpush1.xpose.msra.mxu0 0.0
    %2217 = vmatprep.subr.mxu0 0.0
    %2218 = vmatpush1.xpose.msra.mxu0 0.0
    %2219 = vmatprep.subr.mxu0 0.0
    %2220 = vmatpush1.xpose.msra.mxu0 0.0
    %2221 = vmatprep.subr.mxu0 0.0
    %2222 = vmatpush1.xpose.msra.mxu0 0.0
    %2223 = vmatprep.subr.mxu0 0.0
    %2224 = vmatpush1.xpose.msra.mxu0 0.0
    %2225 = vmatprep.subr.mxu0 0.0
    %2226 = vmatpush1.xpose.msra.mxu0 0.0
    %2227 = vmatprep.subr.mxu0 0.0
    %2228 = vmatpush1.xpose.msra.mxu0 0.0
    %2229 = vmatprep.subr.mxu0 0.0
    %2230 = vmatpush1.xpose.msra.mxu0 0.0
    %2231 = vmatprep.mubr.f32.mxu0 0.0
    %2232 = vmatmul.mubr.f32.gmra.mrb[0].mxu0 %v2163
    %v2233 = vpop.f32.mrb[0].mxu0
    %v2234 = vadd.f32 0.0, %v2233
    %v2235 = vpop.f32.mrb[0].mxu0
    %2236 = vdwg.mxu0
    %2237 = vrot.lane.b32.xlu0 %v475, 112
    %v2238 = vpop.permute.xlu0 %2237
    %2239 = vrot.lane.b32.xlu0 %v364, 112
    %v2240 = vpop.permute.xlu0 %2239
    %v2241 = vsel %vm480, %v2238, 0
    %v2243 = vsel %vm480, %v2240, 0
    %2245 = vmatprep.subr.mxu0 0.0
    %2246 = vmatpush1.xpose.msra.mxu0 %v2243
    %2247 = vmatprep.subr.mxu0 0.0
    %2248 = vmatpush1.xpose.msra.mxu0 0.0
    %2249 = vmatprep.subr.mxu0 0.0
    %2250 = vmatpush1.xpose.msra.mxu0 0.0
    %2251 = vmatprep.subr.mxu0 0.0
    %2252 = vmatpush1.xpose.msra.mxu0 0.0
    %2253 = vmatprep.subr.mxu0 0.0
    %2254 = vmatpush1.xpose.msra.mxu0 0.0
    %2255 = vmatprep.subr.mxu0 0.0
    %2256 = vmatpush1.xpose.msra.mxu0 0.0
    %2257 = vmatprep.subr.mxu0 0.0
    %2258 = vmatpush1.xpose.msra.mxu0 0.0
    %2259 = vmatprep.subr.mxu0 0.0
    %2260 = vmatpush1.xpose.msra.mxu0 0.0
    %2261 = vmatprep.subr.mxu0 0.0
    %2262 = vmatpush1.xpose.msra.mxu0 0.0
    %2263 = vmatprep.subr.mxu0 0.0
    %2264 = vmatpush1.xpose.msra.mxu0 0.0
    %2265 = vmatprep.subr.mxu0 0.0
    %2266 = vmatpush1.xpose.msra.mxu0 0.0
    %2267 = vmatprep.subr.mxu0 0.0
    %2268 = vmatpush1.xpose.msra.mxu0 0.0
    %2269 = vmatprep.subr.mxu0 0.0
    %2270 = vmatpush1.xpose.msra.mxu0 0.0
    %2271 = vmatprep.subr.mxu0 0.0
    %2272 = vmatpush1.xpose.msra.mxu0 0.0
    %2273 = vmatprep.subr.mxu0 0.0
    %2274 = vmatpush1.xpose.msra.mxu0 0.0
    %2275 = vmatprep.subr.mxu0 0.0
    %2276 = vmatpush1.xpose.msra.mxu0 0.0
    %2277 = vmatprep.subr.mxu0 0.0
    %2278 = vmatpush1.xpose.msra.mxu0 0.0
    %2279 = vmatprep.subr.mxu0 0.0
    %2280 = vmatpush1.xpose.msra.mxu0 0.0
    %2281 = vmatprep.subr.mxu0 0.0
    %2282 = vmatpush1.xpose.msra.mxu0 0.0
    %2283 = vmatprep.subr.mxu0 0.0
    %2284 = vmatpush1.xpose.msra.mxu0 0.0
    %2285 = vmatprep.subr.mxu0 0.0
    %2286 = vmatpush1.xpose.msra.mxu0 0.0
    %2287 = vmatprep.subr.mxu0 0.0
    %2288 = vmatpush1.xpose.msra.mxu0 0.0
    %2289 = vmatprep.subr.mxu0 0.0
    %2290 = vmatpush1.xpose.msra.mxu0 0.0
    %2291 = vmatprep.subr.mxu0 0.0
    %2292 = vmatpush1.xpose.msra.mxu0 0.0
    %2293 = vmatprep.subr.mxu0 0.0
    %2294 = vmatpush1.xpose.msra.mxu0 0.0
    %2295 = vmatprep.subr.mxu0 0.0
    %2296 = vmatpush1.xpose.msra.mxu0 0.0
    %2297 = vmatprep.subr.mxu0 0.0
    %2298 = vmatpush1.xpose.msra.mxu0 0.0
    %2299 = vmatprep.subr.mxu0 0.0
    %2300 = vmatpush1.xpose.msra.mxu0 0.0
    %2301 = vmatprep.subr.mxu0 0.0
    %2302 = vmatpush1.xpose.msra.mxu0 0.0
    %2303 = vmatprep.subr.mxu0 0.0
    %2304 = vmatpush1.xpose.msra.mxu0 0.0
    %2305 = vmatprep.subr.mxu0 0.0
    %2306 = vmatpush1.xpose.msra.mxu0 0.0
    %2307 = vmatprep.subr.mxu0 0.0
    %2308 = vmatpush1.xpose.msra.mxu0 0.0
    %2309 = vmatprep.mubr.f32.mxu0 0.0
    %2310 = vmatmul.mubr.f32.gmra.mrb[0].mxu0 %v2241
    %v2311 = vpop.f32.mrb[0].mxu0
    %v2312 = vadd.f32 0.0, %v2311
    %v2313 = vpop.f32.mrb[0].mxu0
    %2314 = vdwg.mxu0
    %v2315 = vsel %vm480, %v2078, -inf
    %2316 = vmax.xlane.f32.xlu0 %v2315
    %v2317 = vpop.xlane.xlu0 %2316
    %v2318 = vsel %vm480, %v2156, -inf
    %2319 = vmax.xlane.f32.xlu0 %v2318
    %v2320 = vpop.xlane.xlu0 %2319
    %v2321 = vsel %vm480, %v2234, -inf
    %2322 = vmax.xlane.f32.xlu0 %v2321
    %v2323 = vpop.xlane.xlu0 %2322
    %v2324 = vsel %vm480, %v2312, -inf
    %2325 = vmax.xlane.f32.xlu0 %v2324
    %v2326 = vpop.xlane.xlu0 %2325
    %v2327 = vsub.f32 %v2078, %v2317
    %v2328 = vsub.f32 %v2156, %v2320
    %v2329 = vsub.f32 %v2234, %v2323
    %v2330 = vsub.f32 %v2312, %v2326
    %v2331 = vmul.f32 %v2327, 1.442695
    %v2332 = vpow.pop %v2331
    %v2333 = vmul.f32 %v2328, 1.442695
    %v2334 = vpow.pop %v2333
    %v2335 = vmul.f32 %v2329, 1.442695
    %v2336 = vpow.pop %v2335
    %v2337 = vmul.f32 %v2330, 1.442695
    %v2338 = vpow.pop %v2337
    %v2339 = vsel %vm480, %v2332, 0.0
    %2340 = vadd.xlane.f32.xlu0 %v2339
    %v2341 = vpop.xlane.xlu0 %2340
    %v2342 = vsel %vm480, %v2334, 0.0
    %2343 = vadd.xlane.f32.xlu0 %v2342
    %v2344 = vpop.xlane.xlu0 %2343
    %v2345 = vsel %vm480, %v2336, 0.0
    %2346 = vadd.xlane.f32.xlu0 %v2345
    %v2347 = vpop.xlane.xlu0 %2346
    %v2348 = vsel %vm480, %v2338, 0.0
    %2349 = vadd.xlane.f32.xlu0 %v2348
    %v2350 = vpop.xlane.xlu0 %2349
    %v2351 = vrcp.pop %v2341
    %v2352 = vrcp.pop %v2344
    %v2353 = vrcp.pop %v2347
    %v2354 = vrcp.pop %v2350
    %v2355 = vmul.f32 %v2341, %v2351
    %v2356 = vmul.f32 %v2344, %v2352
    %v2357 = vmul.f32 %v2347, %v2353
    %v2358 = vmul.f32 %v2350, %v2354
    %v2359 = vsub.f32 2.0, %v2355
    %v2360 = vsub.f32 2.0, %v2356
    %v2361 = vsub.f32 2.0, %v2357
    %v2362 = vsub.f32 2.0, %v2358
    %v2363 = vmul.f32 %v2351, %v2359
    %v2364 = vmul.f32 %v2352, %v2360
    %v2365 = vmul.f32 %v2353, %v2361
    %v2366 = vmul.f32 %v2354, %v2362
    %v2367 = vmul.f32 %v2332, %v2363
    %v2368 = vmul.f32 %v2334, %v2364
    %v2369 = vmul.f32 %v2336, %v2365
    %v2370 = vmul.f32 %v2338, %v2366
    %2371 = vrot.lane.b32.xlu0 %v454, 112
    %v2372 = vpop.permute.xlu0 %2371
    %v2375 = vsel %vm480, %v2367, 0
    %2377 = vmatprep.subr.mxu0 0.0
    %2378 = vmatpush1.msra.mxu0 %v2372
    %2379 = vmatprep.subr.mxu0 0.0
    %2380 = vmatpush1.msra.mxu0 0.0
    %2381 = vmatprep.subr.mxu0 0.0
    %2382 = vmatpush1.msra.mxu0 0.0
    %2383 = vmatprep.subr.mxu0 0.0
    %2384 = vmatpush1.msra.mxu0 0.0
    %2385 = vmatprep.subr.mxu0 0.0
    %2386 = vmatpush1.msra.mxu0 0.0
    %2387 = vmatprep.subr.mxu0 0.0
    %2388 = vmatpush1.msra.mxu0 0.0
    %2389 = vmatprep.subr.mxu0 0.0
    %2390 = vmatpush1.msra.mxu0 0.0
    %2391 = vmatprep.subr.mxu0 0.0
    %2392 = vmatpush1.msra.mxu0 0.0
    %2393 = vmatprep.subr.mxu0 0.0
    %2394 = vmatpush1.msra.mxu0 0.0
    %2395 = vmatprep.subr.mxu0 0.0
    %2396 = vmatpush1.msra.mxu0 0.0
    %2397 = vmatprep.subr.mxu0 0.0
    %2398 = vmatpush1.msra.mxu0 0.0
    %2399 = vmatprep.subr.mxu0 0.0
    %2400 = vmatpush1.msra.mxu0 0.0
    %2401 = vmatprep.subr.mxu0 0.0
    %2402 = vmatpush1.msra.mxu0 0.0
    %2403 = vmatprep.subr.mxu0 0.0
    %2404 = vmatpush1.msra.mxu0 0.0
    %2405 = vmatprep.subr.mxu0 0.0
    %2406 = vmatpush1.msra.mxu0 0.0
    %2407 = vmatprep.subr.mxu0 0.0
    %2408 = vmatpush1.msra.mxu0 0.0
    %2409 = vmatprep.subr.mxu0 0.0
    %2410 = vmatpush1.msra.mxu0 0.0
    %2411 = vmatprep.subr.mxu0 0.0
    %2412 = vmatpush1.msra.mxu0 0.0
    %2413 = vmatprep.subr.mxu0 0.0
    %2414 = vmatpush1.msra.mxu0 0.0
    %2415 = vmatprep.subr.mxu0 0.0
    %2416 = vmatpush1.msra.mxu0 0.0
    %2417 = vmatprep.subr.mxu0 0.0
    %2418 = vmatpush1.msra.mxu0 0.0
    %2419 = vmatprep.subr.mxu0 0.0
    %2420 = vmatpush1.msra.mxu0 0.0
    %2421 = vmatprep.subr.mxu0 0.0
    %2422 = vmatpush1.msra.mxu0 0.0
    %2423 = vmatprep.subr.mxu0 0.0
    %2424 = vmatpush1.msra.mxu0 0.0
    %2425 = vmatprep.subr.mxu0 0.0
    %2426 = vmatpush1.msra.mxu0 0.0
    %2427 = vmatprep.subr.mxu0 0.0
    %2428 = vmatpush1.msra.mxu0 0.0
    %2429 = vmatprep.subr.mxu0 0.0
    %2430 = vmatpush1.msra.mxu0 0.0
    %2431 = vmatprep.subr.mxu0 0.0
    %2432 = vmatpush1.msra.mxu0 0.0
    %2433 = vmatprep.subr.mxu0 0.0
    %2434 = vmatpush1.msra.mxu0 0.0
    %2435 = vmatprep.subr.mxu0 0.0
    %2436 = vmatpush1.msra.mxu0 0.0
    %2437 = vmatprep.subr.mxu0 0.0
    %2438 = vmatpush1.msra.mxu0 0.0
    %2439 = vmatprep.subr.mxu0 0.0
    %2440 = vmatpush1.msra.mxu0 0.0
    %2441 = vmatprep.mubr.f32.mxu0 0.0
    %2442 = vmatmul.mubr.f32.gmra.mrb[0].mxu0 %v2375
    %v2443 = vpop.f32.mrb[0].mxu0
    %v2444 = vadd.f32 0.0, %v2443
    %v2445 = vpop.f32.mrb[0].mxu0
    %2446 = vdwg.mxu0
    %2447 = vrot.lane.b32.xlu0 %v459, 112
    %v2448 = vpop.permute.xlu0 %2447
    %v2451 = vsel %vm480, %v2368, 0
    %2453 = vmatprep.subr.mxu0 0.0
    %2454 = vmatpush1.msra.mxu0 %v2448
    %2455 = vmatprep.subr.mxu0 0.0
    %2456 = vmatpush1.msra.mxu0 0.0
    %2457 = vmatprep.subr.mxu0 0.0
    %2458 = vmatpush1.msra.mxu0 0.0
    %2459 = vmatprep.subr.mxu0 0.0
    %2460 = vmatpush1.msra.mxu0 0.0
    %2461 = vmatprep.subr.mxu0 0.0
    %2462 = vmatpush1.msra.mxu0 0.0
    %2463 = vmatprep.subr.mxu0 0.0
    %2464 = vmatpush1.msra.mxu0 0.0
    %2465 = vmatprep.subr.mxu0 0.0
    %2466 = vmatpush1.msra.mxu0 0.0
    %2467 = vmatprep.subr.mxu0 0.0
    %2468 = vmatpush1.msra.mxu0 0.0
    %2469 = vmatprep.subr.mxu0 0.0
    %2470 = vmatpush1.msra.mxu0 0.0
    %2471 = vmatprep.subr.mxu0 0.0
    %2472 = vmatpush1.msra.mxu0 0.0
    %2473 = vmatprep.subr.mxu0 0.0
    %2474 = vmatpush1.msra.mxu0 0.0
    %2475 = vmatprep.subr.mxu0 0.0
    %2476 = vmatpush1.msra.mxu0 0.0
    %2477 = vmatprep.subr.mxu0 0.0
    %2478 = vmatpush1.msra.mxu0 0.0
    %2479 = vmatprep.subr.mxu0 0.0
    %2480 = vmatpush1.msra.mxu0 0.0
    %2481 = vmatprep.subr.mxu0 0.0
    %2482 = vmatpush1.msra.mxu0 0.0
    %2483 = vmatprep.subr.mxu0 0.0
    %2484 = vmatpush1.msra.mxu0 0.0
    %2485 = vmatprep.subr.mxu0 0.0
    %2486 = vmatpush1.msra.mxu0 0.0
    %2487 = vmatprep.subr.mxu0 0.0
    %2488 = vmatpush1.msra.mxu0 0.0
    %2489 = vmatprep.subr.mxu0 0.0
    %2490 = vmatpush1.msra.mxu0 0.0
    %2491 = vmatprep.subr.mxu0 0.0
    %2492 = vmatpush1.msra.mxu0 0.0
    %2493 = vmatprep.subr.mxu0 0.0
    %2494 = vmatpush1.msra.mxu0 0.0
    %2495 = vmatprep.subr.mxu0 0.0
    %2496 = vmatpush1.msra.mxu0 0.0
    %2497 = vmatprep.subr.mxu0 0.0
    %2498 = vmatpush1.msra.mxu0 0.0
    %2499 = vmatprep.subr.mxu0 0.0
    %2500 = vmatpush1.msra.mxu0 0.0
    %2501 = vmatprep.subr.mxu0 0.0
    %2502 = vmatpush1.msra.mxu0 0.0
    %2503 = vmatprep.subr.mxu0 0.0
    %2504 = vmatpush1.msra.mxu0 0.0
    %2505 = vmatprep.subr.mxu0 0.0
    %2506 = vmatpush1.msra.mxu0 0.0
    %2507 = vmatprep.subr.mxu0 0.0
    %2508 = vmatpush1.msra.mxu0 0.0
    %2509 = vmatprep.subr.mxu0 0.0
    %2510 = vmatpush1.msra.mxu0 0.0
    %2511 = vmatprep.subr.mxu0 0.0
    %2512 = vmatpush1.msra.mxu0 0.0
    %2513 = vmatprep.subr.mxu0 0.0
    %2514 = vmatpush1.msra.mxu0 0.0
    %2515 = vmatprep.subr.mxu0 0.0
    %2516 = vmatpush1.msra.mxu0 0.0
    %2517 = vmatprep.mubr.f32.mxu0 0.0
    %2518 = vmatmul.mubr.f32.gmra.mrb[0].mxu0 %v2451
    %v2519 = vpop.f32.mrb[0].mxu0
    %v2520 = vadd.f32 0.0, %v2519
    %v2521 = vpop.f32.mrb[0].mxu0
    %2522 = vdwg.mxu0
    %2523 = vrot.lane.b32.xlu0 %v464, 112
    %v2524 = vpop.permute.xlu0 %2523
    %v2527 = vsel %vm480, %v2369, 0
    %2529 = vmatprep.subr.mxu0 0.0
    %2530 = vmatpush1.msra.mxu0 %v2524
    %2531 = vmatprep.subr.mxu0 0.0
    %2532 = vmatpush1.msra.mxu0 0.0
    %2533 = vmatprep.subr.mxu0 0.0
    %2534 = vmatpush1.msra.mxu0 0.0
    %2535 = vmatprep.subr.mxu0 0.0
    %2536 = vmatpush1.msra.mxu0 0.0
    %2537 = vmatprep.subr.mxu0 0.0
    %2538 = vmatpush1.msra.mxu0 0.0
    %2539 = vmatprep.subr.mxu0 0.0
    %2540 = vmatpush1.msra.mxu0 0.0
    %2541 = vmatprep.subr.mxu0 0.0
    %2542 = vmatpush1.msra.mxu0 0.0
    %2543 = vmatprep.subr.mxu0 0.0
    %2544 = vmatpush1.msra.mxu0 0.0
    %2545 = vmatprep.subr.mxu0 0.0
    %2546 = vmatpush1.msra.mxu0 0.0
    %2547 = vmatprep.subr.mxu0 0.0
    %2548 = vmatpush1.msra.mxu0 0.0
    %2549 = vmatprep.subr.mxu0 0.0
    %2550 = vmatpush1.msra.mxu0 0.0
    %2551 = vmatprep.subr.mxu0 0.0
    %2552 = vmatpush1.msra.mxu0 0.0
    %2553 = vmatprep.subr.mxu0 0.0
    %2554 = vmatpush1.msra.mxu0 0.0
    %2555 = vmatprep.subr.mxu0 0.0
    %2556 = vmatpush1.msra.mxu0 0.0
    %2557 = vmatprep.subr.mxu0 0.0
    %2558 = vmatpush1.msra.mxu0 0.0
    %2559 = vmatprep.subr.mxu0 0.0
    %2560 = vmatpush1.msra.mxu0 0.0
    %2561 = vmatprep.subr.mxu0 0.0
    %2562 = vmatpush1.msra.mxu0 0.0
    %2563 = vmatprep.subr.mxu0 0.0
    %2564 = vmatpush1.msra.mxu0 0.0
    %2565 = vmatprep.subr.mxu0 0.0
    %2566 = vmatpush1.msra.mxu0 0.0
    %2567 = vmatprep.subr.mxu0 0.0
    %2568 = vmatpush1.msra.mxu0 0.0
    %2569 = vmatprep.subr.mxu0 0.0
    %2570 = vmatpush1.msra.mxu0 0.0
    %2571 = vmatprep.subr.mxu0 0.0
    %2572 = vmatpush1.msra.mxu0 0.0
    %2573 = vmatprep.subr.mxu0 0.0
    %2574 = vmatpush1.msra.mxu0 0.0
    %2575 = vmatprep.subr.mxu0 0.0
    %2576 = vmatpush1.msra.mxu0 0.0
    %2577 = vmatprep.subr.mxu0 0.0
    %2578 = vmatpush1.msra.mxu0 0.0
    %2579 = vmatprep.subr.mxu0 0.0
    %2580 = vmatpush1.msra.mxu0 0.0
    %2581 = vmatprep.subr.mxu0 0.0
    %2582 = vmatpush1.msra.mxu0 0.0
    %2583 = vmatprep.subr.mxu0 0.0
    %2584 = vmatpush1.msra.mxu0 0.0
    %2585 = vmatprep.subr.mxu0 0.0
    %2586 = vmatpush1.msra.mxu0 0.0
    %2587 = vmatprep.subr.mxu0 0.0
    %2588 = vmatpush1.msra.mxu0 0.0
    %2589 = vmatprep.subr.mxu0 0.0
    %2590 = vmatpush1.msra.mxu0 0.0
    %2591 = vmatprep.subr.mxu0 0.0
    %2592 = vmatpush1.msra.mxu0 0.0
    %2593 = vmatprep.mubr.f32.mxu0 0.0
    %2594 = vmatmul.mubr.f32.gmra.mrb[0].mxu0 %v2527
    %v2595 = vpop.f32.mrb[0].mxu0
    %v2596 = vadd.f32 0.0, %v2595
    %v2597 = vpop.f32.mrb[0].mxu0
    %2598 = vdwg.mxu0
    %2599 = vrot.lane.b32.xlu0 %v469, 112
    %v2600 = vpop.permute.xlu0 %2599
    %v2603 = vsel %vm480, %v2370, 0
    %2605 = vmatprep.subr.mxu0 0.0
    %2606 = vmatpush1.msra.mxu0 %v2600
    %2607 = vmatprep.subr.mxu0 0.0
    %2608 = vmatpush1.msra.mxu0 0.0
    %2609 = vmatprep.subr.mxu0 0.0
    %2610 = vmatpush1.msra.mxu0 0.0
    %2611 = vmatprep.subr.mxu0 0.0
    %2612 = vmatpush1.msra.mxu0 0.0
    %2613 = vmatprep.subr.mxu0 0.0
    %2614 = vmatpush1.msra.mxu0 0.0
    %2615 = vmatprep.subr.mxu0 0.0
    %2616 = vmatpush1.msra.mxu0 0.0
    %2617 = vmatprep.subr.mxu0 0.0
    %2618 = vmatpush1.msra.mxu0 0.0
    %2619 = vmatprep.subr.mxu0 0.0
    %2620 = vmatpush1.msra.mxu0 0.0
    %2621 = vmatprep.subr.mxu0 0.0
    %2622 = vmatpush1.msra.mxu0 0.0
    %2623 = vmatprep.subr.mxu0 0.0
    %2624 = vmatpush1.msra.mxu0 0.0
    %2625 = vmatprep.subr.mxu0 0.0
    %2626 = vmatpush1.msra.mxu0 0.0
    %2627 = vmatprep.subr.mxu0 0.0
    %2628 = vmatpush1.msra.mxu0 0.0
    %2629 = vmatprep.subr.mxu0 0.0
    %2630 = vmatpush1.msra.mxu0 0.0
    %2631 = vmatprep.subr.mxu0 0.0
    %2632 = vmatpush1.msra.mxu0 0.0
    %2633 = vmatprep.subr.mxu0 0.0
    %2634 = vmatpush1.msra.mxu0 0.0
    %2635 = vmatprep.subr.mxu0 0.0
    %2636 = vmatpush1.msra.mxu0 0.0
    %2637 = vmatprep.subr.mxu0 0.0
    %2638 = vmatpush1.msra.mxu0 0.0
    %2639 = vmatprep.subr.mxu0 0.0
    %2640 = vmatpush1.msra.mxu0 0.0
    %2641 = vmatprep.subr.mxu0 0.0
    %2642 = vmatpush1.msra.mxu0 0.0
    %2643 = vmatprep.subr.mxu0 0.0
    %2644 = vmatpush1.msra.mxu0 0.0
    %2645 = vmatprep.subr.mxu0 0.0
    %2646 = vmatpush1.msra.mxu0 0.0
    %2647 = vmatprep.subr.mxu0 0.0
    %2648 = vmatpush1.msra.mxu0 0.0
    %2649 = vmatprep.subr.mxu0 0.0
    %2650 = vmatpush1.msra.mxu0 0.0
    %2651 = vmatprep.subr.mxu0 0.0
    %2652 = vmatpush1.msra.mxu0 0.0
    %2653 = vmatprep.subr.mxu0 0.0
    %2654 = vmatpush1.msra.mxu0 0.0
    %2655 = vmatprep.subr.mxu0 0.0
    %2656 = vmatpush1.msra.mxu0 0.0
    %2657 = vmatprep.subr.mxu0 0.0
    %2658 = vmatpush1.msra.mxu0 0.0
    %2659 = vmatprep.subr.mxu0 0.0
    %2660 = vmatpush1.msra.mxu0 0.0
    %2661 = vmatprep.subr.mxu0 0.0
    %2662 = vmatpush1.msra.mxu0 0.0
    %2663 = vmatprep.subr.mxu0 0.0
    %2664 = vmatpush1.msra.mxu0 0.0
    %2665 = vmatprep.subr.mxu0 0.0
    %2666 = vmatpush1.msra.mxu0 0.0
    %2667 = vmatprep.subr.mxu0 0.0
    %2668 = vmatpush1.msra.mxu0 0.0
    %2669 = vmatprep.mubr.f32.mxu0 0.0
    %2670 = vmatmul.mubr.f32.gmra.mrb[0].mxu0 %v2603
    %v2671 = vpop.f32.mrb[0].mxu0
    %v2672 = vadd.f32 0.0, %v2671
    %v2673 = vpop.f32.mrb[0].mxu0
    %2674 = vdwg.mxu0
    %v2676 = vsel %vm480, %v2444, 0
    %v2679 = vsel %vm480, %v2520, 0
    %v2682 = vsel %vm480, %v2596, 0
    %v2685 = vsel %vm480, %v2672, 0
    %2687 = vmatprep.subr.mxu0 0.0
    %2688 = vmatpush1.msra.mxu0 %v478
    %2689 = vmatprep.subr.mxu0 0.0
    %2690 = vmatpush1.msra.mxu0 0.0
    %2691 = vmatprep.subr.mxu0 0.0
    %2692 = vmatpush1.msra.mxu0 0.0
    %2693 = vmatprep.subr.mxu0 0.0
    %2694 = vmatpush1.msra.mxu0 0.0
    %2695 = vmatprep.subr.mxu0 0.0
    %2696 = vmatpush1.msra.mxu0 0.0
    %2697 = vmatprep.subr.mxu0 0.0
    %2698 = vmatpush1.msra.mxu0 0.0
    %2699 = vmatprep.subr.mxu0 0.0
    %2700 = vmatpush1.msra.mxu0 0.0
    %2701 = vmatprep.subr.mxu0 0.0
    %2702 = vmatpush1.msra.mxu0 0.0
    %2703 = vmatprep.subr.mxu0 0.0
    %2704 = vmatpush1.msra.mxu0 0.0
    %2705 = vmatprep.subr.mxu0 0.0
    %2706 = vmatpush1.msra.mxu0 0.0
    %2707 = vmatprep.subr.mxu0 0.0
    %2708 = vmatpush1.msra.mxu0 0.0
    %2709 = vmatprep.subr.mxu0 0.0
    %2710 = vmatpush1.msra.mxu0 0.0
    %2711 = vmatprep.subr.mxu0 0.0
    %2712 = vmatpush1.msra.mxu0 0.0
    %2713 = vmatprep.subr.mxu0 0.0
    %2714 = vmatpush1.msra.mxu0 0.0
    %2715 = vmatprep.subr.mxu0 0.0
    %2716 = vmatpush1.msra.mxu0 0.0
    %2717 = vmatprep.subr.mxu0 0.0
    %2718 = vmatpush1.msra.mxu0 0.0
    %2719 = vmatprep.subr.mxu0 0.0
    %2720 = vmatpush1.msra.mxu0 0.0
    %2721 = vmatprep.subr.mxu0 0.0
    %2722 = vmatpush1.msra.mxu0 0.0
    %2723 = vmatprep.subr.mxu0 0.0
    %2724 = vmatpush1.msra.mxu0 0.0
    %2725 = vmatprep.subr.mxu0 0.0
    %2726 = vmatpush1.msra.mxu0 0.0
    %2727 = vmatprep.subr.mxu0 0.0
    %2728 = vmatpush1.msra.mxu0 0.0
    %2729 = vmatprep.subr.mxu0 0.0
    %2730 = vmatpush1.msra.mxu0 0.0
    %2731 = vmatprep.subr.mxu0 0.0
    %2732 = vmatpush1.msra.mxu0 0.0
    %2733 = vmatprep.subr.mxu0 0.0
    %2734 = vmatpush1.msra.mxu0 0.0
    %2735 = vmatprep.subr.mxu0 0.0
    %2736 = vmatpush1.msra.mxu0 0.0
    %2737 = vmatprep.subr.mxu0 0.0
    %2738 = vmatpush1.msra.mxu0 0.0
    %2739 = vmatprep.subr.mxu0 0.0
    %2740 = vmatpush1.msra.mxu0 0.0
    %2741 = vmatprep.subr.mxu0 0.0
    %2742 = vmatpush1.msra.mxu0 0.0
    %2743 = vmatprep.subr.mxu0 0.0
    %2744 = vmatpush1.msra.mxu0 0.0
    %2745 = vmatprep.subr.mxu0 0.0
    %2746 = vmatpush1.msra.mxu0 0.0
    %2747 = vmatprep.subr.mxu0 0.0
    %2748 = vmatpush1.msra.mxu0 0.0
    %2749 = vmatprep.subr.mxu0 0.0
    %2750 = vmatpush1.msra.mxu0 0.0
    %2751 = vmatprep.mubr.f32.mxu0 0.0
    %2752 = vmatmul.mubr.f32.gmra.mrb[0].mxu0 %v2676
    %v2753 = vpop.f32.mrb[0].mxu0
    %v2754 = vadd.f32 0.0, %v2753
    %v2755 = vpop.f32.mrb[0].mxu0
    %2756 = vmatprep.mubr.f32.mxu0 0.0
    %2757 = vmatmul.mubr.f32.gmra.mrb[0].mxu0 %v2679
    %v2758 = vpop.f32.mrb[0].mxu0
    %v2759 = vadd.f32 0.0, %v2758
    %v2760 = vpop.f32.mrb[0].mxu0
    %2761 = vmatprep.mubr.f32.mxu0 0.0
    %2762 = vmatmul.mubr.f32.gmra.mrb[0].mxu0 %v2682
    %v2763 = vpop.f32.mrb[0].mxu0
    %v2764 = vadd.f32 0.0, %v2763
    %v2765 = vpop.f32.mrb[0].mxu0
    %2766 = vmatprep.mubr.f32.mxu0 0.0
    %2767 = vmatmul.mubr.f32.gmra.mrb[0].mxu0 %v2685
    %v2768 = vpop.f32.mrb[0].mxu0
    %v2769 = vadd.f32 0.0, %v2768
    %v2770 = vpop.f32.mrb[0].mxu0
    %2771 = vdwg.mxu0
    %v2772 = vadd.f32 %v1985, %v2754
    %v2773 = vadd.f32 %v1990, %v2759
    %v2774 = vadd.f32 %v1995, %v2764
    %v2775 = vadd.f32 %v2000, %v2769
    %2776 = vrot.lane.b32.xlu0 %v472, 104
    %v2777 = vpop.permute.xlu0 %2776
    %2778 = vrot.lane.b32.xlu0 %v349, 104
    %v2779 = vpop.permute.xlu0 %2778
    %v2780 = vsel %vm480, %v2777, 0
    %v2782 = vsel %vm480, %v2779, 0
    %2784 = vmatprep.subr.mxu0 0.0
    %2785 = vmatpush1.xpose.msra.mxu0 %v2782
    %2786 = vmatprep.subr.mxu0 0.0
    %2787 = vmatpush1.xpose.msra.mxu0 0.0
    %2788 = vmatprep.subr.mxu0 0.0
    %2789 = vmatpush1.xpose.msra.mxu0 0.0
    %2790 = vmatprep.subr.mxu0 0.0
    %2791 = vmatpush1.xpose.msra.mxu0 0.0
    %2792 = vmatprep.subr.mxu0 0.0
    %2793 = vmatpush1.xpose.msra.mxu0 0.0
    %2794 = vmatprep.subr.mxu0 0.0
    %2795 = vmatpush1.xpose.msra.mxu0 0.0
    %2796 = vmatprep.subr.mxu0 0.0
    %2797 = vmatpush1.xpose.msra.mxu0 0.0
    %2798 = vmatprep.subr.mxu0 0.0
    %2799 = vmatpush1.xpose.msra.mxu0 0.0
    %2800 = vmatprep.subr.mxu0 0.0
    %2801 = vmatpush1.xpose.msra.mxu0 0.0
    %2802 = vmatprep.subr.mxu0 0.0
    %2803 = vmatpush1.xpose.msra.mxu0 0.0
    %2804 = vmatprep.subr.mxu0 0.0
    %2805 = vmatpush1.xpose.msra.mxu0 0.0
    %2806 = vmatprep.subr.mxu0 0.0
    %2807 = vmatpush1.xpose.msra.mxu0 0.0
    %2808 = vmatprep.subr.mxu0 0.0
    %2809 = vmatpush1.xpose.msra.mxu0 0.0
    %2810 = vmatprep.subr.mxu0 0.0
    %2811 = vmatpush1.xpose.msra.mxu0 0.0
    %2812 = vmatprep.subr.mxu0 0.0
    %2813 = vmatpush1.xpose.msra.mxu0 0.0
    %2814 = vmatprep.subr.mxu0 0.0
    %2815 = vmatpush1.xpose.msra.mxu0 0.0
    %2816 = vmatprep.subr.mxu0 0.0
    %2817 = vmatpush1.xpose.msra.mxu0 0.0
    %2818 = vmatprep.subr.mxu0 0.0
    %2819 = vmatpush1.xpose.msra.mxu0 0.0
    %2820 = vmatprep.subr.mxu0 0.0
    %2821 = vmatpush1.xpose.msra.mxu0 0.0
    %2822 = vmatprep.subr.mxu0 0.0
    %2823 = vmatpush1.xpose.msra.mxu0 0.0
    %2824 = vmatprep.subr.mxu0 0.0
    %2825 = vmatpush1.xpose.msra.mxu0 0.0
    %2826 = vmatprep.subr.mxu0 0.0
    %2827 = vmatpush1.xpose.msra.mxu0 0.0
    %2828 = vmatprep.subr.mxu0 0.0
    %2829 = vmatpush1.xpose.msra.mxu0 0.0
    %2830 = vmatprep.subr.mxu0 0.0
    %2831 = vmatpush1.xpose.msra.mxu0 0.0
    %2832 = vmatprep.subr.mxu0 0.0
    %2833 = vmatpush1.xpose.msra.mxu0 0.0
    %2834 = vmatprep.subr.mxu0 0.0
    %2835 = vmatpush1.xpose.msra.mxu0 0.0
    %2836 = vmatprep.subr.mxu0 0.0
    %2837 = vmatpush1.xpose.msra.mxu0 0.0
    %2838 = vmatprep.subr.mxu0 0.0
    %2839 = vmatpush1.xpose.msra.mxu0 0.0
    %2840 = vmatprep.subr.mxu0 0.0
    %2841 = vmatpush1.xpose.msra.mxu0 0.0
    %2842 = vmatprep.subr.mxu0 0.0
    %2843 = vmatpush1.xpose.msra.mxu0 0.0
    %2844 = vmatprep.subr.mxu0 0.0
    %2845 = vmatpush1.xpose.msra.mxu0 0.0
    %2846 = vmatprep.subr.mxu0 0.0
    %2847 = vmatpush1.xpose.msra.mxu0 0.0
    %2848 = vmatprep.mubr.f32.mxu0 0.0
    %2849 = vmatmul.mubr.f32.gmra.mrb[0].mxu0 %v2780
    %v2850 = vpop.f32.mrb[0].mxu0
    %v2851 = vadd.f32 0.0, %v2850
    %v2852 = vpop.f32.mrb[0].mxu0
    %2853 = vdwg.mxu0
    %2854 = vrot.lane.b32.xlu0 %v473, 104
    %v2855 = vpop.permute.xlu0 %2854
    %2856 = vrot.lane.b32.xlu0 %v354, 104
    %v2857 = vpop.permute.xlu0 %2856
    %v2858 = vsel %vm480, %v2855, 0
    %v2860 = vsel %vm480, %v2857, 0
    %2862 = vmatprep.subr.mxu0 0.0
    %2863 = vmatpush1.xpose.msra.mxu0 %v2860
    %2864 = vmatprep.subr.mxu0 0.0
    %2865 = vmatpush1.xpose.msra.mxu0 0.0
    %2866 = vmatprep.subr.mxu0 0.0
    %2867 = vmatpush1.xpose.msra.mxu0 0.0
    %2868 = vmatprep.subr.mxu0 0.0
    %2869 = vmatpush1.xpose.msra.mxu0 0.0
    %2870 = vmatprep.subr.mxu0 0.0
    %2871 = vmatpush1.xpose.msra.mxu0 0.0
    %2872 = vmatprep.subr.mxu0 0.0
    %2873 = vmatpush1.xpose.msra.mxu0 0.0
    %2874 = vmatprep.subr.mxu0 0.0
    %2875 = vmatpush1.xpose.msra.mxu0 0.0
    %2876 = vmatprep.subr.mxu0 0.0
    %2877 = vmatpush1.xpose.msra.mxu0 0.0
    %2878 = vmatprep.subr.mxu0 0.0
    %2879 = vmatpush1.xpose.msra.mxu0 0.0
    %2880 = vmatprep.subr.mxu0 0.0
    %2881 = vmatpush1.xpose.msra.mxu0 0.0
    %2882 = vmatprep.subr.mxu0 0.0
    %2883 = vmatpush1.xpose.msra.mxu0 0.0
    %2884 = vmatprep.subr.mxu0 0.0
    %2885 = vmatpush1.xpose.msra.mxu0 0.0
    %2886 = vmatprep.subr.mxu0 0.0
    %2887 = vmatpush1.xpose.msra.mxu0 0.0
    %2888 = vmatprep.subr.mxu0 0.0
    %2889 = vmatpush1.xpose.msra.mxu0 0.0
    %2890 = vmatprep.subr.mxu0 0.0
    %2891 = vmatpush1.xpose.msra.mxu0 0.0
    %2892 = vmatprep.subr.mxu0 0.0
    %2893 = vmatpush1.xpose.msra.mxu0 0.0
    %2894 = vmatprep.subr.mxu0 0.0
    %2895 = vmatpush1.xpose.msra.mxu0 0.0
    %2896 = vmatprep.subr.mxu0 0.0
    %2897 = vmatpush1.xpose.msra.mxu0 0.0
    %2898 = vmatprep.subr.mxu0 0.0
    %2899 = vmatpush1.xpose.msra.mxu0 0.0
    %2900 = vmatprep.subr.mxu0 0.0
    %2901 = vmatpush1.xpose.msra.mxu0 0.0
    %2902 = vmatprep.subr.mxu0 0.0
    %2903 = vmatpush1.xpose.msra.mxu0 0.0
    %2904 = vmatprep.subr.mxu0 0.0
    %2905 = vmatpush1.xpose.msra.mxu0 0.0
    %2906 = vmatprep.subr.mxu0 0.0
    %2907 = vmatpush1.xpose.msra.mxu0 0.0
    %2908 = vmatprep.subr.mxu0 0.0
    %2909 = vmatpush1.xpose.msra.mxu0 0.0
    %2910 = vmatprep.subr.mxu0 0.0
    %2911 = vmatpush1.xpose.msra.mxu0 0.0
    %2912 = vmatprep.subr.mxu0 0.0
    %2913 = vmatpush1.xpose.msra.mxu0 0.0
    %2914 = vmatprep.subr.mxu0 0.0
    %2915 = vmatpush1.xpose.msra.mxu0 0.0
    %2916 = vmatprep.subr.mxu0 0.0
    %2917 = vmatpush1.xpose.msra.mxu0 0.0
    %2918 = vmatprep.subr.mxu0 0.0
    %2919 = vmatpush1.xpose.msra.mxu0 0.0
    %2920 = vmatprep.subr.mxu0 0.0
    %2921 = vmatpush1.xpose.msra.mxu0 0.0
    %2922 = vmatprep.subr.mxu0 0.0
    %2923 = vmatpush1.xpose.msra.mxu0 0.0
    %2924 = vmatprep.subr.mxu0 0.0
    %2925 = vmatpush1.xpose.msra.mxu0 0.0
    %2926 = vmatprep.mubr.f32.mxu0 0.0
    %2927 = vmatmul.mubr.f32.gmra.mrb[0].mxu0 %v2858
    %v2928 = vpop.f32.mrb[0].mxu0
    %v2929 = vadd.f32 0.0, %v2928
    %v2930 = vpop.f32.mrb[0].mxu0
    %2931 = vdwg.mxu0
    %2932 = vrot.lane.b32.xlu0 %v474, 104
    %v2933 = vpop.permute.xlu0 %2932
    %2934 = vrot.lane.b32.xlu0 %v359, 104
    %v2935 = vpop.permute.xlu0 %2934
    %v2936 = vsel %vm480, %v2933, 0
    %v2938 = vsel %vm480, %v2935, 0
    %2940 = vmatprep.subr.mxu0 0.0
    %2941 = vmatpush1.xpose.msra.mxu0 %v2938
    %2942 = vmatprep.subr.mxu0 0.0
    %2943 = vmatpush1.xpose.msra.mxu0 0.0
    %2944 = vmatprep.subr.mxu0 0.0
    %2945 = vmatpush1.xpose.msra.mxu0 0.0
    %2946 = vmatprep.subr.mxu0 0.0
    %2947 = vmatpush1.xpose.msra.mxu0 0.0
    %2948 = vmatprep.subr.mxu0 0.0
    %2949 = vmatpush1.xpose.msra.mxu0 0.0
    %2950 = vmatprep.subr.mxu0 0.0
    %2951 = vmatpush1.xpose.msra.mxu0 0.0
    %2952 = vmatprep.subr.mxu0 0.0
    %2953 = vmatpush1.xpose.msra.mxu0 0.0
    %2954 = vmatprep.subr.mxu0 0.0
    %2955 = vmatpush1.xpose.msra.mxu0 0.0
    %2956 = vmatprep.subr.mxu0 0.0
    %2957 = vmatpush1.xpose.msra.mxu0 0.0
    %2958 = vmatprep.subr.mxu0 0.0
    %2959 = vmatpush1.xpose.msra.mxu0 0.0
    %2960 = vmatprep.subr.mxu0 0.0
    %2961 = vmatpush1.xpose.msra.mxu0 0.0
    %2962 = vmatprep.subr.mxu0 0.0
    %2963 = vmatpush1.xpose.msra.mxu0 0.0
    %2964 = vmatprep.subr.mxu0 0.0
    %2965 = vmatpush1.xpose.msra.mxu0 0.0
    %2966 = vmatprep.subr.mxu0 0.0
    %2967 = vmatpush1.xpose.msra.mxu0 0.0
    %2968 = vmatprep.subr.mxu0 0.0
    %2969 = vmatpush1.xpose.msra.mxu0 0.0
    %2970 = vmatprep.subr.mxu0 0.0
    %2971 = vmatpush1.xpose.msra.mxu0 0.0
    %2972 = vmatprep.subr.mxu0 0.0
    %2973 = vmatpush1.xpose.msra.mxu0 0.0
    %2974 = vmatprep.subr.mxu0 0.0
    %2975 = vmatpush1.xpose.msra.mxu0 0.0
    %2976 = vmatprep.subr.mxu0 0.0
    %2977 = vmatpush1.xpose.msra.mxu0 0.0
    %2978 = vmatprep.subr.mxu0 0.0
    %2979 = vmatpush1.xpose.msra.mxu0 0.0
    %2980 = vmatprep.subr.mxu0 0.0
    %2981 = vmatpush1.xpose.msra.mxu0 0.0
    %2982 = vmatprep.subr.mxu0 0.0
    %2983 = vmatpush1.xpose.msra.mxu0 0.0
    %2984 = vmatprep.subr.mxu0 0.0
    %2985 = vmatpush1.xpose.msra.mxu0 0.0
    %2986 = vmatprep.subr.mxu0 0.0
    %2987 = vmatpush1.xpose.msra.mxu0 0.0
    %2988 = vmatprep.subr.mxu0 0.0
    %2989 = vmatpush1.xpose.msra.mxu0 0.0
    %2990 = vmatprep.subr.mxu0 0.0
    %2991 = vmatpush1.xpose.msra.mxu0 0.0
    %2992 = vmatprep.subr.mxu0 0.0
    %2993 = vmatpush1.xpose.msra.mxu0 0.0
    %2994 = vmatprep.subr.mxu0 0.0
    %2995 = vmatpush1.xpose.msra.mxu0 0.0
    %2996 = vmatprep.subr.mxu0 0.0
    %2997 = vmatpush1.xpose.msra.mxu0 0.0
    %2998 = vmatprep.subr.mxu0 0.0
    %2999 = vmatpush1.xpose.msra.mxu0 0.0
    %3000 = vmatprep.subr.mxu0 0.0
    %3001 = vmatpush1.xpose.msra.mxu0 0.0
    %3002 = vmatprep.subr.mxu0 0.0
    %3003 = vmatpush1.xpose.msra.mxu0 0.0
    %3004 = vmatprep.mubr.f32.mxu0 0.0
    %3005 = vmatmul.mubr.f32.gmra.mrb[0].mxu0 %v2936
    %v3006 = vpop.f32.mrb[0].mxu0
    %v3007 = vadd.f32 0.0, %v3006
    %v3008 = vpop.f32.mrb[0].mxu0
    %3009 = vdwg.mxu0
    %3010 = vrot.lane.b32.xlu0 %v475, 104
    %v3011 = vpop.permute.xlu0 %3010
    %3012 = vrot.lane.b32.xlu0 %v364, 104
    %v3013 = vpop.permute.xlu0 %3012
    %v3014 = vsel %vm480, %v3011, 0
    %v3016 = vsel %vm480, %v3013, 0
    %3018 = vmatprep.subr.mxu0 0.0
    %3019 = vmatpush1.xpose.msra.mxu0 %v3016
    %3020 = vmatprep.subr.mxu0 0.0
    %3021 = vmatpush1.xpose.msra.mxu0 0.0
    %3022 = vmatprep.subr.mxu0 0.0
    %3023 = vmatpush1.xpose.msra.mxu0 0.0
    %3024 = vmatprep.subr.mxu0 0.0
    %3025 = vmatpush1.xpose.msra.mxu0 0.0
    %3026 = vmatprep.subr.mxu0 0.0
    %3027 = vmatpush1.xpose.msra.mxu0 0.0
    %3028 = vmatprep.subr.mxu0 0.0
    %3029 = vmatpush1.xpose.msra.mxu0 0.0
    %3030 = vmatprep.subr.mxu0 0.0
    %3031 = vmatpush1.xpose.msra.mxu0 0.0
    %3032 = vmatprep.subr.mxu0 0.0
    %3033 = vmatpush1.xpose.msra.mxu0 0.0
    %3034 = vmatprep.subr.mxu0 0.0
    %3035 = vmatpush1.xpose.msra.mxu0 0.0
    %3036 = vmatprep.subr.mxu0 0.0
    %3037 = vmatpush1.xpose.msra.mxu0 0.0
    %3038 = vmatprep.subr.mxu0 0.0
    %3039 = vmatpush1.xpose.msra.mxu0 0.0
    %3040 = vmatprep.subr.mxu0 0.0
    %3041 = vmatpush1.xpose.msra.mxu0 0.0
    %3042 = vmatprep.subr.mxu0 0.0
    %3043 = vmatpush1.xpose.msra.mxu0 0.0
    %3044 = vmatprep.subr.mxu0 0.0
    %3045 = vmatpush1.xpose.msra.mxu0 0.0
    %3046 = vmatprep.subr.mxu0 0.0
    %3047 = vmatpush1.xpose.msra.mxu0 0.0
    %3048 = vmatprep.subr.mxu0 0.0
    %3049 = vmatpush1.xpose.msra.mxu0 0.0
    %3050 = vmatprep.subr.mxu0 0.0
    %3051 = vmatpush1.xpose.msra.mxu0 0.0
    %3052 = vmatprep.subr.mxu0 0.0
    %3053 = vmatpush1.xpose.msra.mxu0 0.0
    %3054 = vmatprep.subr.mxu0 0.0
    %3055 = vmatpush1.xpose.msra.mxu0 0.0
    %3056 = vmatprep.subr.mxu0 0.0
    %3057 = vmatpush1.xpose.msra.mxu0 0.0
    %3058 = vmatprep.subr.mxu0 0.0
    %3059 = vmatpush1.xpose.msra.mxu0 0.0
    %3060 = vmatprep.subr.mxu0 0.0
    %3061 = vmatpush1.xpose.msra.mxu0 0.0
    %3062 = vmatprep.subr.mxu0 0.0
    %3063 = vmatpush1.xpose.msra.mxu0 0.0
    %3064 = vmatprep.subr.mxu0 0.0
    %3065 = vmatpush1.xpose.msra.mxu0 0.0
    %3066 = vmatprep.subr.mxu0 0.0
    %3067 = vmatpush1.xpose.msra.mxu0 0.0
    %3068 = vmatprep.subr.mxu0 0.0
    %3069 = vmatpush1.xpose.msra.mxu0 0.0
    %3070 = vmatprep.subr.mxu0 0.0
    %3071 = vmatpush1.xpose.msra.mxu0 0.0
    %3072 = vmatprep.subr.mxu0 0.0
    %3073 = vmatpush1.xpose.msra.mxu0 0.0
    %3074 = vmatprep.subr.mxu0 0.0
    %3075 = vmatpush1.xpose.msra.mxu0 0.0
    %3076 = vmatprep.subr.mxu0 0.0
    %3077 = vmatpush1.xpose.msra.mxu0 0.0
    %3078 = vmatprep.subr.mxu0 0.0
    %3079 = vmatpush1.xpose.msra.mxu0 0.0
    %3080 = vmatprep.subr.mxu0 0.0
    %3081 = vmatpush1.xpose.msra.mxu0 0.0
    %3082 = vmatprep.mubr.f32.mxu0 0.0
    %3083 = vmatmul.mubr.f32.gmra.mrb[0].mxu0 %v3014
    %v3084 = vpop.f32.mrb[0].mxu0
    %v3085 = vadd.f32 0.0, %v3084
    %v3086 = vpop.f32.mrb[0].mxu0
    %3087 = vdwg.mxu0
    %v3088 = vsel %vm480, %v2851, -inf
    %3089 = vmax.xlane.f32.xlu0 %v3088
    %v3090 = vpop.xlane.xlu0 %3089
    %v3091 = vsel %vm480, %v2929, -inf
    %3092 = vmax.xlane.f32.xlu0 %v3091
    %v3093 = vpop.xlane.xlu0 %3092
    %v3094 = vsel %vm480, %v3007, -inf
    %3095 = vmax.xlane.f32.xlu0 %v3094
    %v3096 = vpop.xlane.xlu0 %3095
    %v3097 = vsel %vm480, %v3085, -inf
    %3098 = vmax.xlane.f32.xlu0 %v3097
    %v3099 = vpop.xlane.xlu0 %3098
    %v3100 = vsub.f32 %v2851, %v3090
    %v3101 = vsub.f32 %v2929, %v3093
    %v3102 = vsub.f32 %v3007, %v3096
    %v3103 = vsub.f32 %v3085, %v3099
    %v3104 = vmul.f32 %v3100, 1.442695
    %v3105 = vpow.pop %v3104
    %v3106 = vmul.f32 %v3101, 1.442695
    %v3107 = vpow.pop %v3106
    %v3108 = vmul.f32 %v3102, 1.442695
    %v3109 = vpow.pop %v3108
    %v3110 = vmul.f32 %v3103, 1.442695
    %v3111 = vpow.pop %v3110
    %v3112 = vsel %vm480, %v3105, 0.0
    %3113 = vadd.xlane.f32.xlu0 %v3112
    %v3114 = vpop.xlane.xlu0 %3113
    %v3115 = vsel %vm480, %v3107, 0.0
    %3116 = vadd.xlane.f32.xlu0 %v3115
    %v3117 = vpop.xlane.xlu0 %3116
    %v3118 = vsel %vm480, %v3109, 0.0
    %3119 = vadd.xlane.f32.xlu0 %v3118
    %v3120 = vpop.xlane.xlu0 %3119
    %v3121 = vsel %vm480, %v3111, 0.0
    %3122 = vadd.xlane.f32.xlu0 %v3121
    %v3123 = vpop.xlane.xlu0 %3122
    %v3124 = vrcp.pop %v3114
    %v3125 = vrcp.pop %v3117
    %v3126 = vrcp.pop %v3120
    %v3127 = vrcp.pop %v3123
    %v3128 = vmul.f32 %v3114, %v3124
    %v3129 = vmul.f32 %v3117, %v3125
    %v3130 = vmul.f32 %v3120, %v3126
    %v3131 = vmul.f32 %v3123, %v3127
    %v3132 = vsub.f32 2.0, %v3128
    %v3133 = vsub.f32 2.0, %v3129
    %v3134 = vsub.f32 2.0, %v3130
    %v3135 = vsub.f32 2.0, %v3131
    %v3136 = vmul.f32 %v3124, %v3132
    %v3137 = vmul.f32 %v3125, %v3133
    %v3138 = vmul.f32 %v3126, %v3134
    %v3139 = vmul.f32 %v3127, %v3135
    %v3140 = vmul.f32 %v3105, %v3136
    %v3141 = vmul.f32 %v3107, %v3137
    %v3142 = vmul.f32 %v3109, %v3138
    %v3143 = vmul.f32 %v3111, %v3139
    %3144 = vrot.lane.b32.xlu0 %v454, 104
    %v3145 = vpop.permute.xlu0 %3144
    %v3148 = vsel %vm480, %v3140, 0
    %3150 = vmatprep.subr.mxu0 0.0
    %3151 = vmatpush1.msra.mxu0 %v3145
    %3152 = vmatprep.subr.mxu0 0.0
    %3153 = vmatpush1.msra.mxu0 0.0
    %3154 = vmatprep.subr.mxu0 0.0
    %3155 = vmatpush1.msra.mxu0 0.0
    %3156 = vmatprep.subr.mxu0 0.0
    %3157 = vmatpush1.msra.mxu0 0.0
    %3158 = vmatprep.subr.mxu0 0.0
    %3159 = vmatpush1.msra.mxu0 0.0
    %3160 = vmatprep.subr.mxu0 0.0
    %3161 = vmatpush1.msra.mxu0 0.0
    %3162 = vmatprep.subr.mxu0 0.0
    %3163 = vmatpush1.msra.mxu0 0.0
    %3164 = vmatprep.subr.mxu0 0.0
    %3165 = vmatpush1.msra.mxu0 0.0
    %3166 = vmatprep.subr.mxu0 0.0
    %3167 = vmatpush1.msra.mxu0 0.0
    %3168 = vmatprep.subr.mxu0 0.0
    %3169 = vmatpush1.msra.mxu0 0.0
    %3170 = vmatprep.subr.mxu0 0.0
    %3171 = vmatpush1.msra.mxu0 0.0
    %3172 = vmatprep.subr.mxu0 0.0
    %3173 = vmatpush1.msra.mxu0 0.0
    %3174 = vmatprep.subr.mxu0 0.0
    %3175 = vmatpush1.msra.mxu0 0.0
    %3176 = vmatprep.subr.mxu0 0.0
    %3177 = vmatpush1.msra.mxu0 0.0
    %3178 = vmatprep.subr.mxu0 0.0
    %3179 = vmatpush1.msra.mxu0 0.0
    %3180 = vmatprep.subr.mxu0 0.0
    %3181 = vmatpush1.msra.mxu0 0.0
    %3182 = vmatprep.subr.mxu0 0.0
    %3183 = vmatpush1.msra.mxu0 0.0
    %3184 = vmatprep.subr.mxu0 0.0
    %3185 = vmatpush1.msra.mxu0 0.0
    %3186 = vmatprep.subr.mxu0 0.0
    %3187 = vmatpush1.msra.mxu0 0.0
    %3188 = vmatprep.subr.mxu0 0.0
    %3189 = vmatpush1.msra.mxu0 0.0
    %3190 = vmatprep.subr.mxu0 0.0
    %3191 = vmatpush1.msra.mxu0 0.0
    %3192 = vmatprep.subr.mxu0 0.0
    %3193 = vmatpush1.msra.mxu0 0.0
    %3194 = vmatprep.subr.mxu0 0.0
    %3195 = vmatpush1.msra.mxu0 0.0
    %3196 = vmatprep.subr.mxu0 0.0
    %3197 = vmatpush1.msra.mxu0 0.0
    %3198 = vmatprep.subr.mxu0 0.0
    %3199 = vmatpush1.msra.mxu0 0.0
    %3200 = vmatprep.subr.mxu0 0.0
    %3201 = vmatpush1.msra.mxu0 0.0
    %3202 = vmatprep.subr.mxu0 0.0
    %3203 = vmatpush1.msra.mxu0 0.0
    %3204 = vmatprep.subr.mxu0 0.0
    %3205 = vmatpush1.msra.mxu0 0.0
    %3206 = vmatprep.subr.mxu0 0.0
    %3207 = vmatpush1.msra.mxu0 0.0
    %3208 = vmatprep.subr.mxu0 0.0
    %3209 = vmatpush1.msra.mxu0 0.0
    %3210 = vmatprep.subr.mxu0 0.0
    %3211 = vmatpush1.msra.mxu0 0.0
    %3212 = vmatprep.subr.mxu0 0.0
    %3213 = vmatpush1.msra.mxu0 0.0
    %3214 = vmatprep.mubr.f32.mxu0 0.0
    %3215 = vmatmul.mubr.f32.gmra.mrb[0].mxu0 %v3148
    %v3216 = vpop.f32.mrb[0].mxu0
    %v3217 = vadd.f32 0.0, %v3216
    %v3218 = vpop.f32.mrb[0].mxu0
    %3219 = vdwg.mxu0
    %3220 = vrot.lane.b32.xlu0 %v459, 104
    %v3221 = vpop.permute.xlu0 %3220
    %v3224 = vsel %vm480, %v3141, 0
    %3226 = vmatprep.subr.mxu0 0.0
    %3227 = vmatpush1.msra.mxu0 %v3221
    %3228 = vmatprep.subr.mxu0 0.0
    %3229 = vmatpush1.msra.mxu0 0.0
    %3230 = vmatprep.subr.mxu0 0.0
    %3231 = vmatpush1.msra.mxu0 0.0
    %3232 = vmatprep.subr.mxu0 0.0
    %3233 = vmatpush1.msra.mxu0 0.0
    %3234 = vmatprep.subr.mxu0 0.0
    %3235 = vmatpush1.msra.mxu0 0.0
    %3236 = vmatprep.subr.mxu0 0.0
    %3237 = vmatpush1.msra.mxu0 0.0
    %3238 = vmatprep.subr.mxu0 0.0
    %3239 = vmatpush1.msra.mxu0 0.0
    %3240 = vmatprep.subr.mxu0 0.0
    %3241 = vmatpush1.msra.mxu0 0.0
    %3242 = vmatprep.subr.mxu0 0.0
    %3243 = vmatpush1.msra.mxu0 0.0
    %3244 = vmatprep.subr.mxu0 0.0
    %3245 = vmatpush1.msra.mxu0 0.0
    %3246 = vmatprep.subr.mxu0 0.0
    %3247 = vmatpush1.msra.mxu0 0.0
    %3248 = vmatprep.subr.mxu0 0.0
    %3249 = vmatpush1.msra.mxu0 0.0
    %3250 = vmatprep.subr.mxu0 0.0
    %3251 = vmatpush1.msra.mxu0 0.0
    %3252 = vmatprep.subr.mxu0 0.0
    %3253 = vmatpush1.msra.mxu0 0.0
    %3254 = vmatprep.subr.mxu0 0.0
    %3255 = vmatpush1.msra.mxu0 0.0
    %3256 = vmatprep.subr.mxu0 0.0
    %3257 = vmatpush1.msra.mxu0 0.0
    %3258 = vmatprep.subr.mxu0 0.0
    %3259 = vmatpush1.msra.mxu0 0.0
    %3260 = vmatprep.subr.mxu0 0.0
    %3261 = vmatpush1.msra.mxu0 0.0
    %3262 = vmatprep.subr.mxu0 0.0
    %3263 = vmatpush1.msra.mxu0 0.0
    %3264 = vmatprep.subr.mxu0 0.0
    %3265 = vmatpush1.msra.mxu0 0.0
    %3266 = vmatprep.subr.mxu0 0.0
    %3267 = vmatpush1.msra.mxu0 0.0
    %3268 = vmatprep.subr.mxu0 0.0
    %3269 = vmatpush1.msra.mxu0 0.0
    %3270 = vmatprep.subr.mxu0 0.0
    %3271 = vmatpush1.msra.mxu0 0.0
    %3272 = vmatprep.subr.mxu0 0.0
    %3273 = vmatpush1.msra.mxu0 0.0
    %3274 = vmatprep.subr.mxu0 0.0
    %3275 = vmatpush1.msra.mxu0 0.0
    %3276 = vmatprep.subr.mxu0 0.0
    %3277 = vmatpush1.msra.mxu0 0.0
    %3278 = vmatprep.subr.mxu0 0.0
    %3279 = vmatpush1.msra.mxu0 0.0
    %3280 = vmatprep.subr.mxu0 0.0
    %3281 = vmatpush1.msra.mxu0 0.0
    %3282 = vmatprep.subr.mxu0 0.0
    %3283 = vmatpush1.msra.mxu0 0.0
    %3284 = vmatprep.subr.mxu0 0.0
    %3285 = vmatpush1.msra.mxu0 0.0
    %3286 = vmatprep.subr.mxu0 0.0
    %3287 = vmatpush1.msra.mxu0 0.0
    %3288 = vmatprep.subr.mxu0 0.0
    %3289 = vmatpush1.msra.mxu0 0.0
    %3290 = vmatprep.mubr.f32.mxu0 0.0
    %3291 = vmatmul.mubr.f32.gmra.mrb[0].mxu0 %v3224
    %v3292 = vpop.f32.mrb[0].mxu0
    %v3293 = vadd.f32 0.0, %v3292
    %v3294 = vpop.f32.mrb[0].mxu0
    %3295 = vdwg.mxu0
    %3296 = vrot.lane.b32.xlu0 %v464, 104
    %v3297 = vpop.permute.xlu0 %3296
    %v3300 = vsel %vm480, %v3142, 0
    %3302 = vmatprep.subr.mxu0 0.0
    %3303 = vmatpush1.msra.mxu0 %v3297
    %3304 = vmatprep.subr.mxu0 0.0
    %3305 = vmatpush1.msra.mxu0 0.0
    %3306 = vmatprep.subr.mxu0 0.0
    %3307 = vmatpush1.msra.mxu0 0.0
    %3308 = vmatprep.subr.mxu0 0.0
    %3309 = vmatpush1.msra.mxu0 0.0
    %3310 = vmatprep.subr.mxu0 0.0
    %3311 = vmatpush1.msra.mxu0 0.0
    %3312 = vmatprep.subr.mxu0 0.0
    %3313 = vmatpush1.msra.mxu0 0.0
    %3314 = vmatprep.subr.mxu0 0.0
    %3315 = vmatpush1.msra.mxu0 0.0
    %3316 = vmatprep.subr.mxu0 0.0
    %3317 = vmatpush1.msra.mxu0 0.0
    %3318 = vmatprep.subr.mxu0 0.0
    %3319 = vmatpush1.msra.mxu0 0.0
    %3320 = vmatprep.subr.mxu0 0.0
    %3321 = vmatpush1.msra.mxu0 0.0
    %3322 = vmatprep.subr.mxu0 0.0
    %3323 = vmatpush1.msra.mxu0 0.0
    %3324 = vmatprep.subr.mxu0 0.0
    %3325 = vmatpush1.msra.mxu0 0.0
    %3326 = vmatprep.subr.mxu0 0.0
    %3327 = vmatpush1.msra.mxu0 0.0
    %3328 = vmatprep.subr.mxu0 0.0
    %3329 = vmatpush1.msra.mxu0 0.0
    %3330 = vmatprep.subr.mxu0 0.0
    %3331 = vmatpush1.msra.mxu0 0.0
    %3332 = vmatprep.subr.mxu0 0.0
    %3333 = vmatpush1.msra.mxu0 0.0
    %3334 = vmatprep.subr.mxu0 0.0
    %3335 = vmatpush1.msra.mxu0 0.0
    %3336 = vmatprep.subr.mxu0 0.0
    %3337 = vmatpush1.msra.mxu0 0.0
    %3338 = vmatprep.subr.mxu0 0.0
    %3339 = vmatpush1.msra.mxu0 0.0
    %3340 = vmatprep.subr.mxu0 0.0
    %3341 = vmatpush1.msra.mxu0 0.0
    %3342 = vmatprep.subr.mxu0 0.0
    %3343 = vmatpush1.msra.mxu0 0.0
    %3344 = vmatprep.subr.mxu0 0.0
    %3345 = vmatpush1.msra.mxu0 0.0
    %3346 = vmatprep.subr.mxu0 0.0
    %3347 = vmatpush1.msra.mxu0 0.0
    %3348 = vmatprep.subr.mxu0 0.0
    %3349 = vmatpush1.msra.mxu0 0.0
    %3350 = vmatprep.subr.mxu0 0.0
    %3351 = vmatpush1.msra.mxu0 0.0
    %3352 = vmatprep.subr.mxu0 0.0
    %3353 = vmatpush1.msra.mxu0 0.0
    %3354 = vmatprep.subr.mxu0 0.0
    %3355 = vmatpush1.msra.mxu0 0.0
    %3356 = vmatprep.subr.mxu0 0.0
    %3357 = vmatpush1.msra.mxu0 0.0
    %3358 = vmatprep.subr.mxu0 0.0
    %3359 = vmatpush1.msra.mxu0 0.0
    %3360 = vmatprep.subr.mxu0 0.0
    %3361 = vmatpush1.msra.mxu0 0.0
    %3362 = vmatprep.subr.mxu0 0.0
    %3363 = vmatpush1.msra.mxu0 0.0
    %3364 = vmatprep.subr.mxu0 0.0
    %3365 = vmatpush1.msra.mxu0 0.0
    %3366 = vmatprep.mubr.f32.mxu0 0.0
    %3367 = vmatmul.mubr.f32.gmra.mrb[0].mxu0 %v3300
    %v3368 = vpop.f32.mrb[0].mxu0
    %v3369 = vadd.f32 0.0, %v3368
    %v3370 = vpop.f32.mrb[0].mxu0
    %3371 = vdwg.mxu0
    %3372 = vrot.lane.b32.xlu0 %v469, 104
    %v3373 = vpop.permute.xlu0 %3372
    %v3376 = vsel %vm480, %v3143, 0
    %3378 = vmatprep.subr.mxu0 0.0
    %3379 = vmatpush1.msra.mxu0 %v3373
    %3380 = vmatprep.subr.mxu0 0.0
    %3381 = vmatpush1.msra.mxu0 0.0
    %3382 = vmatprep.subr.mxu0 0.0
    %3383 = vmatpush1.msra.mxu0 0.0
    %3384 = vmatprep.subr.mxu0 0.0
    %3385 = vmatpush1.msra.mxu0 0.0
    %3386 = vmatprep.subr.mxu0 0.0
    %3387 = vmatpush1.msra.mxu0 0.0
    %3388 = vmatprep.subr.mxu0 0.0
    %3389 = vmatpush1.msra.mxu0 0.0
    %3390 = vmatprep.subr.mxu0 0.0
    %3391 = vmatpush1.msra.mxu0 0.0
    %3392 = vmatprep.subr.mxu0 0.0
    %3393 = vmatpush1.msra.mxu0 0.0
    %3394 = vmatprep.subr.mxu0 0.0
    %3395 = vmatpush1.msra.mxu0 0.0
    %3396 = vmatprep.subr.mxu0 0.0
    %3397 = vmatpush1.msra.mxu0 0.0
    %3398 = vmatprep.subr.mxu0 0.0
    %3399 = vmatpush1.msra.mxu0 0.0
    %3400 = vmatprep.subr.mxu0 0.0
    %3401 = vmatpush1.msra.mxu0 0.0
    %3402 = vmatprep.subr.mxu0 0.0
    %3403 = vmatpush1.msra.mxu0 0.0
    %3404 = vmatprep.subr.mxu0 0.0
    %3405 = vmatpush1.msra.mxu0 0.0
    %3406 = vmatprep.subr.mxu0 0.0
    %3407 = vmatpush1.msra.mxu0 0.0
    %3408 = vmatprep.subr.mxu0 0.0
    %3409 = vmatpush1.msra.mxu0 0.0
    %3410 = vmatprep.subr.mxu0 0.0
    %3411 = vmatpush1.msra.mxu0 0.0
    %3412 = vmatprep.subr.mxu0 0.0
    %3413 = vmatpush1.msra.mxu0 0.0
    %3414 = vmatprep.subr.mxu0 0.0
    %3415 = vmatpush1.msra.mxu0 0.0
    %3416 = vmatprep.subr.mxu0 0.0
    %3417 = vmatpush1.msra.mxu0 0.0
    %3418 = vmatprep.subr.mxu0 0.0
    %3419 = vmatpush1.msra.mxu0 0.0
    %3420 = vmatprep.subr.mxu0 0.0
    %3421 = vmatpush1.msra.mxu0 0.0
    %3422 = vmatprep.subr.mxu0 0.0
    %3423 = vmatpush1.msra.mxu0 0.0
    %3424 = vmatprep.subr.mxu0 0.0
    %3425 = vmatpush1.msra.mxu0 0.0
    %3426 = vmatprep.subr.mxu0 0.0
    %3427 = vmatpush1.msra.mxu0 0.0
    %3428 = vmatprep.subr.mxu0 0.0
    %3429 = vmatpush1.msra.mxu0 0.0
    %3430 = vmatprep.subr.mxu0 0.0
    %3431 = vmatpush1.msra.mxu0 0.0
    %3432 = vmatprep.subr.mxu0 0.0
    %3433 = vmatpush1.msra.mxu0 0.0
    %3434 = vmatprep.subr.mxu0 0.0
    %3435 = vmatpush1.msra.mxu0 0.0
    %3436 = vmatprep.subr.mxu0 0.0
    %3437 = vmatpush1.msra.mxu0 0.0
    %3438 = vmatprep.subr.mxu0 0.0
    %3439 = vmatpush1.msra.mxu0 0.0
    %3440 = vmatprep.subr.mxu0 0.0
    %3441 = vmatpush1.msra.mxu0 0.0
    %3442 = vmatprep.mubr.f32.mxu0 0.0
    %3443 = vmatmul.mubr.f32.gmra.mrb[0].mxu0 %v3376
    %v3444 = vpop.f32.mrb[0].mxu0
    %v3445 = vadd.f32 0.0, %v3444
    %v3446 = vpop.f32.mrb[0].mxu0
    %3447 = vdwg.mxu0
    %v3449 = vsel %vm480, %v3217, 0
    %v3452 = vsel %vm480, %v3293, 0
    %v3455 = vsel %vm480, %v3369, 0
    %v3458 = vsel %vm480, %v3445, 0
    %3460 = vmatprep.subr.mxu0 0.0
    %3461 = vmatpush1.msra.mxu0 %v479
    %3462 = vmatprep.subr.mxu0 0.0
    %3463 = vmatpush1.msra.mxu0 0.0
    %3464 = vmatprep.subr.mxu0 0.0
    %3465 = vmatpush1.msra.mxu0 0.0
    %3466 = vmatprep.subr.mxu0 0.0
    %3467 = vmatpush1.msra.mxu0 0.0
    %3468 = vmatprep.subr.mxu0 0.0
    %3469 = vmatpush1.msra.mxu0 0.0
    %3470 = vmatprep.subr.mxu0 0.0
    %3471 = vmatpush1.msra.mxu0 0.0
    %3472 = vmatprep.subr.mxu0 0.0
    %3473 = vmatpush1.msra.mxu0 0.0
    %3474 = vmatprep.subr.mxu0 0.0
    %3475 = vmatpush1.msra.mxu0 0.0
    %3476 = vmatprep.subr.mxu0 0.0
    %3477 = vmatpush1.msra.mxu0 0.0
    %3478 = vmatprep.subr.mxu0 0.0
    %3479 = vmatpush1.msra.mxu0 0.0
    %3480 = vmatprep.subr.mxu0 0.0
    %3481 = vmatpush1.msra.mxu0 0.0
    %3482 = vmatprep.subr.mxu0 0.0
    %3483 = vmatpush1.msra.mxu0 0.0
    %3484 = vmatprep.subr.mxu0 0.0
    %3485 = vmatpush1.msra.mxu0 0.0
    %3486 = vmatprep.subr.mxu0 0.0
    %3487 = vmatpush1.msra.mxu0 0.0
    %3488 = vmatprep.subr.mxu0 0.0
    %3489 = vmatpush1.msra.mxu0 0.0
    %3490 = vmatprep.subr.mxu0 0.0
    %3491 = vmatpush1.msra.mxu0 0.0
    %3492 = vmatprep.subr.mxu0 0.0
    %3493 = vmatpush1.msra.mxu0 0.0
    %3494 = vmatprep.subr.mxu0 0.0
    %3495 = vmatpush1.msra.mxu0 0.0
    %3496 = vmatprep.subr.mxu0 0.0
    %3497 = vmatpush1.msra.mxu0 0.0
    %3498 = vmatprep.subr.mxu0 0.0
    %3499 = vmatpush1.msra.mxu0 0.0
    %3500 = vmatprep.subr.mxu0 0.0
    %3501 = vmatpush1.msra.mxu0 0.0
    %3502 = vmatprep.subr.mxu0 0.0
    %3503 = vmatpush1.msra.mxu0 0.0
    %3504 = vmatprep.subr.mxu0 0.0
    %3505 = vmatpush1.msra.mxu0 0.0
    %3506 = vmatprep.subr.mxu0 0.0
    %3507 = vmatpush1.msra.mxu0 0.0
    %3508 = vmatprep.subr.mxu0 0.0
    %3509 = vmatpush1.msra.mxu0 0.0
    %3510 = vmatprep.subr.mxu0 0.0
    %3511 = vmatpush1.msra.mxu0 0.0
    %3512 = vmatprep.subr.mxu0 0.0
    %3513 = vmatpush1.msra.mxu0 0.0
    %3514 = vmatprep.subr.mxu0 0.0
    %3515 = vmatpush1.msra.mxu0 0.0
    %3516 = vmatprep.subr.mxu0 0.0
    %3517 = vmatpush1.msra.mxu0 0.0
    %3518 = vmatprep.subr.mxu0 0.0
    %3519 = vmatpush1.msra.mxu0 0.0
    %3520 = vmatprep.subr.mxu0 0.0
    %3521 = vmatpush1.msra.mxu0 0.0
    %3522 = vmatprep.subr.mxu0 0.0
    %3523 = vmatpush1.msra.mxu0 0.0
    %3524 = vmatprep.mubr.f32.mxu0 0.0
    %3525 = vmatmul.mubr.f32.gmra.mrb[0].mxu0 %v3449
    %v3526 = vpop.f32.mrb[0].mxu0
    %v3527 = vadd.f32 0.0, %v3526
    %v3528 = vpop.f32.mrb[0].mxu0
    %3529 = vmatprep.mubr.f32.mxu0 0.0
    %3530 = vmatmul.mubr.f32.gmra.mrb[0].mxu0 %v3452
    %v3531 = vpop.f32.mrb[0].mxu0
    %v3532 = vadd.f32 0.0, %v3531
    %v3533 = vpop.f32.mrb[0].mxu0
    %3534 = vmatprep.mubr.f32.mxu0 0.0
    %3535 = vmatmul.mubr.f32.gmra.mrb[0].mxu0 %v3455
    %v3536 = vpop.f32.mrb[0].mxu0
    %v3537 = vadd.f32 0.0, %v3536
    %v3538 = vpop.f32.mrb[0].mxu0
    %3539 = vmatprep.mubr.f32.mxu0 0.0
    %3540 = vmatmul.mubr.f32.gmra.mrb[0].mxu0 %v3458
    %v3541 = vpop.f32.mrb[0].mxu0
    %v3542 = vadd.f32 0.0, %v3541
    %v3543 = vpop.f32.mrb[0].mxu0
    %3544 = vdwg.mxu0
    %v3545 = vadd.f32 %v2772, %v3527
    %v3546 = vadd.f32 %v2773, %v3532
    %v3547 = vadd.f32 %v2774, %v3537
    %v3548 = vadd.f32 %v2775, %v3542
    %v3549 = vld [vmem:[#allocation14] sm:$0x1]
    %v3550 = vld [vmem:[#allocation14 + $0x1] sm:$0x1]
    %v3551 = vld [vmem:[#allocation14 + $0x2] sm:$0x1]
    %v3552 = vld [vmem:[#allocation14 + $0x3] sm:$0x1]
    %v3553 = vld [vmem:[#allocation14 + $0x4] sm:$0x1]
    %v3554 = vld [vmem:[#allocation14 + $0x5] sm:$0x1]
    %v3555 = vld [vmem:[#allocation2] sm:$0xff]
    %v3556 = vld [vmem:[#allocation2 + $0x8] sm:$0xff]
    %v3557 = vld [vmem:[#allocation2 + $0x10] sm:$0xff]
    %v3558 = vld [vmem:[#allocation2 + $0x18] sm:$0xff]
    %v3559 = vmax.f32 %v3545, 0.0
    %v3560 = vmax.f32 %v3546, 0.0
    %v3561 = vmax.f32 %v3547, 0.0
    %v3562 = vmax.f32 %v3548, 0.0
    %v3563 = vadd.f32 %v3559, %v3555
    %v3564 = vadd.f32 %v3560, %v3556
    %v3565 = vadd.f32 %v3561, %v3557
    %v3566 = vadd.f32 %v3562, %v3558
    %v3567 = vsel %vm164, %v3563, 0.0
    %3568 = vadd.xlane.f32.xlu0 %v3567
    %v3569 = vpop.xlane.xlu0 %3568
    %v3570 = vsel %vm164, %v3564, 0.0
    %3571 = vadd.xlane.f32.xlu0 %v3570
    %v3572 = vpop.xlane.xlu0 %3571
    %v3573 = vsel %vm164, %v3565, 0.0
    %3574 = vadd.xlane.f32.xlu0 %v3573
    %v3575 = vpop.xlane.xlu0 %3574
    %v3576 = vsel %vm164, %v3566, 0.0
    %3577 = vadd.xlane.f32.xlu0 %v3576
    %v3578 = vpop.xlane.xlu0 %3577
    %v3579 = vrcp.pop 32.0
    %v3580 = vmul.f32 %v3569, %v3579
    %v3581 = vmul.f32 %v3572, %v3579
    %v3582 = vmul.f32 %v3575, %v3579
    %v3583 = vmul.f32 %v3578, %v3579
    %v3584 = vsub.f32 %v3563, %v3580
    %v3585 = vsub.f32 %v3564, %v3581
    %v3586 = vsub.f32 %v3565, %v3582
    %v3587 = vsub.f32 %v3566, %v3583
    %v3588 = vmul.f32 %v3584, %v3584
    %v3589 = vmul.f32 %v3585, %v3585
    %v3590 = vmul.f32 %v3586, %v3586
    %v3591 = vmul.f32 %v3587, %v3587
    %v3592 = vsel %vm164, %v3588, 0.0
    %3593 = vadd.xlane.f32.xlu0 %v3592
    %v3594 = vpop.xlane.xlu0 %3593
    %v3595 = vsel %vm164, %v3589, 0.0
    %3596 = vadd.xlane.f32.xlu0 %v3595
    %v3597 = vpop.xlane.xlu0 %3596
    %v3598 = vsel %vm164, %v3590, 0.0
    %3599 = vadd.xlane.f32.xlu0 %v3598
    %v3600 = vpop.xlane.xlu0 %3599
    %v3601 = vsel %vm164, %v3591, 0.0
    %3602 = vadd.xlane.f32.xlu0 %v3601
    %v3603 = vpop.xlane.xlu0 %3602
    %v3604 = vmul.f32 %v3594, %v3579
    %v3605 = vmul.f32 %v3597, %v3579
    %v3606 = vmul.f32 %v3600, %v3579
    %v3607 = vmul.f32 %v3603, %v3579
    %v3608 = vadd.f32 %v3604, 1e-05
    %v3609 = vadd.f32 %v3605, 1e-05
    %v3610 = vadd.f32 %v3606, 1e-05
    %v3611 = vadd.f32 %v3607, 1e-05
    %v3612 = vrsqrt.pop %v3608
    %v3613 = vrsqrt.pop %v3609
    %v3614 = vrsqrt.pop %v3610
    %v3615 = vrsqrt.pop %v3611
    %v3616 = vmul.f32 %v3584, %v3612
    %v3617 = vmul.f32 %v3585, %v3613
    %v3618 = vmul.f32 %v3586, %v3614
    %v3619 = vmul.f32 %v3587, %v3615
    %v3620 = vlaneseq
    %v3621 = vshrl.u32 %v3620, 7
    %v3622 = vsub.s32 0, %v3621
    %v3623 = vrot.slane %v3549, %v3622
    %v3624 = vmul.f32 %v3616, %v3623
    %v3625 = vmul.f32 %v3617, %v3623
    %v3626 = vmul.f32 %v3618, %v3623
    %v3627 = vmul.f32 %v3619, %v3623
    %v3628 = vlaneseq
    %v3629 = vshrl.u32 %v3628, 7
    %v3630 = vsub.s32 0, %v3629
    %v3631 = vrot.slane %v3550, %v3630
    %v3632 = vadd.f32 %v3624, %v3631
    %v3633 = vadd.f32 %v3625, %v3631
    %v3634 = vadd.f32 %v3626, %v3631
    %v3635 = vadd.f32 %v3627, %v3631
    %v3636 = vld [vmem:[#allocation16] sm:$0xff]
    %v3637 = vld [vmem:[#allocation16 + $0x8] sm:$0xff]
    %v3638 = vld [vmem:[#allocation16 + $0x10] sm:$0xff]
    %v3639 = vld [vmem:[#allocation16 + $0x18] sm:$0xff]
    %v3640 = vlaneseq
    %v3641 = vshrl.u32 %v3640, 7
    %v3642 = vsub.s32 0, %v3641
    %v3643 = vrot.slane %v3551, %v3642
    %v3645 = vsel %vm164, %v3632, 0
    %v3648 = vsel %vm164, %v3633, 0
    %v3651 = vsel %vm164, %v3634, 0
    %v3654 = vsel %vm164, %v3635, 0
    %3656 = vmatprep.subr.mxu0 0.0
    %3657 = vmatpush1.msra.mxu0 %v3636
    %3658 = vmatprep.subr.mxu0 0.0
    %3659 = vmatpush1.msra.mxu0 %v3637
    %3660 = vmatprep.subr.mxu0 0.0
    %3661 = vmatpush1.msra.mxu0 %v3638
    %3662 = vmatprep.subr.mxu0 0.0
    %3663 = vmatpush1.msra.mxu0 %v3639
    %3664 = vmatprep.subr.mxu0 0.0
    %3665 = vmatpush1.msra.mxu0 0.0
    %3666 = vmatprep.subr.mxu0 0.0
    %3667 = vmatpush1.msra.mxu0 0.0
    %3668 = vmatprep.subr.mxu0 0.0
    %3669 = vmatpush1.msra.mxu0 0.0
    %3670 = vmatprep.subr.mxu0 0.0
    %3671 = vmatpush1.msra.mxu0 0.0
    %3672 = vmatprep.subr.mxu0 0.0
    %3673 = vmatpush1.msra.mxu0 0.0
    %3674 = vmatprep.subr.mxu0 0.0
    %3675 = vmatpush1.msra.mxu0 0.0
    %3676 = vmatprep.subr.mxu0 0.0
    %3677 = vmatpush1.msra.mxu0 0.0
    %3678 = vmatprep.subr.mxu0 0.0
    %3679 = vmatpush1.msra.mxu0 0.0
    %3680 = vmatprep.subr.mxu0 0.0
    %3681 = vmatpush1.msra.mxu0 0.0
    %3682 = vmatprep.subr.mxu0 0.0
    %3683 = vmatpush1.msra.mxu0 0.0
    %3684 = vmatprep.subr.mxu0 0.0
    %3685 = vmatpush1.msra.mxu0 0.0
    %3686 = vmatprep.subr.mxu0 0.0
    %3687 = vmatpush1.msra.mxu0 0.0
    %3688 = vmatprep.subr.mxu0 0.0
    %3689 = vmatpush1.msra.mxu0 0.0
    %3690 = vmatprep.subr.mxu0 0.0
    %3691 = vmatpush1.msra.mxu0 0.0
    %3692 = vmatprep.subr.mxu0 0.0
    %3693 = vmatpush1.msra.mxu0 0.0
    %3694 = vmatprep.subr.mxu0 0.0
    %3695 = vmatpush1.msra.mxu0 0.0
    %3696 = vmatprep.subr.mxu0 0.0
    %3697 = vmatpush1.msra.mxu0 0.0
    %3698 = vmatprep.subr.mxu0 0.0
    %3699 = vmatpush1.msra.mxu0 0.0
    %3700 = vmatprep.subr.mxu0 0.0
    %3701 = vmatpush1.msra.mxu0 0.0
    %3702 = vmatprep.subr.mxu0 0.0
    %3703 = vmatpush1.msra.mxu0 0.0
    %3704 = vmatprep.subr.mxu0 0.0
    %3705 = vmatpush1.msra.mxu0 0.0
    %3706 = vmatprep.subr.mxu0 0.0
    %3707 = vmatpush1.msra.mxu0 0.0
    %3708 = vmatprep.subr.mxu0 0.0
    %3709 = vmatpush1.msra.mxu0 0.0
    %3710 = vmatprep.subr.mxu0 0.0
    %3711 = vmatpush1.msra.mxu0 0.0
    %3712 = vmatprep.subr.mxu0 0.0
    %3713 = vmatpush1.msra.mxu0 0.0
    %3714 = vmatprep.subr.mxu0 0.0
    %3715 = vmatpush1.msra.mxu0 0.0
    %3716 = vmatprep.subr.mxu0 0.0
    %3717 = vmatpush1.msra.mxu0 0.0
    %3718 = vmatprep.subr.mxu0 0.0
    %3719 = vmatpush1.msra.mxu0 0.0
    %3720 = vmatprep.mubr.f32.mxu0 0.0
    %3721 = vmatmul.mubr.f32.gmra.mrb[0].mxu0 %v3645
    %v3722 = vpop.f32.mrb[0].mxu0
    %v3723 = vadd.f32 %v3643, %v3722
    %v3724 = vpop.f32.mrb[0].mxu0
    %3725 = vmatprep.mubr.f32.mxu0 0.0
    %3726 = vmatmul.mubr.f32.gmra.mrb[0].mxu0 %v3648
    %v3727 = vpop.f32.mrb[0].mxu0
    %v3728 = vadd.f32 %v3643, %v3727
    %v3729 = vpop.f32.mrb[0].mxu0
    %3730 = vmatprep.mubr.f32.mxu0 0.0
    %3731 = vmatmul.mubr.f32.gmra.mrb[0].mxu0 %v3651
    %v3732 = vpop.f32.mrb[0].mxu0
    %v3733 = vadd.f32 %v3643, %v3732
    %v3734 = vpop.f32.mrb[0].mxu0
    %3735 = vmatprep.mubr.f32.mxu0 0.0
    %3736 = vmatmul.mubr.f32.gmra.mrb[0].mxu0 %v3654
    %v3737 = vpop.f32.mrb[0].mxu0
    %v3738 = vadd.f32 %v3643, %v3737
    %v3739 = vpop.f32.mrb[0].mxu0
    %3740 = vdwg.mxu0
    %v3741 = vmax.f32 %v3723, 0.0
    %v3742 = vmax.f32 %v3728, 0.0
    %v3743 = vmax.f32 %v3733, 0.0
    %v3744 = vmax.f32 %v3738, 0.0
    %v3745 = vld [vmem:[%s9] sm:$0xff]
    %v3746 = vld [vmem:[%s9 + $0x8] sm:$0xff]
    %v3747 = vld [vmem:[%s9 + $0x10] sm:$0xff]
    %v3748 = vld [vmem:[%s9 + $0x18] sm:$0xff]
    %v3749 = vlaneseq
    %v3750 = vshrl.u32 %v3749, 7
    %v3751 = vsub.s32 0, %v3750
    %v3752 = vrot.slane %v3552, %v3751
    %v3754 = vsel %vm164, %v3741, 0
    %v3757 = vsel %vm164, %v3742, 0
    %v3760 = vsel %vm164, %v3743, 0
    %v3763 = vsel %vm164, %v3744, 0
    %3765 = vmatprep.subr.mxu0 0.0
    %3766 = vmatpush1.msra.mxu0 %v3745
    %3767 = vmatprep.subr.mxu0 0.0
    %3768 = vmatpush1.msra.mxu0 %v3746
    %3769 = vmatprep.subr.mxu0 0.0
    %3770 = vmatpush1.msra.mxu0 %v3747
    %3771 = vmatprep.subr.mxu0 0.0
    %3772 = vmatpush1.msra.mxu0 %v3748
    %3773 = vmatprep.subr.mxu0 0.0
    %3774 = vmatpush1.msra.mxu0 0.0
    %3775 = vmatprep.subr.mxu0 0.0
    %3776 = vmatpush1.msra.mxu0 0.0
    %3777 = vmatprep.subr.mxu0 0.0
    %3778 = vmatpush1.msra.mxu0 0.0
    %3779 = vmatprep.subr.mxu0 0.0
    %3780 = vmatpush1.msra.mxu0 0.0
    %3781 = vmatprep.subr.mxu0 0.0
    %3782 = vmatpush1.msra.mxu0 0.0
    %3783 = vmatprep.subr.mxu0 0.0
    %3784 = vmatpush1.msra.mxu0 0.0
    %3785 = vmatprep.subr.mxu0 0.0
    %3786 = vmatpush1.msra.mxu0 0.0
    %3787 = vmatprep.subr.mxu0 0.0
    %3788 = vmatpush1.msra.mxu0 0.0
    %3789 = vmatprep.subr.mxu0 0.0
    %3790 = vmatpush1.msra.mxu0 0.0
    %3791 = vmatprep.subr.mxu0 0.0
    %3792 = vmatpush1.msra.mxu0 0.0
    %3793 = vmatprep.subr.mxu0 0.0
    %3794 = vmatpush1.msra.mxu0 0.0
    %3795 = vmatprep.subr.mxu0 0.0
    %3796 = vmatpush1.msra.mxu0 0.0
    %3797 = vmatprep.subr.mxu0 0.0
    %3798 = vmatpush1.msra.mxu0 0.0
    %3799 = vmatprep.subr.mxu0 0.0
    %3800 = vmatpush1.msra.mxu0 0.0
    %3801 = vmatprep.subr.mxu0 0.0
    %3802 = vmatpush1.msra.mxu0 0.0
    %3803 = vmatprep.subr.mxu0 0.0
    %3804 = vmatpush1.msra.mxu0 0.0
    %3805 = vmatprep.subr.mxu0 0.0
    %3806 = vmatpush1.msra.mxu0 0.0
    %3807 = vmatprep.subr.mxu0 0.0
    %3808 = vmatpush1.msra.mxu0 0.0
    %3809 = vmatprep.subr.mxu0 0.0
    %3810 = vmatpush1.msra.mxu0 0.0
    %3811 = vmatprep.subr.mxu0 0.0
    %3812 = vmatpush1.msra.mxu0 0.0
    %3813 = vmatprep.subr.mxu0 0.0
    %3814 = vmatpush1.msra.mxu0 0.0
    %3815 = vmatprep.subr.mxu0 0.0
    %3816 = vmatpush1.msra.mxu0 0.0
    %3817 = vmatprep.subr.mxu0 0.0
    %3818 = vmatpush1.msra.mxu0 0.0
    %3819 = vmatprep.subr.mxu0 0.0
    %3820 = vmatpush1.msra.mxu0 0.0
    %3821 = vmatprep.subr.mxu0 0.0
    %3822 = vmatpush1.msra.mxu0 0.0
    %3823 = vmatprep.subr.mxu0 0.0
    %3824 = vmatpush1.msra.mxu0 0.0
    %3825 = vmatprep.subr.mxu0 0.0
    %3826 = vmatpush1.msra.mxu0 0.0
    %3827 = vmatprep.subr.mxu0 0.0
    %3828 = vmatpush1.msra.mxu0 0.0
    %3829 = vmatprep.mubr.f32.mxu0 0.0
    %3830 = vmatmul.mubr.f32.gmra.mrb[0].mxu0 %v3754
    %v3831 = vpop.f32.mrb[0].mxu0
    %v3832 = vadd.f32 %v3752, %v3831
    %v3833 = vpop.f32.mrb[0].mxu0
    %3834 = vmatprep.mubr.f32.mxu0 0.0
    %3835 = vmatmul.mubr.f32.gmra.mrb[0].mxu0 %v3757
    %v3836 = vpop.f32.mrb[0].mxu0
    %v3837 = vadd.f32 %v3752, %v3836
    %v3838 = vpop.f32.mrb[0].mxu0
    %3839 = vmatprep.mubr.f32.mxu0 0.0
    %3840 = vmatmul.mubr.f32.gmra.mrb[0].mxu0 %v3760
    %v3841 = vpop.f32.mrb[0].mxu0
    %v3842 = vadd.f32 %v3752, %v3841
    %v3843 = vpop.f32.mrb[0].mxu0
    %3844 = vmatprep.mubr.f32.mxu0 0.0
    %3845 = vmatmul.mubr.f32.gmra.mrb[0].mxu0 %v3763
    %v3846 = vpop.f32.mrb[0].mxu0
    %v3847 = vadd.f32 %v3752, %v3846
    %v3848 = vpop.f32.mrb[0].mxu0
    %3849 = vdwg.mxu0
    %v3850 = vmax.f32 %v3832, 0.0
    %v3851 = vmax.f32 %v3837, 0.0
    %v3852 = vmax.f32 %v3842, 0.0
    %v3853 = vmax.f32 %v3847, 0.0
    %v3854 = vadd.f32 %v3850, %v3632
    %v3855 = vadd.f32 %v3851, %v3633
    %v3856 = vadd.f32 %v3852, %v3634
    %v3857 = vadd.f32 %v3853, %v3635
    %v3858 = vsel %vm164, %v3854, 0.0
    %3859 = vadd.xlane.f32.xlu0 %v3858
    %v3860 = vpop.xlane.xlu0 %3859
    %v3861 = vsel %vm164, %v3855, 0.0
    %3862 = vadd.xlane.f32.xlu0 %v3861
    %v3863 = vpop.xlane.xlu0 %3862
    %v3864 = vsel %vm164, %v3856, 0.0
    %3865 = vadd.xlane.f32.xlu0 %v3864
    %v3866 = vpop.xlane.xlu0 %3865
    %v3867 = vsel %vm164, %v3857, 0.0
    %3868 = vadd.xlane.f32.xlu0 %v3867
    %v3869 = vpop.xlane.xlu0 %3868
    %v3870 = vmul.f32 %v3860, %v3579
    %v3871 = vmul.f32 %v3863, %v3579
    %v3872 = vmul.f32 %v3866, %v3579
    %v3873 = vmul.f32 %v3869, %v3579
    %v3874 = vsub.f32 %v3854, %v3870
    %v3875 = vsub.f32 %v3855, %v3871
    %v3876 = vsub.f32 %v3856, %v3872
    %v3877 = vsub.f32 %v3857, %v3873
    %v3878 = vmul.f32 %v3874, %v3874
    %v3879 = vmul.f32 %v3875, %v3875
    %v3880 = vmul.f32 %v3876, %v3876
    %v3881 = vmul.f32 %v3877, %v3877
    %v3882 = vsel %vm164, %v3878, 0.0
    %3883 = vadd.xlane.f32.xlu0 %v3882
    %v3884 = vpop.xlane.xlu0 %3883
    %v3885 = vsel %vm164, %v3879, 0.0
    %3886 = vadd.xlane.f32.xlu0 %v3885
    %v3887 = vpop.xlane.xlu0 %3886
    %v3888 = vsel %vm164, %v3880, 0.0
    %3889 = vadd.xlane.f32.xlu0 %v3888
    %v3890 = vpop.xlane.xlu0 %3889
    %v3891 = vsel %vm164, %v3881, 0.0
    %3892 = vadd.xlane.f32.xlu0 %v3891
    %v3893 = vpop.xlane.xlu0 %3892
    %v3894 = vmul.f32 %v3884, %v3579
    %v3895 = vmul.f32 %v3887, %v3579
    %v3896 = vmul.f32 %v3890, %v3579
    %v3897 = vmul.f32 %v3893, %v3579
    %v3898 = vadd.f32 %v3894, 1e-05
    %v3899 = vadd.f32 %v3895, 1e-05
    %v3900 = vadd.f32 %v3896, 1e-05
    %v3901 = vadd.f32 %v3897, 1e-05
    %v3902 = vrsqrt.pop %v3898
    %v3903 = vrsqrt.pop %v3899
    %v3904 = vrsqrt.pop %v3900
    %v3905 = vrsqrt.pop %v3901
    %v3906 = vmul.f32 %v3874, %v3902
    %v3907 = vmul.f32 %v3875, %v3903
    %v3908 = vmul.f32 %v3876, %v3904
    %v3909 = vmul.f32 %v3877, %v3905
    %v3910 = vlaneseq
    %v3911 = vshrl.u32 %v3910, 7
    %v3912 = vsub.s32 0, %v3911
    %v3913 = vrot.slane %v3553, %v3912
    %v3914 = vmul.f32 %v3906, %v3913
    %v3915 = vmul.f32 %v3907, %v3913
    %v3916 = vmul.f32 %v3908, %v3913
    %v3917 = vmul.f32 %v3909, %v3913
    %v3918 = vlaneseq
    %v3919 = vshrl.u32 %v3918, 7
    %v3920 = vsub.s32 0, %v3919
    %v3921 = vrot.slane %v3554, %v3920
    %v3922 = vadd.f32 %v3914, %v3921
    %v3923 = vadd.f32 %v3915, %v3921
    %v3924 = vadd.f32 %v3916, %v3921
    %v3925 = vadd.f32 %v3917, %v3921
    %3926 = vst.msk [vmem:[#allocation17] sm:$0xff] %vm164, %v3922
    %3927 = vst.msk [vmem:[#allocation17 + $0x8] sm:$0xff] %vm164, %v3923
    %3928 = vst.msk [vmem:[#allocation17 + $0x10] sm:$0xff] %vm164, %v3924
    %3929 = vst.msk [vmem:[#allocation17 + $0x18] sm:$0xff] %vm164, %v3925
    // Predicated region
    $region78: #{tpu_custom_call.1} parent=1 // pred_check
      _
    $region79: #{tpu_custom_call.1} parent=1 // pred_check_branch
      %3931 = sbr.rel (0) target = $region81
    $region80: #{tpu_custom_call.1} parent=1 // pred_region
      %s3933 = ssub.s32 512, 512
      %3934 = vsyncadd [#allocation4], %s3933
      %s3935 = sshll.u32 [#allocation17], 4
      %s3936 = int_to_ptr.vmem [resolvable:$true] %s3935
      %3941 = dma.vmem_to_hbm [thread:$0]  %s3936, 512, %s10, [#allocation4], 128, 128, 8
    $region81: #{tpu_custom_call.1} parent=1 // pred_fallthru
      _
    // Predicated region
    $region82: #{tpu_custom_call.1} parent=1 // pred_check
      _
    $region83: #{tpu_custom_call.1} parent=1 // pred_check_branch
      %3943 = sbr.rel (0) target = $region85
    $region84: #{tpu_custom_call.1} parent=1 // pred_region
      %3944 = dma.done [#allocation4], 512
    $region85: #{tpu_custom_call.1} parent=1 // pred_fallthru
      _
    %3945 = vsyncpa [#allocation3], 1
    %3946 = vsyncpa [#allocation6], 1
    %3947 = vsyncpa [#allocation9], 1
    %3948 = vsyncpa [#allocation12], 1
    %3949 = vsyncpa [#allocation15], 1
    %3950 = vsyncpa [#allocation4], 1

</llo_original>
